<compile_context>
chip_gen: v7x
topology: tpu7x:2x2x1
jax: 0.10.0
libtpu: 0.0.40
codegen_flags: <defaults>
</compile_context>

<pallas_src>
import functools

import numpy as np
import jax
import jax.numpy as jnp
from jax.experimental import pallas as pl
from jax.experimental.pallas import tpu as pltpu


# ----------------------------------------------------------------------------
# Pallas kernel: chained block-complex matmuls + |psi|^2 epilogue
# ----------------------------------------------------------------------------
def qgen_kernel(x_ref, w_ref, probs_ref, *, row_splits):
    cdt = w_ref.dtype                   # compute dtype of the weights (bf16)
    num_layers = w_ref.shape[0]
    d = probs_ref.shape[-1]
    tb = x_ref.shape[0]
    h = tb // row_splits

    # Independent row chains: consecutive layers of different chains interleave
    # on the MXU and hide the result-FIFO fill/drain between dependent matmuls
    # (helps v5e/v6e; neutral on v7x's MRB).
    chains = [x_ref[c * h:(c + 1) * h, :] for c in range(row_splits)]
    for l in range(num_layers):         # static unroll; L = 3 + 2k is small
        w = w_ref[l]
        chains = [
            jnp.dot(s.astype(cdt), w, preferred_element_type=jnp.float32)
            for s in chains
        ]
    for c in range(row_splits):
        s = chains[c]                   # (h, 2D) float32
        r = s[:, :d]                    # static lane-boundary slices: free
        i = s[:, d:]
        probs_ref[c * h:(c + 1) * h, :] = r * r + i * i


def generator_forward(x_packed, w_packed, *, batch_tile=None):
    """x_packed: (B, 2D) float32 [real | imag].  w_packed: (L, 2D, 2D) bf16/f32."""
    B, two_d = x_packed.shape
    D = two_d // 2
    L, wd1, wd2 = w_packed.shape
    assert wd1 == two_d and wd2 == two_d

    x_row_bytes = two_d * x_packed.dtype.itemsize
    probs_row_bytes = D * 4

    if batch_tile is None:
        # Grid steps are a serial loop on one TensorCore (~0.35 us each) and
        # this problem is weight-DMA bound, so keep a single grid step whenever
        # the double-buffered state tiles fit a modest VMEM budget.  Only tile
        # the batch (letting "parallel" shard it across v7x's two cores) once
        # batch traffic dominates the resident weight stack.
        if 2 * B * (x_row_bytes + probs_row_bytes) <= 8 * 1024 * 1024:
            batch_tile = B
        elif B % 256 == 0:
            batch_tile = 256
        elif B % 128 == 0:
            batch_tile = 128
        else:
            batch_tile = B
    assert B % batch_tile == 0, "batch must be divisible by batch_tile"
    grid = (B // batch_tile,)

    # Two interleaved row chains when the tile is large enough to split cleanly.
    row_splits = 2 if (batch_tile >= 16 and batch_tile % 16 == 0) else 1

    # VMEM budget: single-buffered resident weights + double-buffered state
    # tiles + f32 chain intermediates.
    weight_bytes = L * two_d * two_d * w_packed.dtype.itemsize
    tile_bytes = 2 * batch_tile * (x_row_bytes + probs_row_bytes)
    interm_bytes = 4 * batch_tile * two_d * 4
    vmem_needed = weight_bytes + tile_bytes + interm_bytes
    assert vmem_needed < 40 * 1024 * 1024, (
        "resident-weights plan exceeds a safe per-core VMEM budget; "
        "switch to a layer-streaming grid")
    # TODO(synk): layer-streaming path (innermost 'arbitrary' grid axis over L,
    # per-layer weight blocks with pl.Buffered(2), state carried in VMEM
    # scratch) for n_qubit >= 9, where the weight stack no longer fits v7x VMEM.
    vmem_limit = int(min(64 * 1024 * 1024, vmem_needed + 12 * 1024 * 1024))

    flops = 2.0 * B * two_d * two_d * L
    bytes_accessed = weight_bytes + B * (x_row_bytes + probs_row_bytes)

    kernel = functools.partial(qgen_kernel, row_splits=row_splits)
    return pl.pallas_call(
        kernel,
        out_shape=jax.ShapeDtypeStruct((B, D), jnp.float32),
        grid_spec=pl.GridSpec(
            grid=grid,
            in_specs=[
                # state: one batch tile per grid step
                pl.BlockSpec((batch_tile, two_d), lambda b: (b, 0)),
                # weights: whole stack pinned in VMEM, DMA'd once, single
                # buffered (constant operand; double-buffering is pure waste).
                pl.BlockSpec(memory_space=pltpu.MemorySpace.VMEM),
            ],
            out_specs=pl.BlockSpec((batch_tile, D), lambda b: (b, 0)),
        ),
        compiler_params=pltpu.CompilerParams(
            dimension_semantics=("parallel",),
            vmem_limit_bytes=vmem_limit),
        cost_estimate=pl.CostEstimate(
            flops=int(flops),
            transcendentals=0,
            bytes_accessed=int(bytes_accessed)),
    )(x_packed, w_packed)


# ----------------------------------------------------------------------------
# Parameter / unitary construction (glue, plain numpy)
# ----------------------------------------------------------------------------
def rx_gate(theta):
    c, s = np.cos(theta / 2.0), np.sin(theta / 2.0)
    return np.array([[c, -1j * s], [-1j * s, c]], dtype=np.complex64)


def ry_gate(theta):
    c, s = np.cos(theta / 2.0), np.sin(theta / 2.0)
    return np.array([[c, -s], [s, c]], dtype=np.complex64)


def parallel_gate(gate_fn, thetas):
    u = np.array([[1.0 + 0j]], dtype=np.complex64)
    for t in thetas:
        u = np.kron(u, gate_fn(float(t)))
    return u


def cz_ring(n_qubit):
    # TODO(synk): EntangleComplex definition is not in the prompt; assuming a
    # ring of CZ gates on adjacent qubits (standard qGAN ansatz entangler).
    dim = 2 ** n_qubit
    diag = np.ones(dim, dtype=np.complex64)
    pairs = [(q, q + 1) for q in range(n_qubit - 1)]
    if n_qubit > 2:
        pairs.append((n_qubit - 1, 0))
    idx = np.arange(dim)
    for a, b in pairs:
        bit_a = (idx >> (n_qubit - 1 - a)) & 1
        bit_b = (idx >> (n_qubit - 1 - b)) & 1
        diag = np.where((bit_a & bit_b).astype(bool), -diag, diag)
    return np.diag(diag).astype(np.complex64)


def build_generator_unitaries(n_qubit, k, thetas, dtype=jnp.bfloat16):
    """thetas: (3 + k, n_qubit).  Returns packed (L, 2D, 2D) weights in `dtype`."""
    layers = [
        parallel_gate(rx_gate, thetas[0]),   # ParallelRXComplex
        parallel_gate(ry_gate, thetas[1]),   # ParallelRYComplex
        parallel_gate(rx_gate, thetas[2]),   # ParallelRXComplex
    ]
    for j in range(k):
        layers.append(cz_ring(n_qubit))                       # EntangleComplex
        layers.append(parallel_gate(ry_gate, thetas[3 + j]))  # ParallelRYComplex
    # TODO(synk): for pure inference the whole chain could be pre-multiplied
    # into a single (2D, 2D) matrix (cuts FLOPs and weight DMA by ~L); kept
    # per-layer here to mirror the module structure / training use.
    stacked = np.stack(layers, axis=0)                        # (L, D, D) complex
    # pre-transpose so the kernel computes (row-vector) psi @ U^T == U @ psi
    wt = np.transpose(stacked, (0, 2, 1))
    wr = wt.real.astype(np.float32)
    wi = wt.imag.astype(np.float32)
    # block-complex packing:  [r' | i'] = [r | i] @ [[wr, wi], [-wi, wr]]
    top = np.concatenate([wr, wi], axis=2)                    # (L, D, 2D)
    bot = np.concatenate([-wi, wr], axis=2)                   # (L, D, 2D)
    w_packed = np.concatenate([top, bot], axis=1)             # (L, 2D, 2D)
    # bf16 weights halve the dominant weight DMA and hit the native bf16 MXU
    # path; accumulation stays f32 via preferred_element_type in the kernel.
    return jnp.asarray(w_packed).astype(dtype)


# ----------------------------------------------------------------------------
# Driver
# ----------------------------------------------------------------------------
if __name__ == "__main__":
    n_qubit, k = 7, 2              # D = 2**7 = 128 (lane-aligned), 2D = 256
    batch = 256
    dim = 2 ** n_qubit
    num_param_layers = 3 + k

    key = jax.random.PRNGKey(0)
    k_theta, k_re, k_im = jax.random.split(key, 3)

    # deterministic "learned" rotation angles
    thetas = np.asarray(
        jax.random.uniform(k_theta, (num_param_layers, n_qubit),
                           minval=0.0, maxval=2.0 * np.pi))
    w_packed = build_generator_unitaries(n_qubit, k, thetas, dtype=jnp.bfloat16)

    # deterministic input state (normalized complex vectors per batch row)
    xr = jax.random.normal(k_re, (batch, dim), dtype=jnp.float32)
    xi = jax.random.normal(k_im, (batch, dim), dtype=jnp.float32)
    norm = jnp.sqrt(jnp.sum(xr * xr + xi * xi, axis=-1, keepdims=True))
    xr = xr / norm
    xi = xi / norm
    x_packed = jnp.concatenate([xr, xi], axis=-1)             # (B, 2D)

    probs = generator_forward(x_packed, w_packed)
    probs = jax.block_until_ready(probs)

    # pure-numpy reference (float64 complex, same bf16-rounded weights)
    psi = np.asarray(xr).astype(np.float64) + 1j * np.asarray(xi).astype(np.float64)
    wp = np.asarray(w_packed).astype(np.float64)
    u_t = wp[:, :dim, :dim] + 1j * wp[:, :dim, dim:]          # U^T per layer
    for l in range(u_t.shape[0]):
        psi = psi @ u_t[l]
    probs_ref = np.abs(psi) ** 2

    # bf16 state rounding inside the kernel (f32 accumulation) -> ~1e-2 level.
    np.testing.assert_allclose(np.asarray(probs), probs_ref,
                               rtol=5e-2, atol=1e-3)
    print("KERNEL_OK")
</pallas_src>

<mosaic_0001>
module attributes {stable_mosaic.version = 11 : i64} {
  func.func @qgen_kernel(%arg0: i32, %arg1: memref<256x256xf32, #tpu.memory_space<vmem>>, %arg2: memref<7x256x256xbf16, #tpu.memory_space<vmem>>, %arg3: memref<256x128xf32, #tpu.memory_space<vmem>>) attributes {dimension_semantics = [#tpu.dimension_semantics<parallel>], iteration_bounds = array<i64: 1>, scalar_prefetch = 0 : i64, scratch_operands = 0 : i64, tpu.core_type = #tpu.core_type<tc>, window_params = [{transform_indices = @transform_0, window_bounds = array<i64: 256, 256>}, {pipeline_mode = #tpu.pipeline_mode<synchronous>, transform_indices = @transform_1, window_bounds = array<i64: 7, 256, 256>}, {transform_indices = @transform_2, window_bounds = array<i64: 256, 128>}]} {
    %c0 = arith.constant 0 : index
    %c0_0 = arith.constant 0 : index
    %0 = vector.load %arg1[%c0, %c0_0] : memref<256x256xf32, #tpu.memory_space<vmem>>, vector<128x256xf32>
    %c128 = arith.constant 128 : index
    %c0_1 = arith.constant 0 : index
    %1 = vector.load %arg1[%c128, %c0_1] : memref<256x256xf32, #tpu.memory_space<vmem>>, vector<128x256xf32>
    %c0_2 = arith.constant 0 : index
    %c0_3 = arith.constant 0 : index
    %c0_4 = arith.constant 0 : index
    %2 = vector.load %arg2[%c0_2, %c0_3, %c0_4] : memref<7x256x256xbf16, #tpu.memory_space<vmem>>, vector<1x256x256xbf16>
    %3 = vector.shape_cast %2 : vector<1x256x256xbf16> to vector<256x256xbf16>
    %4 = arith.truncf %0 : vector<128x256xf32> to vector<128x256xbf16>
    %cst = arith.constant dense<0.000000e+00> : vector<128x256xf32>
    %5 = tpu.matmul %4, %3, %cst {dimension_numbers = #tpu.dot_dimension_numbers<[1], [0], [0], [1], [0, 0, 1, 1], [], []>} : vector<128x256xbf16>, vector<256x256xbf16>, vector<128x256xf32> -> vector<128x256xf32>
    %6 = arith.truncf %1 : vector<128x256xf32> to vector<128x256xbf16>
    %cst_5 = arith.constant dense<0.000000e+00> : vector<128x256xf32>
    %7 = tpu.matmul %6, %3, %cst_5 {dimension_numbers = #tpu.dot_dimension_numbers<[1], [0], [0], [1], [0, 0, 1, 1], [], []>} : vector<128x256xbf16>, vector<256x256xbf16>, vector<128x256xf32> -> vector<128x256xf32>
    %c1 = arith.constant 1 : index
    %c0_6 = arith.constant 0 : index
    %c0_7 = arith.constant 0 : index
    %8 = vector.load %arg2[%c1, %c0_6, %c0_7] : memref<7x256x256xbf16, #tpu.memory_space<vmem>>, vector<1x256x256xbf16>
    %9 = vector.shape_cast %8 : vector<1x256x256xbf16> to vector<256x256xbf16>
    %10 = arith.truncf %5 : vector<128x256xf32> to vector<128x256xbf16>
    %cst_8 = arith.constant dense<0.000000e+00> : vector<128x256xf32>
    %11 = tpu.matmul %10, %9, %cst_8 {dimension_numbers = #tpu.dot_dimension_numbers<[1], [0], [0], [1], [0, 0, 1, 1], [], []>} : vector<128x256xbf16>, vector<256x256xbf16>, vector<128x256xf32> -> vector<128x256xf32>
    %12 = arith.truncf %7 : vector<128x256xf32> to vector<128x256xbf16>
    %cst_9 = arith.constant dense<0.000000e+00> : vector<128x256xf32>
    %13 = tpu.matmul %12, %9, %cst_9 {dimension_numbers = #tpu.dot_dimension_numbers<[1], [0], [0], [1], [0, 0, 1, 1], [], []>} : vector<128x256xbf16>, vector<256x256xbf16>, vector<128x256xf32> -> vector<128x256xf32>
    %c2 = arith.constant 2 : index
    %c0_10 = arith.constant 0 : index
    %c0_11 = arith.constant 0 : index
    %14 = vector.load %arg2[%c2, %c0_10, %c0_11] : memref<7x256x256xbf16, #tpu.memory_space<vmem>>, vector<1x256x256xbf16>
    %15 = vector.shape_cast %14 : vector<1x256x256xbf16> to vector<256x256xbf16>
    %16 = arith.truncf %11 : vector<128x256xf32> to vector<128x256xbf16>
    %cst_12 = arith.constant dense<0.000000e+00> : vector<128x256xf32>
    %17 = tpu.matmul %16, %15, %cst_12 {dimension_numbers = #tpu.dot_dimension_numbers<[1], [0], [0], [1], [0, 0, 1, 1], [], []>} : vector<128x256xbf16>, vector<256x256xbf16>, vector<128x256xf32> -> vector<128x256xf32>
    %18 = arith.truncf %13 : vector<128x256xf32> to vector<128x256xbf16>
    %cst_13 = arith.constant dense<0.000000e+00> : vector<128x256xf32>
    %19 = tpu.matmul %18, %15, %cst_13 {dimension_numbers = #tpu.dot_dimension_numbers<[1], [0], [0], [1], [0, 0, 1, 1], [], []>} : vector<128x256xbf16>, vector<256x256xbf16>, vector<128x256xf32> -> vector<128x256xf32>
    %c3 = arith.constant 3 : index
    %c0_14 = arith.constant 0 : index
    %c0_15 = arith.constant 0 : index
    %20 = vector.load %arg2[%c3, %c0_14, %c0_15] : memref<7x256x256xbf16, #tpu.memory_space<vmem>>, vector<1x256x256xbf16>
    %21 = vector.shape_cast %20 : vector<1x256x256xbf16> to vector<256x256xbf16>
    %22 = arith.truncf %17 : vector<128x256xf32> to vector<128x256xbf16>
    %cst_16 = arith.constant dense<0.000000e+00> : vector<128x256xf32>
    %23 = tpu.matmul %22, %21, %cst_16 {dimension_numbers = #tpu.dot_dimension_numbers<[1], [0], [0], [1], [0, 0, 1, 1], [], []>} : vector<128x256xbf16>, vector<256x256xbf16>, vector<128x256xf32> -> vector<128x256xf32>
    %24 = arith.truncf %19 : vector<128x256xf32> to vector<128x256xbf16>
    %cst_17 = arith.constant dense<0.000000e+00> : vector<128x256xf32>
    %25 = tpu.matmul %24, %21, %cst_17 {dimension_numbers = #tpu.dot_dimension_numbers<[1], [0], [0], [1], [0, 0, 1, 1], [], []>} : vector<128x256xbf16>, vector<256x256xbf16>, vector<128x256xf32> -> vector<128x256xf32>
    %c4 = arith.constant 4 : index
    %c0_18 = arith.constant 0 : index
    %c0_19 = arith.constant 0 : index
    %26 = vector.load %arg2[%c4, %c0_18, %c0_19] : memref<7x256x256xbf16, #tpu.memory_space<vmem>>, vector<1x256x256xbf16>
    %27 = vector.shape_cast %26 : vector<1x256x256xbf16> to vector<256x256xbf16>
    %28 = arith.truncf %23 : vector<128x256xf32> to vector<128x256xbf16>
    %cst_20 = arith.constant dense<0.000000e+00> : vector<128x256xf32>
    %29 = tpu.matmul %28, %27, %cst_20 {dimension_numbers = #tpu.dot_dimension_numbers<[1], [0], [0], [1], [0, 0, 1, 1], [], []>} : vector<128x256xbf16>, vector<256x256xbf16>, vector<128x256xf32> -> vector<128x256xf32>
    %30 = arith.truncf %25 : vector<128x256xf32> to vector<128x256xbf16>
    %cst_21 = arith.constant dense<0.000000e+00> : vector<128x256xf32>
    %31 = tpu.matmul %30, %27, %cst_21 {dimension_numbers = #tpu.dot_dimension_numbers<[1], [0], [0], [1], [0, 0, 1, 1], [], []>} : vector<128x256xbf16>, vector<256x256xbf16>, vector<128x256xf32> -> vector<128x256xf32>
    %c5 = arith.constant 5 : index
    %c0_22 = arith.constant 0 : index
    %c0_23 = arith.constant 0 : index
    %32 = vector.load %arg2[%c5, %c0_22, %c0_23] : memref<7x256x256xbf16, #tpu.memory_space<vmem>>, vector<1x256x256xbf16>
    %33 = vector.shape_cast %32 : vector<1x256x256xbf16> to vector<256x256xbf16>
    %34 = arith.truncf %29 : vector<128x256xf32> to vector<128x256xbf16>
    %cst_24 = arith.constant dense<0.000000e+00> : vector<128x256xf32>
    %35 = tpu.matmul %34, %33, %cst_24 {dimension_numbers = #tpu.dot_dimension_numbers<[1], [0], [0], [1], [0, 0, 1, 1], [], []>} : vector<128x256xbf16>, vector<256x256xbf16>, vector<128x256xf32> -> vector<128x256xf32>
    %36 = arith.truncf %31 : vector<128x256xf32> to vector<128x256xbf16>
    %cst_25 = arith.constant dense<0.000000e+00> : vector<128x256xf32>
    %37 = tpu.matmul %36, %33, %cst_25 {dimension_numbers = #tpu.dot_dimension_numbers<[1], [0], [0], [1], [0, 0, 1, 1], [], []>} : vector<128x256xbf16>, vector<256x256xbf16>, vector<128x256xf32> -> vector<128x256xf32>
    %c6 = arith.constant 6 : index
    %c0_26 = arith.constant 0 : index
    %c0_27 = arith.constant 0 : index
    %38 = vector.load %arg2[%c6, %c0_26, %c0_27] : memref<7x256x256xbf16, #tpu.memory_space<vmem>>, vector<1x256x256xbf16>
    %39 = vector.shape_cast %38 : vector<1x256x256xbf16> to vector<256x256xbf16>
    %40 = arith.truncf %35 : vector<128x256xf32> to vector<128x256xbf16>
    %cst_28 = arith.constant dense<0.000000e+00> : vector<128x256xf32>
    %41 = tpu.matmul %40, %39, %cst_28 {dimension_numbers = #tpu.dot_dimension_numbers<[1], [0], [0], [1], [0, 0, 1, 1], [], []>} : vector<128x256xbf16>, vector<256x256xbf16>, vector<128x256xf32> -> vector<128x256xf32>
    %42 = arith.truncf %37 : vector<128x256xf32> to vector<128x256xbf16>
    %cst_29 = arith.constant dense<0.000000e+00> : vector<128x256xf32>
    %43 = tpu.matmul %42, %39, %cst_29 {dimension_numbers = #tpu.dot_dimension_numbers<[1], [0], [0], [1], [0, 0, 1, 1], [], []>} : vector<128x256xbf16>, vector<256x256xbf16>, vector<128x256xf32> -> vector<128x256xf32>
    %44 = vector.extract_strided_slice %41 {offsets = [0, 0], sizes = [128, 128], strides = [1, 1]} : vector<128x256xf32> to vector<128x128xf32>
    %45 = vector.extract_strided_slice %41 {offsets = [0, 128], sizes = [128, 128], strides = [1, 1]} : vector<128x256xf32> to vector<128x128xf32>
    %46 = arith.mulf %44, %44 : vector<128x128xf32>
    %47 = arith.mulf %45, %45 : vector<128x128xf32>
    %48 = arith.addf %46, %47 : vector<128x128xf32>
    %c0_30 = arith.constant 0 : index
    %c0_31 = arith.constant 0 : index
    %49 = vector.load %arg3[%c0_30, %c0_31] : memref<256x128xf32, #tpu.memory_space<vmem>>, vector<128x128xf32>
    tpu.vector_store %arg3[%c0_30, %c0_31], %48 {strides = array<i32>} : memref<256x128xf32, #tpu.memory_space<vmem>>, vector<128x128xf32>,
    %50 = vector.extract_strided_slice %43 {offsets = [0, 0], sizes = [128, 128], strides = [1, 1]} : vector<128x256xf32> to vector<128x128xf32>
    %51 = vector.extract_strided_slice %43 {offsets = [0, 128], sizes = [128, 128], strides = [1, 1]} : vector<128x256xf32> to vector<128x128xf32>
    %52 = arith.mulf %50, %50 : vector<128x128xf32>
    %53 = arith.mulf %51, %51 : vector<128x128xf32>
    %54 = arith.addf %52, %53 : vector<128x128xf32>
    %c128_32 = arith.constant 128 : index
    %c0_33 = arith.constant 0 : index
    %55 = vector.load %arg3[%c128_32, %c0_33] : memref<256x128xf32, #tpu.memory_space<vmem>>, vector<128x128xf32>
    tpu.vector_store %arg3[%c128_32, %c0_33], %54 {strides = array<i32>} : memref<256x128xf32, #tpu.memory_space<vmem>>, vector<128x128xf32>,
    return
  }
  func.func @transform_0(%arg0: i32) -> (i32, i32) {
    %c0_i32 = arith.constant 0 : i32
    %c0_i32_0 = arith.constant 0 : i32
    return %arg0, %c0_i32 : i32, i32
  }
  func.func @transform_1(%arg0: i32) -> (i32, i32, i32) {
    %c0_i32 = arith.constant 0 : i32
    %c0_i32_0 = arith.constant 0 : i32
    %c0_i32_1 = arith.constant 0 : i32
    %c0_i32_2 = arith.constant 0 : i32
    return %c0_i32, %c0_i32_0, %c0_i32_1 : i32, i32, i32
  }
  func.func @transform_2(%arg0: i32) -> (i32, i32) {
    %c0_i32 = arith.constant 0 : i32
    %c0_i32_0 = arith.constant 0 : i32
    return %arg0, %c0_i32 : i32, i32
  }
}

</mosaic_0001>

<llo_original>
// kernel: tpu_custom_call.1
$region0: #{tpu_custom_call.1}
  #allocation0 [shape = 'u32[]', space=smem, size = 0x4, offset = 0x4, fixed_abs, tag = 'smem constant byte address 0x4 - core index']
  #allocation1 [shape = 'u32[144,128]{1,0:T(1,128)}', space=vmem, size = 0x12000, scoped, tag = 'internal scratch']
  %s0 = inlined_call_operand.hbm [shape: f32[256,256], index: 0, kind: input, shape index: {}]
  %s1 = inlined_call_operand.hbm [shape: bf16[7,256,256], index: 1, kind: input, shape index: {}]
  %s2 = inlined_call_operand.hbm [shape: f32[256,128], index: 2, kind: output, shape index: {}]
  %s3 = sld [smem:[#allocation0]]
  $region26: #{tpu_custom_call.1} parent=0
    _
  %s5 = ssub.s32 1, %s3
  %s6 = scalar_select 0, %s5, %s3
  $region1: #{tpu_custom_call.1} parent=0
    #allocation2 [shape = 'u8[262144]{0}', space=vmem, size = 0x40000, scoped, tag = 'input window, operand 0, single buffered']
    #allocation3 [shape = 's32[1]{0}', space=sflag, size = 0x4, scoped, tag = 'scoped memory for tpu_custom_call.1']
    #allocation4 [shape = 's32[1]{0}', space=sflag, size = 0x4, scoped, tag = 'scoped memory for tpu_custom_call.1']
    #allocation5 [shape = 'u8[917504]{0}', space=vmem, size = 0xe0000, scoped, tag = 'input window, operand 1, single buffered']
    #allocation6 [shape = 's32[1]{0}', space=sflag, size = 0x4, scoped, tag = 'scoped memory for tpu_custom_call.1']
    #allocation7 [shape = 'u8[131072]{0}', space=vmem, size = 0x20000, scoped, tag = 'output window, operand 0, single buffered']
    %7 = vsyncpa [#allocation3], 0
    %8 = vsyncpa [#allocation6], 0
    %9 = vsyncpa [#allocation4], 0
    // Predicated region
    $region2: #{tpu_custom_call.1} parent=1 // pred_check
      _
    $region3: #{tpu_custom_call.1} parent=1 // pred_check_branch
      %11 = sbr.rel (0) target = $region5
    $region4: #{tpu_custom_call.1} parent=1 // pred_region
      %s13 = ssub.s32 8192, 8192
      %14 = vsyncadd [#allocation3], %s13
      %s15 = sshll.u32 [#allocation2], 4
      %s16 = int_to_ptr.vmem [resolvable:$true] %s15
      %21 = dma.hbm_to_vmem [thread:$0]  %s0, 8192, %s16, [#allocation3], 256, 256, 16
    $region5: #{tpu_custom_call.1} parent=1 // pred_fallthru
      _
    // Predicated region
    $region6: #{tpu_custom_call.1} parent=1 // pred_check
      _
    $region7: #{tpu_custom_call.1} parent=1 // pred_check_branch
      %23 = sbr.rel (0) target = $region9
    $region8: #{tpu_custom_call.1} parent=1 // pred_region
      %s25 = ssub.s32 28672, 28672
      %26 = vsyncadd [#allocation6], %s25
      %s27 = sshll.u32 [#allocation5], 4
      %s28 = int_to_ptr.vmem [resolvable:$true] %s27
      %33 = dma.hbm_to_vmem [thread:$0]  %s1, 28672, %s28, [#allocation6], 128, 128, 8
    $region9: #{tpu_custom_call.1} parent=1 // pred_fallthru
      _
    // Predicated region
    $region10: #{tpu_custom_call.1} parent=1 // pred_check
      _
    $region11: #{tpu_custom_call.1} parent=1 // pred_check_branch
      %35 = sbr.rel (0) target = $region13
    $region12: #{tpu_custom_call.1} parent=1 // pred_region
      %36 = dma.done [#allocation3], 8192
    $region13: #{tpu_custom_call.1} parent=1 // pred_fallthru
      _
    // Predicated region
    $region14: #{tpu_custom_call.1} parent=1 // pred_check
      _
    $region15: #{tpu_custom_call.1} parent=1 // pred_check_branch
      %38 = sbr.rel (0) target = $region17
    $region16: #{tpu_custom_call.1} parent=1 // pred_region
      %39 = dma.done [#allocation6], 28672
    $region17: #{tpu_custom_call.1} parent=1 // pred_fallthru
      _
    %v40 = vld [vmem:[#allocation2] sm:$0xff]
    %v41 = vld [vmem:[#allocation2 + $0x8] sm:$0xff]
    %v42 = vld [vmem:[#allocation2 + $0x10] sm:$0xff]
    %v43 = vld [vmem:[#allocation2 + $0x18] sm:$0xff]
    %v44 = vld [vmem:[#allocation2 + $0x20] sm:$0xff]
    %v45 = vld [vmem:[#allocation2 + $0x28] sm:$0xff]
    %v46 = vld [vmem:[#allocation2 + $0x30] sm:$0xff]
    %v47 = vld [vmem:[#allocation2 + $0x38] sm:$0xff]
    %v48 = vld [vmem:[#allocation2 + $0x40] sm:$0xff]
    %v49 = vld [vmem:[#allocation2 + $0x48] sm:$0xff]
    %v50 = vld [vmem:[#allocation2 + $0x50] sm:$0xff]
    %v51 = vld [vmem:[#allocation2 + $0x58] sm:$0xff]
    %v52 = vld [vmem:[#allocation2 + $0x60] sm:$0xff]
    %v53 = vld [vmem:[#allocation2 + $0x68] sm:$0xff]
    %v54 = vld [vmem:[#allocation2 + $0x70] sm:$0xff]
    %v55 = vld [vmem:[#allocation2 + $0x78] sm:$0xff]
    %v56 = vld [vmem:[#allocation2 + $0x80] sm:$0xff]
    %v57 = vld [vmem:[#allocation2 + $0x88] sm:$0xff]
    %v58 = vld [vmem:[#allocation2 + $0x90] sm:$0xff]
    %v59 = vld [vmem:[#allocation2 + $0x98] sm:$0xff]
    %v60 = vld [vmem:[#allocation2 + $0xa0] sm:$0xff]
    %v61 = vld [vmem:[#allocation2 + $0xa8] sm:$0xff]
    %v62 = vld [vmem:[#allocation2 + $0xb0] sm:$0xff]
    %v63 = vld [vmem:[#allocation2 + $0xb8] sm:$0xff]
    %v64 = vld [vmem:[#allocation2 + $0xc0] sm:$0xff]
    %v65 = vld [vmem:[#allocation2 + $0xc8] sm:$0xff]
    %v66 = vld [vmem:[#allocation2 + $0xd0] sm:$0xff]
    %v67 = vld [vmem:[#allocation2 + $0xd8] sm:$0xff]
    %v68 = vld [vmem:[#allocation2 + $0xe0] sm:$0xff]
    %v69 = vld [vmem:[#allocation2 + $0xe8] sm:$0xff]
    %v70 = vld [vmem:[#allocation2 + $0xf0] sm:$0xff]
    %v71 = vld [vmem:[#allocation2 + $0xf8] sm:$0xff]
    %v72 = vld [vmem:[#allocation2 + $0x100] sm:$0xff]
    %v73 = vld [vmem:[#allocation2 + $0x108] sm:$0xff]
    %v74 = vld [vmem:[#allocation2 + $0x110] sm:$0xff]
    %v75 = vld [vmem:[#allocation2 + $0x118] sm:$0xff]
    %v76 = vld [vmem:[#allocation2 + $0x120] sm:$0xff]
    %v77 = vld [vmem:[#allocation2 + $0x128] sm:$0xff]
    %v78 = vld [vmem:[#allocation2 + $0x130] sm:$0xff]
    %v79 = vld [vmem:[#allocation2 + $0x138] sm:$0xff]
    %v80 = vld [vmem:[#allocation2 + $0x140] sm:$0xff]
    %v81 = vld [vmem:[#allocation2 + $0x148] sm:$0xff]
    %v82 = vld [vmem:[#allocation2 + $0x150] sm:$0xff]
    %v83 = vld [vmem:[#allocation2 + $0x158] sm:$0xff]
    %v84 = vld [vmem:[#allocation2 + $0x160] sm:$0xff]
    %v85 = vld [vmem:[#allocation2 + $0x168] sm:$0xff]
    %v86 = vld [vmem:[#allocation2 + $0x170] sm:$0xff]
    %v87 = vld [vmem:[#allocation2 + $0x178] sm:$0xff]
    %v88 = vld [vmem:[#allocation2 + $0x180] sm:$0xff]
    %v89 = vld [vmem:[#allocation2 + $0x188] sm:$0xff]
    %v90 = vld [vmem:[#allocation2 + $0x190] sm:$0xff]
    %v91 = vld [vmem:[#allocation2 + $0x198] sm:$0xff]
    %v92 = vld [vmem:[#allocation2 + $0x1a0] sm:$0xff]
    %v93 = vld [vmem:[#allocation2 + $0x1a8] sm:$0xff]
    %v94 = vld [vmem:[#allocation2 + $0x1b0] sm:$0xff]
    %v95 = vld [vmem:[#allocation2 + $0x1b8] sm:$0xff]
    %v96 = vld [vmem:[#allocation2 + $0x1c0] sm:$0xff]
    %v97 = vld [vmem:[#allocation2 + $0x1c8] sm:$0xff]
    %v98 = vld [vmem:[#allocation2 + $0x1d0] sm:$0xff]
    %v99 = vld [vmem:[#allocation2 + $0x1d8] sm:$0xff]
    %v100 = vld [vmem:[#allocation2 + $0x1e0] sm:$0xff]
    %v101 = vld [vmem:[#allocation2 + $0x1e8] sm:$0xff]
    %v102 = vld [vmem:[#allocation2 + $0x1f0] sm:$0xff]
    %v103 = vld [vmem:[#allocation2 + $0x1f8] sm:$0xff]
    %v104 = vld [vmem:[#allocation5] sm:$0xff]
    %v105 = vld [vmem:[#allocation5 + $0x8] sm:$0xff]
    %v106 = vld [vmem:[#allocation5 + $0x10] sm:$0xff]
    %v107 = vld [vmem:[#allocation5 + $0x18] sm:$0xff]
    %v108 = vld [vmem:[#allocation5 + $0x20] sm:$0xff]
    %v109 = vld [vmem:[#allocation5 + $0x28] sm:$0xff]
    %v110 = vld [vmem:[#allocation5 + $0x30] sm:$0xff]
    %v111 = vld [vmem:[#allocation5 + $0x38] sm:$0xff]
    %v112 = vld [vmem:[#allocation5 + $0x40] sm:$0xff]
    %v113 = vld [vmem:[#allocation5 + $0x48] sm:$0xff]
    %v114 = vld [vmem:[#allocation5 + $0x50] sm:$0xff]
    %v115 = vld [vmem:[#allocation5 + $0x58] sm:$0xff]
    %v116 = vld [vmem:[#allocation5 + $0x60] sm:$0xff]
    %v117 = vld [vmem:[#allocation5 + $0x68] sm:$0xff]
    %v118 = vld [vmem:[#allocation5 + $0x70] sm:$0xff]
    %v119 = vld [vmem:[#allocation5 + $0x78] sm:$0xff]
    %v120 = vld [vmem:[#allocation5 + $0x80] sm:$0xff]
    %v121 = vld [vmem:[#allocation5 + $0x88] sm:$0xff]
    %v122 = vld [vmem:[#allocation5 + $0x90] sm:$0xff]
    %v123 = vld [vmem:[#allocation5 + $0x98] sm:$0xff]
    %v124 = vld [vmem:[#allocation5 + $0xa0] sm:$0xff]
    %v125 = vld [vmem:[#allocation5 + $0xa8] sm:$0xff]
    %v126 = vld [vmem:[#allocation5 + $0xb0] sm:$0xff]
    %v127 = vld [vmem:[#allocation5 + $0xb8] sm:$0xff]
    %v128 = vld [vmem:[#allocation5 + $0xc0] sm:$0xff]
    %v129 = vld [vmem:[#allocation5 + $0xc8] sm:$0xff]
    %v130 = vld [vmem:[#allocation5 + $0xd0] sm:$0xff]
    %v131 = vld [vmem:[#allocation5 + $0xd8] sm:$0xff]
    %v132 = vld [vmem:[#allocation5 + $0xe0] sm:$0xff]
    %v133 = vld [vmem:[#allocation5 + $0xe8] sm:$0xff]
    %v134 = vld [vmem:[#allocation5 + $0xf0] sm:$0xff]
    %v135 = vld [vmem:[#allocation5 + $0xf8] sm:$0xff]
    %v136 = vpack.c.bf16 %v42, %v40
    %v137 = vpack.c.bf16 %v43, %v41
    %v138 = vpack.c.bf16 %v46, %v44
    %v139 = vpack.c.bf16 %v47, %v45
    %v140 = vpack.c.bf16 %v50, %v48
    %v141 = vpack.c.bf16 %v51, %v49
    %v142 = vpack.c.bf16 %v54, %v52
    %v143 = vpack.c.bf16 %v55, %v53
    %v144 = vpack.c.bf16 %v58, %v56
    %v145 = vpack.c.bf16 %v59, %v57
    %v146 = vpack.c.bf16 %v62, %v60
    %v147 = vpack.c.bf16 %v63, %v61
    %v148 = vpack.c.bf16 %v66, %v64
    %v149 = vpack.c.bf16 %v67, %v65
    %v150 = vpack.c.bf16 %v70, %v68
    %v151 = vpack.c.bf16 %v71, %v69
    %v184 = vunpack.c.l.b16 %v104
    %v185 = vunpack.c.h.b16 %v104
    %v186 = vunpack.c.l.b16 %v105
    %v187 = vunpack.c.h.b16 %v105
    %v188 = vunpack.c.l.b16 %v106
    %v189 = vunpack.c.h.b16 %v106
    %v190 = vunpack.c.l.b16 %v107
    %v191 = vunpack.c.h.b16 %v107
    %v192 = vunpack.c.l.b16 %v108
    %v193 = vunpack.c.h.b16 %v108
    %v194 = vunpack.c.l.b16 %v109
    %v195 = vunpack.c.h.b16 %v109
    %v196 = vunpack.c.l.b16 %v110
    %v197 = vunpack.c.h.b16 %v110
    %v198 = vunpack.c.l.b16 %v111
    %v199 = vunpack.c.h.b16 %v111
    %v200 = vunpack.c.l.b16 %v112
    %v201 = vunpack.c.h.b16 %v112
    %v202 = vunpack.c.l.b16 %v113
    %v203 = vunpack.c.h.b16 %v113
    %v204 = vunpack.c.l.b16 %v114
    %v205 = vunpack.c.h.b16 %v114
    %v206 = vunpack.c.l.b16 %v115
    %v207 = vunpack.c.h.b16 %v115
    %v208 = vunpack.c.l.b16 %v116
    %v209 = vunpack.c.h.b16 %v116
    %v210 = vunpack.c.l.b16 %v117
    %v211 = vunpack.c.h.b16 %v117
    %v212 = vunpack.c.l.b16 %v118
    %v213 = vunpack.c.h.b16 %v118
    %v214 = vunpack.c.l.b16 %v119
    %v215 = vunpack.c.h.b16 %v119
    %v216 = vunpack.c.l.b16 %v120
    %v217 = vunpack.c.h.b16 %v120
    %v218 = vunpack.c.l.b16 %v121
    %v219 = vunpack.c.h.b16 %v121
    %v220 = vunpack.c.l.b16 %v122
    %v221 = vunpack.c.h.b16 %v122
    %v222 = vunpack.c.l.b16 %v123
    %v223 = vunpack.c.h.b16 %v123
    %v224 = vunpack.c.l.b16 %v124
    %v225 = vunpack.c.h.b16 %v124
    %v226 = vunpack.c.l.b16 %v125
    %v227 = vunpack.c.h.b16 %v125
    %v228 = vunpack.c.l.b16 %v126
    %v229 = vunpack.c.h.b16 %v126
    %v230 = vunpack.c.l.b16 %v127
    %v231 = vunpack.c.h.b16 %v127
    %v232 = vunpack.c.l.b16 %v128
    %v233 = vunpack.c.h.b16 %v128
    %v234 = vunpack.c.l.b16 %v129
    %v235 = vunpack.c.h.b16 %v129
    %v236 = vunpack.c.l.b16 %v130
    %v237 = vunpack.c.h.b16 %v130
    %v238 = vunpack.c.l.b16 %v131
    %v239 = vunpack.c.h.b16 %v131
    %v240 = vunpack.c.l.b16 %v132
    %v241 = vunpack.c.h.b16 %v132
    %v242 = vunpack.c.l.b16 %v133
    %v243 = vunpack.c.h.b16 %v133
    %v244 = vunpack.c.l.b16 %v134
    %v245 = vunpack.c.h.b16 %v134
    %v246 = vunpack.c.l.b16 %v135
    %v247 = vunpack.c.h.b16 %v135
    %v248 = vpack.c.b16 %v186, %v184
    %v249 = vpack.c.b16 %v187, %v185
    %v250 = vpack.c.b16 %v190, %v188
    %v251 = vpack.c.b16 %v191, %v189
    %v252 = vpack.c.b16 %v194, %v192
    %v253 = vpack.c.b16 %v195, %v193
    %v254 = vpack.c.b16 %v198, %v196
    %v255 = vpack.c.b16 %v199, %v197
    %v256 = vpack.c.b16 %v202, %v200
    %v257 = vpack.c.b16 %v203, %v201
    %v258 = vpack.c.b16 %v206, %v204
    %v259 = vpack.c.b16 %v207, %v205
    %v260 = vpack.c.b16 %v210, %v208
    %v261 = vpack.c.b16 %v211, %v209
    %v262 = vpack.c.b16 %v214, %v212
    %v263 = vpack.c.b16 %v215, %v213
    %v264 = vpack.c.b16 %v218, %v216
    %v265 = vpack.c.b16 %v219, %v217
    %v266 = vpack.c.b16 %v222, %v220
    %v267 = vpack.c.b16 %v223, %v221
    %v268 = vpack.c.b16 %v226, %v224
    %v269 = vpack.c.b16 %v227, %v225
    %v270 = vpack.c.b16 %v230, %v228
    %v271 = vpack.c.b16 %v231, %v229
    %v272 = vpack.c.b16 %v234, %v232
    %v273 = vpack.c.b16 %v235, %v233
    %v274 = vpack.c.b16 %v238, %v236
    %v275 = vpack.c.b16 %v239, %v237
    %v276 = vpack.c.b16 %v242, %v240
    %v277 = vpack.c.b16 %v243, %v241
    %v278 = vpack.c.b16 %v246, %v244
    %v279 = vpack.c.b16 %v247, %v245
    %312 = vmatprep.subr.bf16.mxu0 %v249
    %313 = vmatpush1.bf16.msra.mxu0 %v248
    %314 = vmatprep.subr.bf16.mxu0 %v251
    %315 = vmatpush1.bf16.msra.mxu0 %v250
    %316 = vmatprep.subr.bf16.mxu0 %v253
    %317 = vmatpush1.bf16.msra.mxu0 %v252
    %318 = vmatprep.subr.bf16.mxu0 %v255
    %319 = vmatpush1.bf16.msra.mxu0 %v254
    %320 = vmatprep.subr.bf16.mxu0 %v257
    %321 = vmatpush1.bf16.msra.mxu0 %v256
    %322 = vmatprep.subr.bf16.mxu0 %v259
    %323 = vmatpush1.bf16.msra.mxu0 %v258
    %324 = vmatprep.subr.bf16.mxu0 %v261
    %325 = vmatpush1.bf16.msra.mxu0 %v260
    %326 = vmatprep.subr.bf16.mxu0 %v263
    %327 = vmatpush1.bf16.msra.mxu0 %v262
    %328 = vmatprep.subr.bf16.mxu0 %v265
    %329 = vmatpush1.bf16.msra.mxu0 %v264
    %330 = vmatprep.subr.bf16.mxu0 %v267
    %331 = vmatpush1.bf16.msra.mxu0 %v266
    %332 = vmatprep.subr.bf16.mxu0 %v269
    %333 = vmatpush1.bf16.msra.mxu0 %v268
    %334 = vmatprep.subr.bf16.mxu0 %v271
    %335 = vmatpush1.bf16.msra.mxu0 %v270
    %336 = vmatprep.subr.bf16.mxu0 %v273
    %337 = vmatpush1.bf16.msra.mxu0 %v272
    %338 = vmatprep.subr.bf16.mxu0 %v275
    %339 = vmatpush1.bf16.msra.mxu0 %v274
    %340 = vmatprep.subr.bf16.mxu0 %v277
    %341 = vmatpush1.bf16.msra.mxu0 %v276
    %342 = vmatprep.subr.bf16.mxu0 %v279
    %343 = vmatpush1.bf16.msra.mxu0 %v278
    %344 = vmatprep.mubr.bf16.mxu0 %v137
    %345 = vmatmul.mubr.bf16.gmra.mrb[0].mxu0 %v136
    %v346 = vpop.f32.mrb[0].mxu0
    %v347 = vadd.f32 0.0, %v346
    %v348 = vpop.f32.mrb[0].mxu0
    %v349 = vadd.f32 0.0, %v348
    %v350 = vpop.f32.mrb[0].mxu0
    %v351 = vadd.f32 0.0, %v350
    %v352 = vpop.f32.mrb[0].mxu0
    %v353 = vadd.f32 0.0, %v352
    %354 = vmatprep.mubr.bf16.mxu0 %v139
    %355 = vmatmul.mubr.bf16.gmra.mrb[0].mxu0 %v138
    %v356 = vpop.f32.mrb[0].mxu0
    %v357 = vadd.f32 0.0, %v356
    %v358 = vpop.f32.mrb[0].mxu0
    %v359 = vadd.f32 0.0, %v358
    %v360 = vpop.f32.mrb[0].mxu0
    %v361 = vadd.f32 0.0, %v360
    %v362 = vpop.f32.mrb[0].mxu0
    %v363 = vadd.f32 0.0, %v362
    %364 = vmatprep.mubr.bf16.mxu0 %v141
    %365 = vmatmul.mubr.bf16.gmra.mrb[0].mxu0 %v140
    %v366 = vpop.f32.mrb[0].mxu0
    %v367 = vadd.f32 0.0, %v366
    %v368 = vpop.f32.mrb[0].mxu0
    %v369 = vadd.f32 0.0, %v368
    %v370 = vpop.f32.mrb[0].mxu0
    %v371 = vadd.f32 0.0, %v370
    %v372 = vpop.f32.mrb[0].mxu0
    %v373 = vadd.f32 0.0, %v372
    %374 = vmatprep.mubr.bf16.mxu0 %v143
    %375 = vmatmul.mubr.bf16.gmra.mrb[0].mxu0 %v142
    %v376 = vpop.f32.mrb[0].mxu0
    %v377 = vadd.f32 0.0, %v376
    %v378 = vpop.f32.mrb[0].mxu0
    %v379 = vadd.f32 0.0, %v378
    %v380 = vpop.f32.mrb[0].mxu0
    %v381 = vadd.f32 0.0, %v380
    %v382 = vpop.f32.mrb[0].mxu0
    %v383 = vadd.f32 0.0, %v382
    %384 = vmatprep.mubr.bf16.mxu0 %v145
    %385 = vmatmul.mubr.bf16.gmra.mrb[0].mxu0 %v144
    %v386 = vpop.f32.mrb[0].mxu0
    %v387 = vadd.f32 0.0, %v386
    %v388 = vpop.f32.mrb[0].mxu0
    %v389 = vadd.f32 0.0, %v388
    %v390 = vpop.f32.mrb[0].mxu0
    %v391 = vadd.f32 0.0, %v390
    %v392 = vpop.f32.mrb[0].mxu0
    %v393 = vadd.f32 0.0, %v392
    %394 = vmatprep.mubr.bf16.mxu0 %v147
    %395 = vmatmul.mubr.bf16.gmra.mrb[0].mxu0 %v146
    %v396 = vpop.f32.mrb[0].mxu0
    %v397 = vadd.f32 0.0, %v396
    %v398 = vpop.f32.mrb[0].mxu0
    %v399 = vadd.f32 0.0, %v398
    %v400 = vpop.f32.mrb[0].mxu0
    %v401 = vadd.f32 0.0, %v400
    %v402 = vpop.f32.mrb[0].mxu0
    %v403 = vadd.f32 0.0, %v402
    %404 = vmatprep.mubr.bf16.mxu0 %v149
    %405 = vmatmul.mubr.bf16.gmra.mrb[0].mxu0 %v148
    %v406 = vpop.f32.mrb[0].mxu0
    %v407 = vadd.f32 0.0, %v406
    %v408 = vpop.f32.mrb[0].mxu0
    %v409 = vadd.f32 0.0, %v408
    %v410 = vpop.f32.mrb[0].mxu0
    %v411 = vadd.f32 0.0, %v410
    %v412 = vpop.f32.mrb[0].mxu0
    %v413 = vadd.f32 0.0, %v412
    %414 = vmatprep.mubr.bf16.mxu0 %v151
    %415 = vmatmul.mubr.bf16.gmra.mrb[0].mxu0 %v150
    %v416 = vpop.f32.mrb[0].mxu0
    %v417 = vadd.f32 0.0, %v416
    %v418 = vpop.f32.mrb[0].mxu0
    %v419 = vadd.f32 0.0, %v418
    %v420 = vpop.f32.mrb[0].mxu0
    %v421 = vadd.f32 0.0, %v420
    %v422 = vpop.f32.mrb[0].mxu0
    %v423 = vadd.f32 0.0, %v422
    %424 = vdwg.mxu0
    %v425 = vpack.c.bf16 %v74, %v72
    %v426 = vpack.c.bf16 %v75, %v73
    %v427 = vpack.c.bf16 %v78, %v76
    %v428 = vpack.c.bf16 %v79, %v77
    %v429 = vpack.c.bf16 %v82, %v80
    %v430 = vpack.c.bf16 %v83, %v81
    %v431 = vpack.c.bf16 %v86, %v84
    %v432 = vpack.c.bf16 %v87, %v85
    %v433 = vpack.c.bf16 %v90, %v88
    %v434 = vpack.c.bf16 %v91, %v89
    %v435 = vpack.c.bf16 %v94, %v92
    %v436 = vpack.c.bf16 %v95, %v93
    %v437 = vpack.c.bf16 %v98, %v96
    %v438 = vpack.c.bf16 %v99, %v97
    %v439 = vpack.c.bf16 %v102, %v100
    %v440 = vpack.c.bf16 %v103, %v101
    %441 = vmatprep.subr.bf16.mxu0 %v249
    %442 = vmatpush1.bf16.msra.mxu0 %v248
    %443 = vmatprep.subr.bf16.mxu0 %v251
    %444 = vmatpush1.bf16.msra.mxu0 %v250
    %445 = vmatprep.subr.bf16.mxu0 %v253
    %446 = vmatpush1.bf16.msra.mxu0 %v252
    %447 = vmatprep.subr.bf16.mxu0 %v255
    %448 = vmatpush1.bf16.msra.mxu0 %v254
    %449 = vmatprep.subr.bf16.mxu0 %v257
    %450 = vmatpush1.bf16.msra.mxu0 %v256
    %451 = vmatprep.subr.bf16.mxu0 %v259
    %452 = vmatpush1.bf16.msra.mxu0 %v258
    %453 = vmatprep.subr.bf16.mxu0 %v261
    %454 = vmatpush1.bf16.msra.mxu0 %v260
    %455 = vmatprep.subr.bf16.mxu0 %v263
    %456 = vmatpush1.bf16.msra.mxu0 %v262
    %457 = vmatprep.subr.bf16.mxu0 %v265
    %458 = vmatpush1.bf16.msra.mxu0 %v264
    %459 = vmatprep.subr.bf16.mxu0 %v267
    %460 = vmatpush1.bf16.msra.mxu0 %v266
    %461 = vmatprep.subr.bf16.mxu0 %v269
    %462 = vmatpush1.bf16.msra.mxu0 %v268
    %463 = vmatprep.subr.bf16.mxu0 %v271
    %464 = vmatpush1.bf16.msra.mxu0 %v270
    %465 = vmatprep.subr.bf16.mxu0 %v273
    %466 = vmatpush1.bf16.msra.mxu0 %v272
    %467 = vmatprep.subr.bf16.mxu0 %v275
    %468 = vmatpush1.bf16.msra.mxu0 %v274
    %469 = vmatprep.subr.bf16.mxu0 %v277
    %470 = vmatpush1.bf16.msra.mxu0 %v276
    %471 = vmatprep.subr.bf16.mxu0 %v279
    %472 = vmatpush1.bf16.msra.mxu0 %v278
    %473 = vmatprep.mubr.bf16.mxu0 %v426
    %474 = vmatmul.mubr.bf16.gmra.mrb[0].mxu0 %v425
    %v475 = vpop.f32.mrb[0].mxu0
    %v476 = vadd.f32 0.0, %v475
    %v477 = vpop.f32.mrb[0].mxu0
    %v478 = vadd.f32 0.0, %v477
    %v479 = vpop.f32.mrb[0].mxu0
    %v480 = vadd.f32 0.0, %v479
    %v481 = vpop.f32.mrb[0].mxu0
    %v482 = vadd.f32 0.0, %v481
    %483 = vmatprep.mubr.bf16.mxu0 %v428
    %484 = vmatmul.mubr.bf16.gmra.mrb[0].mxu0 %v427
    %v485 = vpop.f32.mrb[0].mxu0
    %v486 = vadd.f32 0.0, %v485
    %v487 = vpop.f32.mrb[0].mxu0
    %v488 = vadd.f32 0.0, %v487
    %v489 = vpop.f32.mrb[0].mxu0
    %v490 = vadd.f32 0.0, %v489
    %v491 = vpop.f32.mrb[0].mxu0
    %v492 = vadd.f32 0.0, %v491
    %493 = vmatprep.mubr.bf16.mxu0 %v430
    %494 = vmatmul.mubr.bf16.gmra.mrb[0].mxu0 %v429
    %v495 = vpop.f32.mrb[0].mxu0
    %v496 = vadd.f32 0.0, %v495
    %v497 = vpop.f32.mrb[0].mxu0
    %v498 = vadd.f32 0.0, %v497
    %v499 = vpop.f32.mrb[0].mxu0
    %v500 = vadd.f32 0.0, %v499
    %v501 = vpop.f32.mrb[0].mxu0
    %v502 = vadd.f32 0.0, %v501
    %503 = vmatprep.mubr.bf16.mxu0 %v432
    %504 = vmatmul.mubr.bf16.gmra.mrb[0].mxu0 %v431
    %v505 = vpop.f32.mrb[0].mxu0
    %v506 = vadd.f32 0.0, %v505
    %v507 = vpop.f32.mrb[0].mxu0
    %v508 = vadd.f32 0.0, %v507
    %v509 = vpop.f32.mrb[0].mxu0
    %v510 = vadd.f32 0.0, %v509
    %v511 = vpop.f32.mrb[0].mxu0
    %v512 = vadd.f32 0.0, %v511
    %513 = vmatprep.mubr.bf16.mxu0 %v434
    %514 = vmatmul.mubr.bf16.gmra.mrb[0].mxu0 %v433
    %v515 = vpop.f32.mrb[0].mxu0
    %v516 = vadd.f32 0.0, %v515
    %v517 = vpop.f32.mrb[0].mxu0
    %v518 = vadd.f32 0.0, %v517
    %v519 = vpop.f32.mrb[0].mxu0
    %v520 = vadd.f32 0.0, %v519
    %v521 = vpop.f32.mrb[0].mxu0
    %v522 = vadd.f32 0.0, %v521
    %523 = vmatprep.mubr.bf16.mxu0 %v436
    %524 = vmatmul.mubr.bf16.gmra.mrb[0].mxu0 %v435
    %v525 = vpop.f32.mrb[0].mxu0
    %v526 = vadd.f32 0.0, %v525
    %v527 = vpop.f32.mrb[0].mxu0
    %v528 = vadd.f32 0.0, %v527
    %v529 = vpop.f32.mrb[0].mxu0
    %v530 = vadd.f32 0.0, %v529
    %v531 = vpop.f32.mrb[0].mxu0
    %v532 = vadd.f32 0.0, %v531
    %533 = vmatprep.mubr.bf16.mxu0 %v438
    %534 = vmatmul.mubr.bf16.gmra.mrb[0].mxu0 %v437
    %v535 = vpop.f32.mrb[0].mxu0
    %v536 = vadd.f32 0.0, %v535
    %v537 = vpop.f32.mrb[0].mxu0
    %v538 = vadd.f32 0.0, %v537
    %v539 = vpop.f32.mrb[0].mxu0
    %v540 = vadd.f32 0.0, %v539
    %v541 = vpop.f32.mrb[0].mxu0
    %v542 = vadd.f32 0.0, %v541
    %543 = vmatprep.mubr.bf16.mxu0 %v440
    %544 = vmatmul.mubr.bf16.gmra.mrb[0].mxu0 %v439
    %v545 = vpop.f32.mrb[0].mxu0
    %v546 = vadd.f32 0.0, %v545
    %v547 = vpop.f32.mrb[0].mxu0
    %v548 = vadd.f32 0.0, %v547
    %v549 = vpop.f32.mrb[0].mxu0
    %v550 = vadd.f32 0.0, %v549
    %v551 = vpop.f32.mrb[0].mxu0
    %v552 = vadd.f32 0.0, %v551
    %553 = vdwg.mxu0
    %s554 = scalar_lea.vmem [#allocation5], 256
    %v555 = vld [vmem:[%s554] sm:$0xff]
    %v556 = vld [vmem:[%s554 + $0x8] sm:$0xff]
    %v557 = vld [vmem:[%s554 + $0x10] sm:$0xff]
    %v558 = vld [vmem:[%s554 + $0x18] sm:$0xff]
    %v559 = vld [vmem:[%s554 + $0x20] sm:$0xff]
    %v560 = vld [vmem:[%s554 + $0x28] sm:$0xff]
    %v561 = vld [vmem:[%s554 + $0x30] sm:$0xff]
    %v562 = vld [vmem:[%s554 + $0x38] sm:$0xff]
    %v563 = vld [vmem:[%s554 + $0x40] sm:$0xff]
    %v564 = vld [vmem:[%s554 + $0x48] sm:$0xff]
    %v565 = vld [vmem:[%s554 + $0x50] sm:$0xff]
    %v566 = vld [vmem:[%s554 + $0x58] sm:$0xff]
    %v567 = vld [vmem:[%s554 + $0x60] sm:$0xff]
    %v568 = vld [vmem:[%s554 + $0x68] sm:$0xff]
    %v569 = vld [vmem:[%s554 + $0x70] sm:$0xff]
    %v570 = vld [vmem:[%s554 + $0x78] sm:$0xff]
    %v571 = vld [vmem:[%s554 + $0x80] sm:$0xff]
    %v572 = vld [vmem:[%s554 + $0x88] sm:$0xff]
    %v573 = vld [vmem:[%s554 + $0x90] sm:$0xff]
    %v574 = vld [vmem:[%s554 + $0x98] sm:$0xff]
    %v575 = vld [vmem:[%s554 + $0xa0] sm:$0xff]
    %v576 = vld [vmem:[%s554 + $0xa8] sm:$0xff]
    %v577 = vld [vmem:[%s554 + $0xb0] sm:$0xff]
    %v578 = vld [vmem:[%s554 + $0xb8] sm:$0xff]
    %v579 = vld [vmem:[%s554 + $0xc0] sm:$0xff]
    %v580 = vld [vmem:[%s554 + $0xc8] sm:$0xff]
    %v581 = vld [vmem:[%s554 + $0xd0] sm:$0xff]
    %v582 = vld [vmem:[%s554 + $0xd8] sm:$0xff]
    %v583 = vld [vmem:[%s554 + $0xe0] sm:$0xff]
    %v584 = vld [vmem:[%s554 + $0xe8] sm:$0xff]
    %v585 = vld [vmem:[%s554 + $0xf0] sm:$0xff]
    %v586 = vld [vmem:[%s554 + $0xf8] sm:$0xff]
    %v587 = vpack.c.bf16 %v351, %v347
    %v588 = vpack.c.bf16 %v353, %v349
    %v589 = vpack.c.bf16 %v361, %v357
    %v590 = vpack.c.bf16 %v363, %v359
    %v591 = vpack.c.bf16 %v371, %v367
    %v592 = vpack.c.bf16 %v373, %v369
    %v593 = vpack.c.bf16 %v381, %v377
    %v594 = vpack.c.bf16 %v383, %v379
    %v595 = vpack.c.bf16 %v391, %v387
    %v596 = vpack.c.bf16 %v393, %v389
    %v597 = vpack.c.bf16 %v401, %v397
    %v598 = vpack.c.bf16 %v403, %v399
    %v599 = vpack.c.bf16 %v411, %v407
    %v600 = vpack.c.bf16 %v413, %v409
    %v601 = vpack.c.bf16 %v421, %v417
    %v602 = vpack.c.bf16 %v423, %v419
    %v635 = vunpack.c.l.b16 %v555
    %v636 = vunpack.c.h.b16 %v555
    %v637 = vunpack.c.l.b16 %v556
    %v638 = vunpack.c.h.b16 %v556
    %v639 = vunpack.c.l.b16 %v557
    %v640 = vunpack.c.h.b16 %v557
    %v641 = vunpack.c.l.b16 %v558
    %v642 = vunpack.c.h.b16 %v558
    %v643 = vunpack.c.l.b16 %v559
    %v644 = vunpack.c.h.b16 %v559
    %v645 = vunpack.c.l.b16 %v560
    %v646 = vunpack.c.h.b16 %v560
    %v647 = vunpack.c.l.b16 %v561
    %v648 = vunpack.c.h.b16 %v561
    %v649 = vunpack.c.l.b16 %v562
    %v650 = vunpack.c.h.b16 %v562
    %v651 = vunpack.c.l.b16 %v563
    %v652 = vunpack.c.h.b16 %v563
    %v653 = vunpack.c.l.b16 %v564
    %v654 = vunpack.c.h.b16 %v564
    %v655 = vunpack.c.l.b16 %v565
    %v656 = vunpack.c.h.b16 %v565
    %v657 = vunpack.c.l.b16 %v566
    %v658 = vunpack.c.h.b16 %v566
    %v659 = vunpack.c.l.b16 %v567
    %v660 = vunpack.c.h.b16 %v567
    %v661 = vunpack.c.l.b16 %v568
    %v662 = vunpack.c.h.b16 %v568
    %v663 = vunpack.c.l.b16 %v569
    %v664 = vunpack.c.h.b16 %v569
    %v665 = vunpack.c.l.b16 %v570
    %v666 = vunpack.c.h.b16 %v570
    %v667 = vunpack.c.l.b16 %v571
    %v668 = vunpack.c.h.b16 %v571
    %v669 = vunpack.c.l.b16 %v572
    %v670 = vunpack.c.h.b16 %v572
    %v671 = vunpack.c.l.b16 %v573
    %v672 = vunpack.c.h.b16 %v573
    %v673 = vunpack.c.l.b16 %v574
    %v674 = vunpack.c.h.b16 %v574
    %v675 = vunpack.c.l.b16 %v575
    %v676 = vunpack.c.h.b16 %v575
    %v677 = vunpack.c.l.b16 %v576
    %v678 = vunpack.c.h.b16 %v576
    %v679 = vunpack.c.l.b16 %v577
    %v680 = vunpack.c.h.b16 %v577
    %v681 = vunpack.c.l.b16 %v578
    %v682 = vunpack.c.h.b16 %v578
    %v683 = vunpack.c.l.b16 %v579
    %v684 = vunpack.c.h.b16 %v579
    %v685 = vunpack.c.l.b16 %v580
    %v686 = vunpack.c.h.b16 %v580
    %v687 = vunpack.c.l.b16 %v581
    %v688 = vunpack.c.h.b16 %v581
    %v689 = vunpack.c.l.b16 %v582
    %v690 = vunpack.c.h.b16 %v582
    %v691 = vunpack.c.l.b16 %v583
    %v692 = vunpack.c.h.b16 %v583
    %v693 = vunpack.c.l.b16 %v584
    %v694 = vunpack.c.h.b16 %v584
    %v695 = vunpack.c.l.b16 %v585
    %v696 = vunpack.c.h.b16 %v585
    %v697 = vunpack.c.l.b16 %v586
    %v698 = vunpack.c.h.b16 %v586
    %v699 = vpack.c.b16 %v637, %v635
    %v700 = vpack.c.b16 %v638, %v636
    %v701 = vpack.c.b16 %v641, %v639
    %v702 = vpack.c.b16 %v642, %v640
    %v703 = vpack.c.b16 %v645, %v643
    %v704 = vpack.c.b16 %v646, %v644
    %v705 = vpack.c.b16 %v649, %v647
    %v706 = vpack.c.b16 %v650, %v648
    %v707 = vpack.c.b16 %v653, %v651
    %v708 = vpack.c.b16 %v654, %v652
    %v709 = vpack.c.b16 %v657, %v655
    %v710 = vpack.c.b16 %v658, %v656
    %v711 = vpack.c.b16 %v661, %v659
    %v712 = vpack.c.b16 %v662, %v660
    %v713 = vpack.c.b16 %v665, %v663
    %v714 = vpack.c.b16 %v666, %v664
    %v715 = vpack.c.b16 %v669, %v667
    %v716 = vpack.c.b16 %v670, %v668
    %v717 = vpack.c.b16 %v673, %v671
    %v718 = vpack.c.b16 %v674, %v672
    %v719 = vpack.c.b16 %v677, %v675
    %v720 = vpack.c.b16 %v678, %v676
    %v721 = vpack.c.b16 %v681, %v679
    %v722 = vpack.c.b16 %v682, %v680
    %v723 = vpack.c.b16 %v685, %v683
    %v724 = vpack.c.b16 %v686, %v684
    %v725 = vpack.c.b16 %v689, %v687
    %v726 = vpack.c.b16 %v690, %v688
    %v727 = vpack.c.b16 %v693, %v691
    %v728 = vpack.c.b16 %v694, %v692
    %v729 = vpack.c.b16 %v697, %v695
    %v730 = vpack.c.b16 %v698, %v696
    %763 = vmatprep.subr.bf16.mxu0 %v700
    %764 = vmatpush1.bf16.msra.mxu0 %v699
    %765 = vmatprep.subr.bf16.mxu0 %v702
    %766 = vmatpush1.bf16.msra.mxu0 %v701
    %767 = vmatprep.subr.bf16.mxu0 %v704
    %768 = vmatpush1.bf16.msra.mxu0 %v703
    %769 = vmatprep.subr.bf16.mxu0 %v706
    %770 = vmatpush1.bf16.msra.mxu0 %v705
    %771 = vmatprep.subr.bf16.mxu0 %v708
    %772 = vmatpush1.bf16.msra.mxu0 %v707
    %773 = vmatprep.subr.bf16.mxu0 %v710
    %774 = vmatpush1.bf16.msra.mxu0 %v709
    %775 = vmatprep.subr.bf16.mxu0 %v712
    %776 = vmatpush1.bf16.msra.mxu0 %v711
    %777 = vmatprep.subr.bf16.mxu0 %v714
    %778 = vmatpush1.bf16.msra.mxu0 %v713
    %779 = vmatprep.subr.bf16.mxu0 %v716
    %780 = vmatpush1.bf16.msra.mxu0 %v715
    %781 = vmatprep.subr.bf16.mxu0 %v718
    %782 = vmatpush1.bf16.msra.mxu0 %v717
    %783 = vmatprep.subr.bf16.mxu0 %v720
    %784 = vmatpush1.bf16.msra.mxu0 %v719
    %785 = vmatprep.subr.bf16.mxu0 %v722
    %786 = vmatpush1.bf16.msra.mxu0 %v721
    %787 = vmatprep.subr.bf16.mxu0 %v724
    %788 = vmatpush1.bf16.msra.mxu0 %v723
    %789 = vmatprep.subr.bf16.mxu0 %v726
    %790 = vmatpush1.bf16.msra.mxu0 %v725
    %791 = vmatprep.subr.bf16.mxu0 %v728
    %792 = vmatpush1.bf16.msra.mxu0 %v727
    %793 = vmatprep.subr.bf16.mxu0 %v730
    %794 = vmatpush1.bf16.msra.mxu0 %v729
    %795 = vmatprep.mubr.bf16.mxu0 %v588
    %796 = vmatmul.mubr.bf16.gmra.mrb[0].mxu0 %v587
    %v797 = vpop.f32.mrb[0].mxu0
    %v798 = vadd.f32 0.0, %v797
    %v799 = vpop.f32.mrb[0].mxu0
    %v800 = vadd.f32 0.0, %v799
    %v801 = vpop.f32.mrb[0].mxu0
    %v802 = vadd.f32 0.0, %v801
    %v803 = vpop.f32.mrb[0].mxu0
    %v804 = vadd.f32 0.0, %v803
    %805 = vmatprep.mubr.bf16.mxu0 %v590
    %806 = vmatmul.mubr.bf16.gmra.mrb[0].mxu0 %v589
    %v807 = vpop.f32.mrb[0].mxu0
    %v808 = vadd.f32 0.0, %v807
    %v809 = vpop.f32.mrb[0].mxu0
    %v810 = vadd.f32 0.0, %v809
    %v811 = vpop.f32.mrb[0].mxu0
    %v812 = vadd.f32 0.0, %v811
    %v813 = vpop.f32.mrb[0].mxu0
    %v814 = vadd.f32 0.0, %v813
    %815 = vmatprep.mubr.bf16.mxu0 %v592
    %816 = vmatmul.mubr.bf16.gmra.mrb[0].mxu0 %v591
    %v817 = vpop.f32.mrb[0].mxu0
    %v818 = vadd.f32 0.0, %v817
    %v819 = vpop.f32.mrb[0].mxu0
    %v820 = vadd.f32 0.0, %v819
    %v821 = vpop.f32.mrb[0].mxu0
    %v822 = vadd.f32 0.0, %v821
    %v823 = vpop.f32.mrb[0].mxu0
    %v824 = vadd.f32 0.0, %v823
    %825 = vmatprep.mubr.bf16.mxu0 %v594
    %826 = vmatmul.mubr.bf16.gmra.mrb[0].mxu0 %v593
    %v827 = vpop.f32.mrb[0].mxu0
    %v828 = vadd.f32 0.0, %v827
    %v829 = vpop.f32.mrb[0].mxu0
    %v830 = vadd.f32 0.0, %v829
    %v831 = vpop.f32.mrb[0].mxu0
    %v832 = vadd.f32 0.0, %v831
    %v833 = vpop.f32.mrb[0].mxu0
    %v834 = vadd.f32 0.0, %v833
    %835 = vmatprep.mubr.bf16.mxu0 %v596
    %836 = vmatmul.mubr.bf16.gmra.mrb[0].mxu0 %v595
    %v837 = vpop.f32.mrb[0].mxu0
    %v838 = vadd.f32 0.0, %v837
    %v839 = vpop.f32.mrb[0].mxu0
    %v840 = vadd.f32 0.0, %v839
    %v841 = vpop.f32.mrb[0].mxu0
    %v842 = vadd.f32 0.0, %v841
    %v843 = vpop.f32.mrb[0].mxu0
    %v844 = vadd.f32 0.0, %v843
    %845 = vmatprep.mubr.bf16.mxu0 %v598
    %846 = vmatmul.mubr.bf16.gmra.mrb[0].mxu0 %v597
    %v847 = vpop.f32.mrb[0].mxu0
    %v848 = vadd.f32 0.0, %v847
    %v849 = vpop.f32.mrb[0].mxu0
    %v850 = vadd.f32 0.0, %v849
    %v851 = vpop.f32.mrb[0].mxu0
    %v852 = vadd.f32 0.0, %v851
    %v853 = vpop.f32.mrb[0].mxu0
    %v854 = vadd.f32 0.0, %v853
    %855 = vmatprep.mubr.bf16.mxu0 %v600
    %856 = vmatmul.mubr.bf16.gmra.mrb[0].mxu0 %v599
    %v857 = vpop.f32.mrb[0].mxu0
    %v858 = vadd.f32 0.0, %v857
    %v859 = vpop.f32.mrb[0].mxu0
    %v860 = vadd.f32 0.0, %v859
    %v861 = vpop.f32.mrb[0].mxu0
    %v862 = vadd.f32 0.0, %v861
    %v863 = vpop.f32.mrb[0].mxu0
    %v864 = vadd.f32 0.0, %v863
    %865 = vmatprep.mubr.bf16.mxu0 %v602
    %866 = vmatmul.mubr.bf16.gmra.mrb[0].mxu0 %v601
    %v867 = vpop.f32.mrb[0].mxu0
    %v868 = vadd.f32 0.0, %v867
    %v869 = vpop.f32.mrb[0].mxu0
    %v870 = vadd.f32 0.0, %v869
    %v871 = vpop.f32.mrb[0].mxu0
    %v872 = vadd.f32 0.0, %v871
    %v873 = vpop.f32.mrb[0].mxu0
    %v874 = vadd.f32 0.0, %v873
    %875 = vdwg.mxu0
    %v876 = vpack.c.bf16 %v480, %v476
    %v877 = vpack.c.bf16 %v482, %v478
    %v878 = vpack.c.bf16 %v490, %v486
    %v879 = vpack.c.bf16 %v492, %v488
    %v880 = vpack.c.bf16 %v500, %v496
    %v881 = vpack.c.bf16 %v502, %v498
    %v882 = vpack.c.bf16 %v510, %v506
    %v883 = vpack.c.bf16 %v512, %v508
    %v884 = vpack.c.bf16 %v520, %v516
    %v885 = vpack.c.bf16 %v522, %v518
    %v886 = vpack.c.bf16 %v530, %v526
    %v887 = vpack.c.bf16 %v532, %v528
    %v888 = vpack.c.bf16 %v540, %v536
    %v889 = vpack.c.bf16 %v542, %v538
    %v890 = vpack.c.bf16 %v550, %v546
    %v891 = vpack.c.bf16 %v552, %v548
    %892 = vmatprep.subr.bf16.mxu0 %v700
    %893 = vmatpush1.bf16.msra.mxu0 %v699
    %894 = vmatprep.subr.bf16.mxu0 %v702
    %895 = vmatpush1.bf16.msra.mxu0 %v701
    %896 = vmatprep.subr.bf16.mxu0 %v704
    %897 = vmatpush1.bf16.msra.mxu0 %v703
    %898 = vmatprep.subr.bf16.mxu0 %v706
    %899 = vmatpush1.bf16.msra.mxu0 %v705
    %900 = vmatprep.subr.bf16.mxu0 %v708
    %901 = vmatpush1.bf16.msra.mxu0 %v707
    %902 = vmatprep.subr.bf16.mxu0 %v710
    %903 = vmatpush1.bf16.msra.mxu0 %v709
    %904 = vmatprep.subr.bf16.mxu0 %v712
    %905 = vmatpush1.bf16.msra.mxu0 %v711
    %906 = vmatprep.subr.bf16.mxu0 %v714
    %907 = vmatpush1.bf16.msra.mxu0 %v713
    %908 = vmatprep.subr.bf16.mxu0 %v716
    %909 = vmatpush1.bf16.msra.mxu0 %v715
    %910 = vmatprep.subr.bf16.mxu0 %v718
    %911 = vmatpush1.bf16.msra.mxu0 %v717
    %912 = vmatprep.subr.bf16.mxu0 %v720
    %913 = vmatpush1.bf16.msra.mxu0 %v719
    %914 = vmatprep.subr.bf16.mxu0 %v722
    %915 = vmatpush1.bf16.msra.mxu0 %v721
    %916 = vmatprep.subr.bf16.mxu0 %v724
    %917 = vmatpush1.bf16.msra.mxu0 %v723
    %918 = vmatprep.subr.bf16.mxu0 %v726
    %919 = vmatpush1.bf16.msra.mxu0 %v725
    %920 = vmatprep.subr.bf16.mxu0 %v728
    %921 = vmatpush1.bf16.msra.mxu0 %v727
    %922 = vmatprep.subr.bf16.mxu0 %v730
    %923 = vmatpush1.bf16.msra.mxu0 %v729
    %924 = vmatprep.mubr.bf16.mxu0 %v877
    %925 = vmatmul.mubr.bf16.gmra.mrb[0].mxu0 %v876
    %v926 = vpop.f32.mrb[0].mxu0
    %v927 = vadd.f32 0.0, %v926
    %v928 = vpop.f32.mrb[0].mxu0
    %v929 = vadd.f32 0.0, %v928
    %v930 = vpop.f32.mrb[0].mxu0
    %v931 = vadd.f32 0.0, %v930
    %v932 = vpop.f32.mrb[0].mxu0
    %v933 = vadd.f32 0.0, %v932
    %934 = vmatprep.mubr.bf16.mxu0 %v879
    %935 = vmatmul.mubr.bf16.gmra.mrb[0].mxu0 %v878
    %v936 = vpop.f32.mrb[0].mxu0
    %v937 = vadd.f32 0.0, %v936
    %v938 = vpop.f32.mrb[0].mxu0
    %v939 = vadd.f32 0.0, %v938
    %v940 = vpop.f32.mrb[0].mxu0
    %v941 = vadd.f32 0.0, %v940
    %v942 = vpop.f32.mrb[0].mxu0
    %v943 = vadd.f32 0.0, %v942
    %944 = vmatprep.mubr.bf16.mxu0 %v881
    %945 = vmatmul.mubr.bf16.gmra.mrb[0].mxu0 %v880
    %v946 = vpop.f32.mrb[0].mxu0
    %v947 = vadd.f32 0.0, %v946
    %v948 = vpop.f32.mrb[0].mxu0
    %v949 = vadd.f32 0.0, %v948
    %v950 = vpop.f32.mrb[0].mxu0
    %v951 = vadd.f32 0.0, %v950
    %v952 = vpop.f32.mrb[0].mxu0
    %v953 = vadd.f32 0.0, %v952
    %954 = vmatprep.mubr.bf16.mxu0 %v883
    %955 = vmatmul.mubr.bf16.gmra.mrb[0].mxu0 %v882
    %v956 = vpop.f32.mrb[0].mxu0
    %v957 = vadd.f32 0.0, %v956
    %v958 = vpop.f32.mrb[0].mxu0
    %v959 = vadd.f32 0.0, %v958
    %v960 = vpop.f32.mrb[0].mxu0
    %v961 = vadd.f32 0.0, %v960
    %v962 = vpop.f32.mrb[0].mxu0
    %v963 = vadd.f32 0.0, %v962
    %964 = vmatprep.mubr.bf16.mxu0 %v885
    %965 = vmatmul.mubr.bf16.gmra.mrb[0].mxu0 %v884
    %v966 = vpop.f32.mrb[0].mxu0
    %v967 = vadd.f32 0.0, %v966
    %v968 = vpop.f32.mrb[0].mxu0
    %v969 = vadd.f32 0.0, %v968
    %v970 = vpop.f32.mrb[0].mxu0
    %v971 = vadd.f32 0.0, %v970
    %v972 = vpop.f32.mrb[0].mxu0
    %v973 = vadd.f32 0.0, %v972
    %974 = vmatprep.mubr.bf16.mxu0 %v887
    %975 = vmatmul.mubr.bf16.gmra.mrb[0].mxu0 %v886
    %v976 = vpop.f32.mrb[0].mxu0
    %v977 = vadd.f32 0.0, %v976
    %v978 = vpop.f32.mrb[0].mxu0
    %v979 = vadd.f32 0.0, %v978
    %v980 = vpop.f32.mrb[0].mxu0
    %v981 = vadd.f32 0.0, %v980
    %v982 = vpop.f32.mrb[0].mxu0
    %v983 = vadd.f32 0.0, %v982
    %984 = vmatprep.mubr.bf16.mxu0 %v889
    %985 = vmatmul.mubr.bf16.gmra.mrb[0].mxu0 %v888
    %v986 = vpop.f32.mrb[0].mxu0
    %v987 = vadd.f32 0.0, %v986
    %v988 = vpop.f32.mrb[0].mxu0
    %v989 = vadd.f32 0.0, %v988
    %v990 = vpop.f32.mrb[0].mxu0
    %v991 = vadd.f32 0.0, %v990
    %v992 = vpop.f32.mrb[0].mxu0
    %v993 = vadd.f32 0.0, %v992
    %994 = vmatprep.mubr.bf16.mxu0 %v891
    %995 = vmatmul.mubr.bf16.gmra.mrb[0].mxu0 %v890
    %v996 = vpop.f32.mrb[0].mxu0
    %v997 = vadd.f32 0.0, %v996
    %v998 = vpop.f32.mrb[0].mxu0
    %v999 = vadd.f32 0.0, %v998
    %v1000 = vpop.f32.mrb[0].mxu0
    %v1001 = vadd.f32 0.0, %v1000
    %v1002 = vpop.f32.mrb[0].mxu0
    %v1003 = vadd.f32 0.0, %v1002
    %1004 = vdwg.mxu0
    %s1005 = scalar_lea.vmem [#allocation5], 512
    %v1006 = vld [vmem:[%s1005] sm:$0xff]
    %v1007 = vld [vmem:[%s1005 + $0x8] sm:$0xff]
    %v1008 = vld [vmem:[%s1005 + $0x10] sm:$0xff]
    %v1009 = vld [vmem:[%s1005 + $0x18] sm:$0xff]
    %v1010 = vld [vmem:[%s1005 + $0x20] sm:$0xff]
    %v1011 = vld [vmem:[%s1005 + $0x28] sm:$0xff]
    %v1012 = vld [vmem:[%s1005 + $0x30] sm:$0xff]
    %v1013 = vld [vmem:[%s1005 + $0x38] sm:$0xff]
    %v1014 = vld [vmem:[%s1005 + $0x40] sm:$0xff]
    %v1015 = vld [vmem:[%s1005 + $0x48] sm:$0xff]
    %v1016 = vld [vmem:[%s1005 + $0x50] sm:$0xff]
    %v1017 = vld [vmem:[%s1005 + $0x58] sm:$0xff]
    %v1018 = vld [vmem:[%s1005 + $0x60] sm:$0xff]
    %v1019 = vld [vmem:[%s1005 + $0x68] sm:$0xff]
    %v1020 = vld [vmem:[%s1005 + $0x70] sm:$0xff]
    %v1021 = vld [vmem:[%s1005 + $0x78] sm:$0xff]
    %v1022 = vld [vmem:[%s1005 + $0x80] sm:$0xff]
    %v1023 = vld [vmem:[%s1005 + $0x88] sm:$0xff]
    %v1024 = vld [vmem:[%s1005 + $0x90] sm:$0xff]
    %v1025 = vld [vmem:[%s1005 + $0x98] sm:$0xff]
    %v1026 = vld [vmem:[%s1005 + $0xa0] sm:$0xff]
    %v1027 = vld [vmem:[%s1005 + $0xa8] sm:$0xff]
    %v1028 = vld [vmem:[%s1005 + $0xb0] sm:$0xff]
    %v1029 = vld [vmem:[%s1005 + $0xb8] sm:$0xff]
    %v1030 = vld [vmem:[%s1005 + $0xc0] sm:$0xff]
    %v1031 = vld [vmem:[%s1005 + $0xc8] sm:$0xff]
    %v1032 = vld [vmem:[%s1005 + $0xd0] sm:$0xff]
    %v1033 = vld [vmem:[%s1005 + $0xd8] sm:$0xff]
    %v1034 = vld [vmem:[%s1005 + $0xe0] sm:$0xff]
    %v1035 = vld [vmem:[%s1005 + $0xe8] sm:$0xff]
    %v1036 = vld [vmem:[%s1005 + $0xf0] sm:$0xff]
    %v1037 = vld [vmem:[%s1005 + $0xf8] sm:$0xff]
    %v1038 = vpack.c.bf16 %v802, %v798
    %v1039 = vpack.c.bf16 %v804, %v800
    %v1040 = vpack.c.bf16 %v812, %v808
    %v1041 = vpack.c.bf16 %v814, %v810
    %v1042 = vpack.c.bf16 %v822, %v818
    %v1043 = vpack.c.bf16 %v824, %v820
    %v1044 = vpack.c.bf16 %v832, %v828
    %v1045 = vpack.c.bf16 %v834, %v830
    %v1046 = vpack.c.bf16 %v842, %v838
    %v1047 = vpack.c.bf16 %v844, %v840
    %v1048 = vpack.c.bf16 %v852, %v848
    %v1049 = vpack.c.bf16 %v854, %v850
    %v1050 = vpack.c.bf16 %v862, %v858
    %v1051 = vpack.c.bf16 %v864, %v860
    %v1052 = vpack.c.bf16 %v872, %v868
    %v1053 = vpack.c.bf16 %v874, %v870
    %v1086 = vunpack.c.l.b16 %v1006
    %v1087 = vunpack.c.h.b16 %v1006
    %v1088 = vunpack.c.l.b16 %v1007
    %v1089 = vunpack.c.h.b16 %v1007
    %v1090 = vunpack.c.l.b16 %v1008
    %v1091 = vunpack.c.h.b16 %v1008
    %v1092 = vunpack.c.l.b16 %v1009
    %v1093 = vunpack.c.h.b16 %v1009
    %v1094 = vunpack.c.l.b16 %v1010
    %v1095 = vunpack.c.h.b16 %v1010
    %v1096 = vunpack.c.l.b16 %v1011
    %v1097 = vunpack.c.h.b16 %v1011
    %v1098 = vunpack.c.l.b16 %v1012
    %v1099 = vunpack.c.h.b16 %v1012
    %v1100 = vunpack.c.l.b16 %v1013
    %v1101 = vunpack.c.h.b16 %v1013
    %v1102 = vunpack.c.l.b16 %v1014
    %v1103 = vunpack.c.h.b16 %v1014
    %v1104 = vunpack.c.l.b16 %v1015
    %v1105 = vunpack.c.h.b16 %v1015
    %v1106 = vunpack.c.l.b16 %v1016
    %v1107 = vunpack.c.h.b16 %v1016
    %v1108 = vunpack.c.l.b16 %v1017
    %v1109 = vunpack.c.h.b16 %v1017
    %v1110 = vunpack.c.l.b16 %v1018
    %v1111 = vunpack.c.h.b16 %v1018
    %v1112 = vunpack.c.l.b16 %v1019
    %v1113 = vunpack.c.h.b16 %v1019
    %v1114 = vunpack.c.l.b16 %v1020
    %v1115 = vunpack.c.h.b16 %v1020
    %v1116 = vunpack.c.l.b16 %v1021
    %v1117 = vunpack.c.h.b16 %v1021
    %v1118 = vunpack.c.l.b16 %v1022
    %v1119 = vunpack.c.h.b16 %v1022
    %v1120 = vunpack.c.l.b16 %v1023
    %v1121 = vunpack.c.h.b16 %v1023
    %v1122 = vunpack.c.l.b16 %v1024
    %v1123 = vunpack.c.h.b16 %v1024
    %v1124 = vunpack.c.l.b16 %v1025
    %v1125 = vunpack.c.h.b16 %v1025
    %v1126 = vunpack.c.l.b16 %v1026
    %v1127 = vunpack.c.h.b16 %v1026
    %v1128 = vunpack.c.l.b16 %v1027
    %v1129 = vunpack.c.h.b16 %v1027
    %v1130 = vunpack.c.l.b16 %v1028
    %v1131 = vunpack.c.h.b16 %v1028
    %v1132 = vunpack.c.l.b16 %v1029
    %v1133 = vunpack.c.h.b16 %v1029
    %v1134 = vunpack.c.l.b16 %v1030
    %v1135 = vunpack.c.h.b16 %v1030
    %v1136 = vunpack.c.l.b16 %v1031
    %v1137 = vunpack.c.h.b16 %v1031
    %v1138 = vunpack.c.l.b16 %v1032
    %v1139 = vunpack.c.h.b16 %v1032
    %v1140 = vunpack.c.l.b16 %v1033
    %v1141 = vunpack.c.h.b16 %v1033
    %v1142 = vunpack.c.l.b16 %v1034
    %v1143 = vunpack.c.h.b16 %v1034
    %v1144 = vunpack.c.l.b16 %v1035
    %v1145 = vunpack.c.h.b16 %v1035
    %v1146 = vunpack.c.l.b16 %v1036
    %v1147 = vunpack.c.h.b16 %v1036
    %v1148 = vunpack.c.l.b16 %v1037
    %v1149 = vunpack.c.h.b16 %v1037
    %v1150 = vpack.c.b16 %v1088, %v1086
    %v1151 = vpack.c.b16 %v1089, %v1087
    %v1152 = vpack.c.b16 %v1092, %v1090
    %v1153 = vpack.c.b16 %v1093, %v1091
    %v1154 = vpack.c.b16 %v1096, %v1094
    %v1155 = vpack.c.b16 %v1097, %v1095
    %v1156 = vpack.c.b16 %v1100, %v1098
    %v1157 = vpack.c.b16 %v1101, %v1099
    %v1158 = vpack.c.b16 %v1104, %v1102
    %v1159 = vpack.c.b16 %v1105, %v1103
    %v1160 = vpack.c.b16 %v1108, %v1106
    %v1161 = vpack.c.b16 %v1109, %v1107
    %v1162 = vpack.c.b16 %v1112, %v1110
    %v1163 = vpack.c.b16 %v1113, %v1111
    %v1164 = vpack.c.b16 %v1116, %v1114
    %v1165 = vpack.c.b16 %v1117, %v1115
    %v1166 = vpack.c.b16 %v1120, %v1118
    %v1167 = vpack.c.b16 %v1121, %v1119
    %v1168 = vpack.c.b16 %v1124, %v1122
    %v1169 = vpack.c.b16 %v1125, %v1123
    %v1170 = vpack.c.b16 %v1128, %v1126
    %v1171 = vpack.c.b16 %v1129, %v1127
    %v1172 = vpack.c.b16 %v1132, %v1130
    %v1173 = vpack.c.b16 %v1133, %v1131
    %v1174 = vpack.c.b16 %v1136, %v1134
    %v1175 = vpack.c.b16 %v1137, %v1135
    %v1176 = vpack.c.b16 %v1140, %v1138
    %v1177 = vpack.c.b16 %v1141, %v1139
    %v1178 = vpack.c.b16 %v1144, %v1142
    %v1179 = vpack.c.b16 %v1145, %v1143
    %v1180 = vpack.c.b16 %v1148, %v1146
    %v1181 = vpack.c.b16 %v1149, %v1147
    %1214 = vmatprep.subr.bf16.mxu0 %v1151
    %1215 = vmatpush1.bf16.msra.mxu0 %v1150
    %1216 = vmatprep.subr.bf16.mxu0 %v1153
    %1217 = vmatpush1.bf16.msra.mxu0 %v1152
    %1218 = vmatprep.subr.bf16.mxu0 %v1155
    %1219 = vmatpush1.bf16.msra.mxu0 %v1154
    %1220 = vmatprep.subr.bf16.mxu0 %v1157
    %1221 = vmatpush1.bf16.msra.mxu0 %v1156
    %1222 = vmatprep.subr.bf16.mxu0 %v1159
    %1223 = vmatpush1.bf16.msra.mxu0 %v1158
    %1224 = vmatprep.subr.bf16.mxu0 %v1161
    %1225 = vmatpush1.bf16.msra.mxu0 %v1160
    %1226 = vmatprep.subr.bf16.mxu0 %v1163
    %1227 = vmatpush1.bf16.msra.mxu0 %v1162
    %1228 = vmatprep.subr.bf16.mxu0 %v1165
    %1229 = vmatpush1.bf16.msra.mxu0 %v1164
    %1230 = vmatprep.subr.bf16.mxu0 %v1167
    %1231 = vmatpush1.bf16.msra.mxu0 %v1166
    %1232 = vmatprep.subr.bf16.mxu0 %v1169
    %1233 = vmatpush1.bf16.msra.mxu0 %v1168
    %1234 = vmatprep.subr.bf16.mxu0 %v1171
    %1235 = vmatpush1.bf16.msra.mxu0 %v1170
    %1236 = vmatprep.subr.bf16.mxu0 %v1173
    %1237 = vmatpush1.bf16.msra.mxu0 %v1172
    %1238 = vmatprep.subr.bf16.mxu0 %v1175
    %1239 = vmatpush1.bf16.msra.mxu0 %v1174
    %1240 = vmatprep.subr.bf16.mxu0 %v1177
    %1241 = vmatpush1.bf16.msra.mxu0 %v1176
    %1242 = vmatprep.subr.bf16.mxu0 %v1179
    %1243 = vmatpush1.bf16.msra.mxu0 %v1178
    %1244 = vmatprep.subr.bf16.mxu0 %v1181
    %1245 = vmatpush1.bf16.msra.mxu0 %v1180
    %1246 = vmatprep.mubr.bf16.mxu0 %v1039
    %1247 = vmatmul.mubr.bf16.gmra.mrb[0].mxu0 %v1038
    %v1248 = vpop.f32.mrb[0].mxu0
    %v1249 = vadd.f32 0.0, %v1248
    %v1250 = vpop.f32.mrb[0].mxu0
    %v1251 = vadd.f32 0.0, %v1250
    %v1252 = vpop.f32.mrb[0].mxu0
    %v1253 = vadd.f32 0.0, %v1252
    %v1254 = vpop.f32.mrb[0].mxu0
    %v1255 = vadd.f32 0.0, %v1254
    %1256 = vmatprep.mubr.bf16.mxu0 %v1041
    %1257 = vmatmul.mubr.bf16.gmra.mrb[0].mxu0 %v1040
    %v1258 = vpop.f32.mrb[0].mxu0
    %v1259 = vadd.f32 0.0, %v1258
    %v1260 = vpop.f32.mrb[0].mxu0
    %v1261 = vadd.f32 0.0, %v1260
    %v1262 = vpop.f32.mrb[0].mxu0
    %v1263 = vadd.f32 0.0, %v1262
    %v1264 = vpop.f32.mrb[0].mxu0
    %v1265 = vadd.f32 0.0, %v1264
    %1266 = vmatprep.mubr.bf16.mxu0 %v1043
    %1267 = vmatmul.mubr.bf16.gmra.mrb[0].mxu0 %v1042
    %v1268 = vpop.f32.mrb[0].mxu0
    %v1269 = vadd.f32 0.0, %v1268
    %v1270 = vpop.f32.mrb[0].mxu0
    %v1271 = vadd.f32 0.0, %v1270
    %v1272 = vpop.f32.mrb[0].mxu0
    %v1273 = vadd.f32 0.0, %v1272
    %v1274 = vpop.f32.mrb[0].mxu0
    %v1275 = vadd.f32 0.0, %v1274
    %1276 = vmatprep.mubr.bf16.mxu0 %v1045
    %1277 = vmatmul.mubr.bf16.gmra.mrb[0].mxu0 %v1044
    %v1278 = vpop.f32.mrb[0].mxu0
    %v1279 = vadd.f32 0.0, %v1278
    %v1280 = vpop.f32.mrb[0].mxu0
    %v1281 = vadd.f32 0.0, %v1280
    %v1282 = vpop.f32.mrb[0].mxu0
    %v1283 = vadd.f32 0.0, %v1282
    %v1284 = vpop.f32.mrb[0].mxu0
    %v1285 = vadd.f32 0.0, %v1284
    %1286 = vmatprep.mubr.bf16.mxu0 %v1047
    %1287 = vmatmul.mubr.bf16.gmra.mrb[0].mxu0 %v1046
    %v1288 = vpop.f32.mrb[0].mxu0
    %v1289 = vadd.f32 0.0, %v1288
    %v1290 = vpop.f32.mrb[0].mxu0
    %v1291 = vadd.f32 0.0, %v1290
    %v1292 = vpop.f32.mrb[0].mxu0
    %v1293 = vadd.f32 0.0, %v1292
    %v1294 = vpop.f32.mrb[0].mxu0
    %v1295 = vadd.f32 0.0, %v1294
    %1296 = vmatprep.mubr.bf16.mxu0 %v1049
    %1297 = vmatmul.mubr.bf16.gmra.mrb[0].mxu0 %v1048
    %v1298 = vpop.f32.mrb[0].mxu0
    %v1299 = vadd.f32 0.0, %v1298
    %v1300 = vpop.f32.mrb[0].mxu0
    %v1301 = vadd.f32 0.0, %v1300
    %v1302 = vpop.f32.mrb[0].mxu0
    %v1303 = vadd.f32 0.0, %v1302
    %v1304 = vpop.f32.mrb[0].mxu0
    %v1305 = vadd.f32 0.0, %v1304
    %1306 = vmatprep.mubr.bf16.mxu0 %v1051
    %1307 = vmatmul.mubr.bf16.gmra.mrb[0].mxu0 %v1050
    %v1308 = vpop.f32.mrb[0].mxu0
    %v1309 = vadd.f32 0.0, %v1308
    %v1310 = vpop.f32.mrb[0].mxu0
    %v1311 = vadd.f32 0.0, %v1310
    %v1312 = vpop.f32.mrb[0].mxu0
    %v1313 = vadd.f32 0.0, %v1312
    %v1314 = vpop.f32.mrb[0].mxu0
    %v1315 = vadd.f32 0.0, %v1314
    %1316 = vmatprep.mubr.bf16.mxu0 %v1053
    %1317 = vmatmul.mubr.bf16.gmra.mrb[0].mxu0 %v1052
    %v1318 = vpop.f32.mrb[0].mxu0
    %v1319 = vadd.f32 0.0, %v1318
    %v1320 = vpop.f32.mrb[0].mxu0
    %v1321 = vadd.f32 0.0, %v1320
    %v1322 = vpop.f32.mrb[0].mxu0
    %v1323 = vadd.f32 0.0, %v1322
    %v1324 = vpop.f32.mrb[0].mxu0
    %v1325 = vadd.f32 0.0, %v1324
    %1326 = vdwg.mxu0
    %v1327 = vpack.c.bf16 %v931, %v927
    %v1328 = vpack.c.bf16 %v933, %v929
    %v1329 = vpack.c.bf16 %v941, %v937
    %v1330 = vpack.c.bf16 %v943, %v939
    %v1331 = vpack.c.bf16 %v951, %v947
    %v1332 = vpack.c.bf16 %v953, %v949
    %v1333 = vpack.c.bf16 %v961, %v957
    %v1334 = vpack.c.bf16 %v963, %v959
    %v1335 = vpack.c.bf16 %v971, %v967
    %v1336 = vpack.c.bf16 %v973, %v969
    %v1337 = vpack.c.bf16 %v981, %v977
    %v1338 = vpack.c.bf16 %v983, %v979
    %v1339 = vpack.c.bf16 %v991, %v987
    %v1340 = vpack.c.bf16 %v993, %v989
    %v1341 = vpack.c.bf16 %v1001, %v997
    %v1342 = vpack.c.bf16 %v1003, %v999
    %1343 = vmatprep.subr.bf16.mxu0 %v1151
    %1344 = vmatpush1.bf16.msra.mxu0 %v1150
    %1345 = vmatprep.subr.bf16.mxu0 %v1153
    %1346 = vmatpush1.bf16.msra.mxu0 %v1152
    %1347 = vmatprep.subr.bf16.mxu0 %v1155
    %1348 = vmatpush1.bf16.msra.mxu0 %v1154
    %1349 = vmatprep.subr.bf16.mxu0 %v1157
    %1350 = vmatpush1.bf16.msra.mxu0 %v1156
    %1351 = vmatprep.subr.bf16.mxu0 %v1159
    %1352 = vmatpush1.bf16.msra.mxu0 %v1158
    %1353 = vmatprep.subr.bf16.mxu0 %v1161
    %1354 = vmatpush1.bf16.msra.mxu0 %v1160
    %1355 = vmatprep.subr.bf16.mxu0 %v1163
    %1356 = vmatpush1.bf16.msra.mxu0 %v1162
    %1357 = vmatprep.subr.bf16.mxu0 %v1165
    %1358 = vmatpush1.bf16.msra.mxu0 %v1164
    %1359 = vmatprep.subr.bf16.mxu0 %v1167
    %1360 = vmatpush1.bf16.msra.mxu0 %v1166
    %1361 = vmatprep.subr.bf16.mxu0 %v1169
    %1362 = vmatpush1.bf16.msra.mxu0 %v1168
    %1363 = vmatprep.subr.bf16.mxu0 %v1171
    %1364 = vmatpush1.bf16.msra.mxu0 %v1170
    %1365 = vmatprep.subr.bf16.mxu0 %v1173
    %1366 = vmatpush1.bf16.msra.mxu0 %v1172
    %1367 = vmatprep.subr.bf16.mxu0 %v1175
    %1368 = vmatpush1.bf16.msra.mxu0 %v1174
    %1369 = vmatprep.subr.bf16.mxu0 %v1177
    %1370 = vmatpush1.bf16.msra.mxu0 %v1176
    %1371 = vmatprep.subr.bf16.mxu0 %v1179
    %1372 = vmatpush1.bf16.msra.mxu0 %v1178
    %1373 = vmatprep.subr.bf16.mxu0 %v1181
    %1374 = vmatpush1.bf16.msra.mxu0 %v1180
    %1375 = vmatprep.mubr.bf16.mxu0 %v1328
    %1376 = vmatmul.mubr.bf16.gmra.mrb[0].mxu0 %v1327
    %v1377 = vpop.f32.mrb[0].mxu0
    %v1378 = vadd.f32 0.0, %v1377
    %v1379 = vpop.f32.mrb[0].mxu0
    %v1380 = vadd.f32 0.0, %v1379
    %v1381 = vpop.f32.mrb[0].mxu0
    %v1382 = vadd.f32 0.0, %v1381
    %v1383 = vpop.f32.mrb[0].mxu0
    %v1384 = vadd.f32 0.0, %v1383
    %1385 = vmatprep.mubr.bf16.mxu0 %v1330
    %1386 = vmatmul.mubr.bf16.gmra.mrb[0].mxu0 %v1329
    %v1387 = vpop.f32.mrb[0].mxu0
    %v1388 = vadd.f32 0.0, %v1387
    %v1389 = vpop.f32.mrb[0].mxu0
    %v1390 = vadd.f32 0.0, %v1389
    %v1391 = vpop.f32.mrb[0].mxu0
    %v1392 = vadd.f32 0.0, %v1391
    %v1393 = vpop.f32.mrb[0].mxu0
    %v1394 = vadd.f32 0.0, %v1393
    %1395 = vmatprep.mubr.bf16.mxu0 %v1332
    %1396 = vmatmul.mubr.bf16.gmra.mrb[0].mxu0 %v1331
    %v1397 = vpop.f32.mrb[0].mxu0
    %v1398 = vadd.f32 0.0, %v1397
    %v1399 = vpop.f32.mrb[0].mxu0
    %v1400 = vadd.f32 0.0, %v1399
    %v1401 = vpop.f32.mrb[0].mxu0
    %v1402 = vadd.f32 0.0, %v1401
    %v1403 = vpop.f32.mrb[0].mxu0
    %v1404 = vadd.f32 0.0, %v1403
    %1405 = vmatprep.mubr.bf16.mxu0 %v1334
    %1406 = vmatmul.mubr.bf16.gmra.mrb[0].mxu0 %v1333
    %v1407 = vpop.f32.mrb[0].mxu0
    %v1408 = vadd.f32 0.0, %v1407
    %v1409 = vpop.f32.mrb[0].mxu0
    %v1410 = vadd.f32 0.0, %v1409
    %v1411 = vpop.f32.mrb[0].mxu0
    %v1412 = vadd.f32 0.0, %v1411
    %v1413 = vpop.f32.mrb[0].mxu0
    %v1414 = vadd.f32 0.0, %v1413
    %1415 = vmatprep.mubr.bf16.mxu0 %v1336
    %1416 = vmatmul.mubr.bf16.gmra.mrb[0].mxu0 %v1335
    %v1417 = vpop.f32.mrb[0].mxu0
    %v1418 = vadd.f32 0.0, %v1417
    %v1419 = vpop.f32.mrb[0].mxu0
    %v1420 = vadd.f32 0.0, %v1419
    %v1421 = vpop.f32.mrb[0].mxu0
    %v1422 = vadd.f32 0.0, %v1421
    %v1423 = vpop.f32.mrb[0].mxu0
    %v1424 = vadd.f32 0.0, %v1423
    %1425 = vmatprep.mubr.bf16.mxu0 %v1338
    %1426 = vmatmul.mubr.bf16.gmra.mrb[0].mxu0 %v1337
    %v1427 = vpop.f32.mrb[0].mxu0
    %v1428 = vadd.f32 0.0, %v1427
    %v1429 = vpop.f32.mrb[0].mxu0
    %v1430 = vadd.f32 0.0, %v1429
    %v1431 = vpop.f32.mrb[0].mxu0
    %v1432 = vadd.f32 0.0, %v1431
    %v1433 = vpop.f32.mrb[0].mxu0
    %v1434 = vadd.f32 0.0, %v1433
    %1435 = vmatprep.mubr.bf16.mxu0 %v1340
    %1436 = vmatmul.mubr.bf16.gmra.mrb[0].mxu0 %v1339
    %v1437 = vpop.f32.mrb[0].mxu0
    %v1438 = vadd.f32 0.0, %v1437
    %v1439 = vpop.f32.mrb[0].mxu0
    %v1440 = vadd.f32 0.0, %v1439
    %v1441 = vpop.f32.mrb[0].mxu0
    %v1442 = vadd.f32 0.0, %v1441
    %v1443 = vpop.f32.mrb[0].mxu0
    %v1444 = vadd.f32 0.0, %v1443
    %1445 = vmatprep.mubr.bf16.mxu0 %v1342
    %1446 = vmatmul.mubr.bf16.gmra.mrb[0].mxu0 %v1341
    %v1447 = vpop.f32.mrb[0].mxu0
    %v1448 = vadd.f32 0.0, %v1447
    %v1449 = vpop.f32.mrb[0].mxu0
    %v1450 = vadd.f32 0.0, %v1449
    %v1451 = vpop.f32.mrb[0].mxu0
    %v1452 = vadd.f32 0.0, %v1451
    %v1453 = vpop.f32.mrb[0].mxu0
    %v1454 = vadd.f32 0.0, %v1453
    %1455 = vdwg.mxu0
    %s1456 = scalar_lea.vmem [#allocation5], 768
    %v1457 = vld [vmem:[%s1456] sm:$0xff]
    %v1458 = vld [vmem:[%s1456 + $0x8] sm:$0xff]
    %v1459 = vld [vmem:[%s1456 + $0x10] sm:$0xff]
    %v1460 = vld [vmem:[%s1456 + $0x18] sm:$0xff]
    %v1461 = vld [vmem:[%s1456 + $0x20] sm:$0xff]
    %v1462 = vld [vmem:[%s1456 + $0x28] sm:$0xff]
    %v1463 = vld [vmem:[%s1456 + $0x30] sm:$0xff]
    %v1464 = vld [vmem:[%s1456 + $0x38] sm:$0xff]
    %v1465 = vld [vmem:[%s1456 + $0x40] sm:$0xff]
    %v1466 = vld [vmem:[%s1456 + $0x48] sm:$0xff]
    %v1467 = vld [vmem:[%s1456 + $0x50] sm:$0xff]
    %v1468 = vld [vmem:[%s1456 + $0x58] sm:$0xff]
    %v1469 = vld [vmem:[%s1456 + $0x60] sm:$0xff]
    %v1470 = vld [vmem:[%s1456 + $0x68] sm:$0xff]
    %v1471 = vld [vmem:[%s1456 + $0x70] sm:$0xff]
    %v1472 = vld [vmem:[%s1456 + $0x78] sm:$0xff]
    %v1473 = vld [vmem:[%s1456 + $0x80] sm:$0xff]
    %v1474 = vld [vmem:[%s1456 + $0x88] sm:$0xff]
    %v1475 = vld [vmem:[%s1456 + $0x90] sm:$0xff]
    %v1476 = vld [vmem:[%s1456 + $0x98] sm:$0xff]
    %v1477 = vld [vmem:[%s1456 + $0xa0] sm:$0xff]
    %v1478 = vld [vmem:[%s1456 + $0xa8] sm:$0xff]
    %v1479 = vld [vmem:[%s1456 + $0xb0] sm:$0xff]
    %v1480 = vld [vmem:[%s1456 + $0xb8] sm:$0xff]
    %v1481 = vld [vmem:[%s1456 + $0xc0] sm:$0xff]
    %v1482 = vld [vmem:[%s1456 + $0xc8] sm:$0xff]
    %v1483 = vld [vmem:[%s1456 + $0xd0] sm:$0xff]
    %v1484 = vld [vmem:[%s1456 + $0xd8] sm:$0xff]
    %v1485 = vld [vmem:[%s1456 + $0xe0] sm:$0xff]
    %v1486 = vld [vmem:[%s1456 + $0xe8] sm:$0xff]
    %v1487 = vld [vmem:[%s1456 + $0xf0] sm:$0xff]
    %v1488 = vld [vmem:[%s1456 + $0xf8] sm:$0xff]
    %v1489 = vpack.c.bf16 %v1253, %v1249
    %v1490 = vpack.c.bf16 %v1255, %v1251
    %v1491 = vpack.c.bf16 %v1263, %v1259
    %v1492 = vpack.c.bf16 %v1265, %v1261
    %v1493 = vpack.c.bf16 %v1273, %v1269
    %v1494 = vpack.c.bf16 %v1275, %v1271
    %v1495 = vpack.c.bf16 %v1283, %v1279
    %v1496 = vpack.c.bf16 %v1285, %v1281
    %v1497 = vpack.c.bf16 %v1293, %v1289
    %v1498 = vpack.c.bf16 %v1295, %v1291
    %v1499 = vpack.c.bf16 %v1303, %v1299
    %v1500 = vpack.c.bf16 %v1305, %v1301
    %v1501 = vpack.c.bf16 %v1313, %v1309
    %v1502 = vpack.c.bf16 %v1315, %v1311
    %v1503 = vpack.c.bf16 %v1323, %v1319
    %v1504 = vpack.c.bf16 %v1325, %v1321
    %v1537 = vunpack.c.l.b16 %v1457
    %v1538 = vunpack.c.h.b16 %v1457
    %v1539 = vunpack.c.l.b16 %v1458
    %v1540 = vunpack.c.h.b16 %v1458
    %v1541 = vunpack.c.l.b16 %v1459
    %v1542 = vunpack.c.h.b16 %v1459
    %v1543 = vunpack.c.l.b16 %v1460
    %v1544 = vunpack.c.h.b16 %v1460
    %v1545 = vunpack.c.l.b16 %v1461
    %v1546 = vunpack.c.h.b16 %v1461
    %v1547 = vunpack.c.l.b16 %v1462
    %v1548 = vunpack.c.h.b16 %v1462
    %v1549 = vunpack.c.l.b16 %v1463
    %v1550 = vunpack.c.h.b16 %v1463
    %v1551 = vunpack.c.l.b16 %v1464
    %v1552 = vunpack.c.h.b16 %v1464
    %v1553 = vunpack.c.l.b16 %v1465
    %v1554 = vunpack.c.h.b16 %v1465
    %v1555 = vunpack.c.l.b16 %v1466
    %v1556 = vunpack.c.h.b16 %v1466
    %v1557 = vunpack.c.l.b16 %v1467
    %v1558 = vunpack.c.h.b16 %v1467
    %v1559 = vunpack.c.l.b16 %v1468
    %v1560 = vunpack.c.h.b16 %v1468
    %v1561 = vunpack.c.l.b16 %v1469
    %v1562 = vunpack.c.h.b16 %v1469
    %v1563 = vunpack.c.l.b16 %v1470
    %v1564 = vunpack.c.h.b16 %v1470
    %v1565 = vunpack.c.l.b16 %v1471
    %v1566 = vunpack.c.h.b16 %v1471
    %v1567 = vunpack.c.l.b16 %v1472
    %v1568 = vunpack.c.h.b16 %v1472
    %v1569 = vunpack.c.l.b16 %v1473
    %v1570 = vunpack.c.h.b16 %v1473
    %v1571 = vunpack.c.l.b16 %v1474
    %v1572 = vunpack.c.h.b16 %v1474
    %v1573 = vunpack.c.l.b16 %v1475
    %v1574 = vunpack.c.h.b16 %v1475
    %v1575 = vunpack.c.l.b16 %v1476
    %v1576 = vunpack.c.h.b16 %v1476
    %v1577 = vunpack.c.l.b16 %v1477
    %v1578 = vunpack.c.h.b16 %v1477
    %v1579 = vunpack.c.l.b16 %v1478
    %v1580 = vunpack.c.h.b16 %v1478
    %v1581 = vunpack.c.l.b16 %v1479
    %v1582 = vunpack.c.h.b16 %v1479
    %v1583 = vunpack.c.l.b16 %v1480
    %v1584 = vunpack.c.h.b16 %v1480
    %v1585 = vunpack.c.l.b16 %v1481
    %v1586 = vunpack.c.h.b16 %v1481
    %v1587 = vunpack.c.l.b16 %v1482
    %v1588 = vunpack.c.h.b16 %v1482
    %v1589 = vunpack.c.l.b16 %v1483
    %v1590 = vunpack.c.h.b16 %v1483
    %v1591 = vunpack.c.l.b16 %v1484
    %v1592 = vunpack.c.h.b16 %v1484
    %v1593 = vunpack.c.l.b16 %v1485
    %v1594 = vunpack.c.h.b16 %v1485
    %v1595 = vunpack.c.l.b16 %v1486
    %v1596 = vunpack.c.h.b16 %v1486
    %v1597 = vunpack.c.l.b16 %v1487
    %v1598 = vunpack.c.h.b16 %v1487
    %v1599 = vunpack.c.l.b16 %v1488
    %v1600 = vunpack.c.h.b16 %v1488
    %v1601 = vpack.c.b16 %v1539, %v1537
    %v1602 = vpack.c.b16 %v1540, %v1538
    %v1603 = vpack.c.b16 %v1543, %v1541
    %v1604 = vpack.c.b16 %v1544, %v1542
    %v1605 = vpack.c.b16 %v1547, %v1545
    %v1606 = vpack.c.b16 %v1548, %v1546
    %v1607 = vpack.c.b16 %v1551, %v1549
    %v1608 = vpack.c.b16 %v1552, %v1550
    %v1609 = vpack.c.b16 %v1555, %v1553
    %v1610 = vpack.c.b16 %v1556, %v1554
    %v1611 = vpack.c.b16 %v1559, %v1557
    %v1612 = vpack.c.b16 %v1560, %v1558
    %v1613 = vpack.c.b16 %v1563, %v1561
    %v1614 = vpack.c.b16 %v1564, %v1562
    %v1615 = vpack.c.b16 %v1567, %v1565
    %v1616 = vpack.c.b16 %v1568, %v1566
    %v1617 = vpack.c.b16 %v1571, %v1569
    %v1618 = vpack.c.b16 %v1572, %v1570
    %v1619 = vpack.c.b16 %v1575, %v1573
    %v1620 = vpack.c.b16 %v1576, %v1574
    %v1621 = vpack.c.b16 %v1579, %v1577
    %v1622 = vpack.c.b16 %v1580, %v1578
    %v1623 = vpack.c.b16 %v1583, %v1581
    %v1624 = vpack.c.b16 %v1584, %v1582
    %v1625 = vpack.c.b16 %v1587, %v1585
    %v1626 = vpack.c.b16 %v1588, %v1586
    %v1627 = vpack.c.b16 %v1591, %v1589
    %v1628 = vpack.c.b16 %v1592, %v1590
    %v1629 = vpack.c.b16 %v1595, %v1593
    %v1630 = vpack.c.b16 %v1596, %v1594
    %v1631 = vpack.c.b16 %v1599, %v1597
    %v1632 = vpack.c.b16 %v1600, %v1598
    %1665 = vmatprep.subr.bf16.mxu0 %v1602
    %1666 = vmatpush1.bf16.msra.mxu0 %v1601
    %1667 = vmatprep.subr.bf16.mxu0 %v1604
    %1668 = vmatpush1.bf16.msra.mxu0 %v1603
    %1669 = vmatprep.subr.bf16.mxu0 %v1606
    %1670 = vmatpush1.bf16.msra.mxu0 %v1605
    %1671 = vmatprep.subr.bf16.mxu0 %v1608
    %1672 = vmatpush1.bf16.msra.mxu0 %v1607
    %1673 = vmatprep.subr.bf16.mxu0 %v1610
    %1674 = vmatpush1.bf16.msra.mxu0 %v1609
    %1675 = vmatprep.subr.bf16.mxu0 %v1612
    %1676 = vmatpush1.bf16.msra.mxu0 %v1611
    %1677 = vmatprep.subr.bf16.mxu0 %v1614
    %1678 = vmatpush1.bf16.msra.mxu0 %v1613
    %1679 = vmatprep.subr.bf16.mxu0 %v1616
    %1680 = vmatpush1.bf16.msra.mxu0 %v1615
    %1681 = vmatprep.subr.bf16.mxu0 %v1618
    %1682 = vmatpush1.bf16.msra.mxu0 %v1617
    %1683 = vmatprep.subr.bf16.mxu0 %v1620
    %1684 = vmatpush1.bf16.msra.mxu0 %v1619
    %1685 = vmatprep.subr.bf16.mxu0 %v1622
    %1686 = vmatpush1.bf16.msra.mxu0 %v1621
    %1687 = vmatprep.subr.bf16.mxu0 %v1624
    %1688 = vmatpush1.bf16.msra.mxu0 %v1623
    %1689 = vmatprep.subr.bf16.mxu0 %v1626
    %1690 = vmatpush1.bf16.msra.mxu0 %v1625
    %1691 = vmatprep.subr.bf16.mxu0 %v1628
    %1692 = vmatpush1.bf16.msra.mxu0 %v1627
    %1693 = vmatprep.subr.bf16.mxu0 %v1630
    %1694 = vmatpush1.bf16.msra.mxu0 %v1629
    %1695 = vmatprep.subr.bf16.mxu0 %v1632
    %1696 = vmatpush1.bf16.msra.mxu0 %v1631
    %1697 = vmatprep.mubr.bf16.mxu0 %v1490
    %1698 = vmatmul.mubr.bf16.gmra.mrb[0].mxu0 %v1489
    %v1699 = vpop.f32.mrb[0].mxu0
    %v1700 = vadd.f32 0.0, %v1699
    %v1701 = vpop.f32.mrb[0].mxu0
    %v1702 = vadd.f32 0.0, %v1701
    %v1703 = vpop.f32.mrb[0].mxu0
    %v1704 = vadd.f32 0.0, %v1703
    %v1705 = vpop.f32.mrb[0].mxu0
    %v1706 = vadd.f32 0.0, %v1705
    %1707 = vmatprep.mubr.bf16.mxu0 %v1492
    %1708 = vmatmul.mubr.bf16.gmra.mrb[0].mxu0 %v1491
    %v1709 = vpop.f32.mrb[0].mxu0
    %v1710 = vadd.f32 0.0, %v1709
    %v1711 = vpop.f32.mrb[0].mxu0
    %v1712 = vadd.f32 0.0, %v1711
    %v1713 = vpop.f32.mrb[0].mxu0
    %v1714 = vadd.f32 0.0, %v1713
    %v1715 = vpop.f32.mrb[0].mxu0
    %v1716 = vadd.f32 0.0, %v1715
    %1717 = vmatprep.mubr.bf16.mxu0 %v1494
    %1718 = vmatmul.mubr.bf16.gmra.mrb[0].mxu0 %v1493
    %v1719 = vpop.f32.mrb[0].mxu0
    %v1720 = vadd.f32 0.0, %v1719
    %v1721 = vpop.f32.mrb[0].mxu0
    %v1722 = vadd.f32 0.0, %v1721
    %v1723 = vpop.f32.mrb[0].mxu0
    %v1724 = vadd.f32 0.0, %v1723
    %v1725 = vpop.f32.mrb[0].mxu0
    %v1726 = vadd.f32 0.0, %v1725
    %1727 = vmatprep.mubr.bf16.mxu0 %v1496
    %1728 = vmatmul.mubr.bf16.gmra.mrb[0].mxu0 %v1495
    %v1729 = vpop.f32.mrb[0].mxu0
    %v1730 = vadd.f32 0.0, %v1729
    %v1731 = vpop.f32.mrb[0].mxu0
    %v1732 = vadd.f32 0.0, %v1731
    %v1733 = vpop.f32.mrb[0].mxu0
    %v1734 = vadd.f32 0.0, %v1733
    %v1735 = vpop.f32.mrb[0].mxu0
    %v1736 = vadd.f32 0.0, %v1735
    %1737 = vmatprep.mubr.bf16.mxu0 %v1498
    %1738 = vmatmul.mubr.bf16.gmra.mrb[0].mxu0 %v1497
    %v1739 = vpop.f32.mrb[0].mxu0
    %v1740 = vadd.f32 0.0, %v1739
    %v1741 = vpop.f32.mrb[0].mxu0
    %v1742 = vadd.f32 0.0, %v1741
    %v1743 = vpop.f32.mrb[0].mxu0
    %v1744 = vadd.f32 0.0, %v1743
    %v1745 = vpop.f32.mrb[0].mxu0
    %v1746 = vadd.f32 0.0, %v1745
    %1747 = vmatprep.mubr.bf16.mxu0 %v1500
    %1748 = vmatmul.mubr.bf16.gmra.mrb[0].mxu0 %v1499
    %v1749 = vpop.f32.mrb[0].mxu0
    %v1750 = vadd.f32 0.0, %v1749
    %v1751 = vpop.f32.mrb[0].mxu0
    %v1752 = vadd.f32 0.0, %v1751
    %v1753 = vpop.f32.mrb[0].mxu0
    %v1754 = vadd.f32 0.0, %v1753
    %v1755 = vpop.f32.mrb[0].mxu0
    %v1756 = vadd.f32 0.0, %v1755
    %1757 = vmatprep.mubr.bf16.mxu0 %v1502
    %1758 = vmatmul.mubr.bf16.gmra.mrb[0].mxu0 %v1501
    %v1759 = vpop.f32.mrb[0].mxu0
    %v1760 = vadd.f32 0.0, %v1759
    %v1761 = vpop.f32.mrb[0].mxu0
    %v1762 = vadd.f32 0.0, %v1761
    %v1763 = vpop.f32.mrb[0].mxu0
    %v1764 = vadd.f32 0.0, %v1763
    %v1765 = vpop.f32.mrb[0].mxu0
    %v1766 = vadd.f32 0.0, %v1765
    %1767 = vmatprep.mubr.bf16.mxu0 %v1504
    %1768 = vmatmul.mubr.bf16.gmra.mrb[0].mxu0 %v1503
    %v1769 = vpop.f32.mrb[0].mxu0
    %v1770 = vadd.f32 0.0, %v1769
    %v1771 = vpop.f32.mrb[0].mxu0
    %v1772 = vadd.f32 0.0, %v1771
    %v1773 = vpop.f32.mrb[0].mxu0
    %v1774 = vadd.f32 0.0, %v1773
    %v1775 = vpop.f32.mrb[0].mxu0
    %v1776 = vadd.f32 0.0, %v1775
    %1777 = vdwg.mxu0
    %v1778 = vpack.c.bf16 %v1382, %v1378
    %v1779 = vpack.c.bf16 %v1384, %v1380
    %v1780 = vpack.c.bf16 %v1392, %v1388
    %v1781 = vpack.c.bf16 %v1394, %v1390
    %v1782 = vpack.c.bf16 %v1402, %v1398
    %v1783 = vpack.c.bf16 %v1404, %v1400
    %v1784 = vpack.c.bf16 %v1412, %v1408
    %v1785 = vpack.c.bf16 %v1414, %v1410
    %v1786 = vpack.c.bf16 %v1422, %v1418
    %v1787 = vpack.c.bf16 %v1424, %v1420
    %v1788 = vpack.c.bf16 %v1432, %v1428
    %v1789 = vpack.c.bf16 %v1434, %v1430
    %v1790 = vpack.c.bf16 %v1442, %v1438
    %v1791 = vpack.c.bf16 %v1444, %v1440
    %v1792 = vpack.c.bf16 %v1452, %v1448
    %v1793 = vpack.c.bf16 %v1454, %v1450
    %1794 = vmatprep.subr.bf16.mxu0 %v1602
    %1795 = vmatpush1.bf16.msra.mxu0 %v1601
    %1796 = vmatprep.subr.bf16.mxu0 %v1604
    %1797 = vmatpush1.bf16.msra.mxu0 %v1603
    %1798 = vmatprep.subr.bf16.mxu0 %v1606
    %1799 = vmatpush1.bf16.msra.mxu0 %v1605
    %1800 = vmatprep.subr.bf16.mxu0 %v1608
    %1801 = vmatpush1.bf16.msra.mxu0 %v1607
    %1802 = vmatprep.subr.bf16.mxu0 %v1610
    %1803 = vmatpush1.bf16.msra.mxu0 %v1609
    %1804 = vmatprep.subr.bf16.mxu0 %v1612
    %1805 = vmatpush1.bf16.msra.mxu0 %v1611
    %1806 = vmatprep.subr.bf16.mxu0 %v1614
    %1807 = vmatpush1.bf16.msra.mxu0 %v1613
    %1808 = vmatprep.subr.bf16.mxu0 %v1616
    %1809 = vmatpush1.bf16.msra.mxu0 %v1615
    %1810 = vmatprep.subr.bf16.mxu0 %v1618
    %1811 = vmatpush1.bf16.msra.mxu0 %v1617
    %1812 = vmatprep.subr.bf16.mxu0 %v1620
    %1813 = vmatpush1.bf16.msra.mxu0 %v1619
    %1814 = vmatprep.subr.bf16.mxu0 %v1622
    %1815 = vmatpush1.bf16.msra.mxu0 %v1621
    %1816 = vmatprep.subr.bf16.mxu0 %v1624
    %1817 = vmatpush1.bf16.msra.mxu0 %v1623
    %1818 = vmatprep.subr.bf16.mxu0 %v1626
    %1819 = vmatpush1.bf16.msra.mxu0 %v1625
    %1820 = vmatprep.subr.bf16.mxu0 %v1628
    %1821 = vmatpush1.bf16.msra.mxu0 %v1627
    %1822 = vmatprep.subr.bf16.mxu0 %v1630
    %1823 = vmatpush1.bf16.msra.mxu0 %v1629
    %1824 = vmatprep.subr.bf16.mxu0 %v1632
    %1825 = vmatpush1.bf16.msra.mxu0 %v1631
    %1826 = vmatprep.mubr.bf16.mxu0 %v1779
    %1827 = vmatmul.mubr.bf16.gmra.mrb[0].mxu0 %v1778
    %v1828 = vpop.f32.mrb[0].mxu0
    %v1829 = vadd.f32 0.0, %v1828
    %v1830 = vpop.f32.mrb[0].mxu0
    %v1831 = vadd.f32 0.0, %v1830
    %v1832 = vpop.f32.mrb[0].mxu0
    %v1833 = vadd.f32 0.0, %v1832
    %v1834 = vpop.f32.mrb[0].mxu0
    %v1835 = vadd.f32 0.0, %v1834
    %1836 = vmatprep.mubr.bf16.mxu0 %v1781
    %1837 = vmatmul.mubr.bf16.gmra.mrb[0].mxu0 %v1780
    %v1838 = vpop.f32.mrb[0].mxu0
    %v1839 = vadd.f32 0.0, %v1838
    %v1840 = vpop.f32.mrb[0].mxu0
    %v1841 = vadd.f32 0.0, %v1840
    %v1842 = vpop.f32.mrb[0].mxu0
    %v1843 = vadd.f32 0.0, %v1842
    %v1844 = vpop.f32.mrb[0].mxu0
    %v1845 = vadd.f32 0.0, %v1844
    %1846 = vmatprep.mubr.bf16.mxu0 %v1783
    %1847 = vmatmul.mubr.bf16.gmra.mrb[0].mxu0 %v1782
    %v1848 = vpop.f32.mrb[0].mxu0
    %v1849 = vadd.f32 0.0, %v1848
    %v1850 = vpop.f32.mrb[0].mxu0
    %v1851 = vadd.f32 0.0, %v1850
    %v1852 = vpop.f32.mrb[0].mxu0
    %v1853 = vadd.f32 0.0, %v1852
    %v1854 = vpop.f32.mrb[0].mxu0
    %v1855 = vadd.f32 0.0, %v1854
    %1856 = vmatprep.mubr.bf16.mxu0 %v1785
    %1857 = vmatmul.mubr.bf16.gmra.mrb[0].mxu0 %v1784
    %v1858 = vpop.f32.mrb[0].mxu0
    %v1859 = vadd.f32 0.0, %v1858
    %v1860 = vpop.f32.mrb[0].mxu0
    %v1861 = vadd.f32 0.0, %v1860
    %v1862 = vpop.f32.mrb[0].mxu0
    %v1863 = vadd.f32 0.0, %v1862
    %v1864 = vpop.f32.mrb[0].mxu0
    %v1865 = vadd.f32 0.0, %v1864
    %1866 = vmatprep.mubr.bf16.mxu0 %v1787
    %1867 = vmatmul.mubr.bf16.gmra.mrb[0].mxu0 %v1786
    %v1868 = vpop.f32.mrb[0].mxu0
    %v1869 = vadd.f32 0.0, %v1868
    %v1870 = vpop.f32.mrb[0].mxu0
    %v1871 = vadd.f32 0.0, %v1870
    %v1872 = vpop.f32.mrb[0].mxu0
    %v1873 = vadd.f32 0.0, %v1872
    %v1874 = vpop.f32.mrb[0].mxu0
    %v1875 = vadd.f32 0.0, %v1874
    %1876 = vmatprep.mubr.bf16.mxu0 %v1789
    %1877 = vmatmul.mubr.bf16.gmra.mrb[0].mxu0 %v1788
    %v1878 = vpop.f32.mrb[0].mxu0
    %v1879 = vadd.f32 0.0, %v1878
    %v1880 = vpop.f32.mrb[0].mxu0
    %v1881 = vadd.f32 0.0, %v1880
    %v1882 = vpop.f32.mrb[0].mxu0
    %v1883 = vadd.f32 0.0, %v1882
    %v1884 = vpop.f32.mrb[0].mxu0
    %v1885 = vadd.f32 0.0, %v1884
    %1886 = vmatprep.mubr.bf16.mxu0 %v1791
    %1887 = vmatmul.mubr.bf16.gmra.mrb[0].mxu0 %v1790
    %v1888 = vpop.f32.mrb[0].mxu0
    %v1889 = vadd.f32 0.0, %v1888
    %v1890 = vpop.f32.mrb[0].mxu0
    %v1891 = vadd.f32 0.0, %v1890
    %v1892 = vpop.f32.mrb[0].mxu0
    %v1893 = vadd.f32 0.0, %v1892
    %v1894 = vpop.f32.mrb[0].mxu0
    %v1895 = vadd.f32 0.0, %v1894
    %1896 = vmatprep.mubr.bf16.mxu0 %v1793
    %1897 = vmatmul.mubr.bf16.gmra.mrb[0].mxu0 %v1792
    %v1898 = vpop.f32.mrb[0].mxu0
    %v1899 = vadd.f32 0.0, %v1898
    %v1900 = vpop.f32.mrb[0].mxu0
    %v1901 = vadd.f32 0.0, %v1900
    %v1902 = vpop.f32.mrb[0].mxu0
    %v1903 = vadd.f32 0.0, %v1902
    %v1904 = vpop.f32.mrb[0].mxu0
    %v1905 = vadd.f32 0.0, %v1904
    %1906 = vdwg.mxu0
    %s1907 = scalar_lea.vmem [#allocation5], 1024
    %v1908 = vld [vmem:[%s1907] sm:$0xff]
    %v1909 = vld [vmem:[%s1907 + $0x8] sm:$0xff]
    %v1910 = vld [vmem:[%s1907 + $0x10] sm:$0xff]
    %v1911 = vld [vmem:[%s1907 + $0x18] sm:$0xff]
    %v1912 = vld [vmem:[%s1907 + $0x20] sm:$0xff]
    %v1913 = vld [vmem:[%s1907 + $0x28] sm:$0xff]
    %v1914 = vld [vmem:[%s1907 + $0x30] sm:$0xff]
    %v1915 = vld [vmem:[%s1907 + $0x38] sm:$0xff]
    %v1916 = vld [vmem:[%s1907 + $0x40] sm:$0xff]
    %v1917 = vld [vmem:[%s1907 + $0x48] sm:$0xff]
    %v1918 = vld [vmem:[%s1907 + $0x50] sm:$0xff]
    %v1919 = vld [vmem:[%s1907 + $0x58] sm:$0xff]
    %v1920 = vld [vmem:[%s1907 + $0x60] sm:$0xff]
    %v1921 = vld [vmem:[%s1907 + $0x68] sm:$0xff]
    %v1922 = vld [vmem:[%s1907 + $0x70] sm:$0xff]
    %v1923 = vld [vmem:[%s1907 + $0x78] sm:$0xff]
    %v1924 = vld [vmem:[%s1907 + $0x80] sm:$0xff]
    %v1925 = vld [vmem:[%s1907 + $0x88] sm:$0xff]
    %v1926 = vld [vmem:[%s1907 + $0x90] sm:$0xff]
    %v1927 = vld [vmem:[%s1907 + $0x98] sm:$0xff]
    %v1928 = vld [vmem:[%s1907 + $0xa0] sm:$0xff]
    %v1929 = vld [vmem:[%s1907 + $0xa8] sm:$0xff]
    %v1930 = vld [vmem:[%s1907 + $0xb0] sm:$0xff]
    %v1931 = vld [vmem:[%s1907 + $0xb8] sm:$0xff]
    %v1932 = vld [vmem:[%s1907 + $0xc0] sm:$0xff]
    %v1933 = vld [vmem:[%s1907 + $0xc8] sm:$0xff]
    %v1934 = vld [vmem:[%s1907 + $0xd0] sm:$0xff]
    %v1935 = vld [vmem:[%s1907 + $0xd8] sm:$0xff]
    %v1936 = vld [vmem:[%s1907 + $0xe0] sm:$0xff]
    %v1937 = vld [vmem:[%s1907 + $0xe8] sm:$0xff]
    %v1938 = vld [vmem:[%s1907 + $0xf0] sm:$0xff]
    %v1939 = vld [vmem:[%s1907 + $0xf8] sm:$0xff]
    %v1940 = vpack.c.bf16 %v1704, %v1700
    %v1941 = vpack.c.bf16 %v1706, %v1702
    %v1942 = vpack.c.bf16 %v1714, %v1710
    %v1943 = vpack.c.bf16 %v1716, %v1712
    %v1944 = vpack.c.bf16 %v1724, %v1720
    %v1945 = vpack.c.bf16 %v1726, %v1722
    %v1946 = vpack.c.bf16 %v1734, %v1730
    %v1947 = vpack.c.bf16 %v1736, %v1732
    %v1948 = vpack.c.bf16 %v1744, %v1740
    %v1949 = vpack.c.bf16 %v1746, %v1742
    %v1950 = vpack.c.bf16 %v1754, %v1750
    %v1951 = vpack.c.bf16 %v1756, %v1752
    %v1952 = vpack.c.bf16 %v1764, %v1760
    %v1953 = vpack.c.bf16 %v1766, %v1762
    %v1954 = vpack.c.bf16 %v1774, %v1770
    %v1955 = vpack.c.bf16 %v1776, %v1772
    %v1988 = vunpack.c.l.b16 %v1908
    %v1989 = vunpack.c.h.b16 %v1908
    %v1990 = vunpack.c.l.b16 %v1909
    %v1991 = vunpack.c.h.b16 %v1909
    %v1992 = vunpack.c.l.b16 %v1910
    %v1993 = vunpack.c.h.b16 %v1910
    %v1994 = vunpack.c.l.b16 %v1911
    %v1995 = vunpack.c.h.b16 %v1911
    %v1996 = vunpack.c.l.b16 %v1912
    %v1997 = vunpack.c.h.b16 %v1912
    %v1998 = vunpack.c.l.b16 %v1913
    %v1999 = vunpack.c.h.b16 %v1913
    %v2000 = vunpack.c.l.b16 %v1914
    %v2001 = vunpack.c.h.b16 %v1914
    %v2002 = vunpack.c.l.b16 %v1915
    %v2003 = vunpack.c.h.b16 %v1915
    %v2004 = vunpack.c.l.b16 %v1916
    %v2005 = vunpack.c.h.b16 %v1916
    %v2006 = vunpack.c.l.b16 %v1917
    %v2007 = vunpack.c.h.b16 %v1917
    %v2008 = vunpack.c.l.b16 %v1918
    %v2009 = vunpack.c.h.b16 %v1918
    %v2010 = vunpack.c.l.b16 %v1919
    %v2011 = vunpack.c.h.b16 %v1919
    %v2012 = vunpack.c.l.b16 %v1920
    %v2013 = vunpack.c.h.b16 %v1920
    %v2014 = vunpack.c.l.b16 %v1921
    %v2015 = vunpack.c.h.b16 %v1921
    %v2016 = vunpack.c.l.b16 %v1922
    %v2017 = vunpack.c.h.b16 %v1922
    %v2018 = vunpack.c.l.b16 %v1923
    %v2019 = vunpack.c.h.b16 %v1923
    %v2020 = vunpack.c.l.b16 %v1924
    %v2021 = vunpack.c.h.b16 %v1924
    %v2022 = vunpack.c.l.b16 %v1925
    %v2023 = vunpack.c.h.b16 %v1925
    %v2024 = vunpack.c.l.b16 %v1926
    %v2025 = vunpack.c.h.b16 %v1926
    %v2026 = vunpack.c.l.b16 %v1927
    %v2027 = vunpack.c.h.b16 %v1927
    %v2028 = vunpack.c.l.b16 %v1928
    %v2029 = vunpack.c.h.b16 %v1928
    %v2030 = vunpack.c.l.b16 %v1929
    %v2031 = vunpack.c.h.b16 %v1929
    %v2032 = vunpack.c.l.b16 %v1930
    %v2033 = vunpack.c.h.b16 %v1930
    %v2034 = vunpack.c.l.b16 %v1931
    %v2035 = vunpack.c.h.b16 %v1931
    %v2036 = vunpack.c.l.b16 %v1932
    %v2037 = vunpack.c.h.b16 %v1932
    %v2038 = vunpack.c.l.b16 %v1933
    %v2039 = vunpack.c.h.b16 %v1933
    %v2040 = vunpack.c.l.b16 %v1934
    %v2041 = vunpack.c.h.b16 %v1934
    %v2042 = vunpack.c.l.b16 %v1935
    %v2043 = vunpack.c.h.b16 %v1935
    %v2044 = vunpack.c.l.b16 %v1936
    %v2045 = vunpack.c.h.b16 %v1936
    %v2046 = vunpack.c.l.b16 %v1937
    %v2047 = vunpack.c.h.b16 %v1937
    %v2048 = vunpack.c.l.b16 %v1938
    %v2049 = vunpack.c.h.b16 %v1938
    %v2050 = vunpack.c.l.b16 %v1939
    %v2051 = vunpack.c.h.b16 %v1939
    %v2052 = vpack.c.b16 %v1990, %v1988
    %v2053 = vpack.c.b16 %v1991, %v1989
    %v2054 = vpack.c.b16 %v1994, %v1992
    %v2055 = vpack.c.b16 %v1995, %v1993
    %v2056 = vpack.c.b16 %v1998, %v1996
    %v2057 = vpack.c.b16 %v1999, %v1997
    %v2058 = vpack.c.b16 %v2002, %v2000
    %v2059 = vpack.c.b16 %v2003, %v2001
    %v2060 = vpack.c.b16 %v2006, %v2004
    %v2061 = vpack.c.b16 %v2007, %v2005
    %v2062 = vpack.c.b16 %v2010, %v2008
    %v2063 = vpack.c.b16 %v2011, %v2009
    %v2064 = vpack.c.b16 %v2014, %v2012
    %v2065 = vpack.c.b16 %v2015, %v2013
    %v2066 = vpack.c.b16 %v2018, %v2016
    %v2067 = vpack.c.b16 %v2019, %v2017
    %v2068 = vpack.c.b16 %v2022, %v2020
    %v2069 = vpack.c.b16 %v2023, %v2021
    %v2070 = vpack.c.b16 %v2026, %v2024
    %v2071 = vpack.c.b16 %v2027, %v2025
    %v2072 = vpack.c.b16 %v2030, %v2028
    %v2073 = vpack.c.b16 %v2031, %v2029
    %v2074 = vpack.c.b16 %v2034, %v2032
    %v2075 = vpack.c.b16 %v2035, %v2033
    %v2076 = vpack.c.b16 %v2038, %v2036
    %v2077 = vpack.c.b16 %v2039, %v2037
    %v2078 = vpack.c.b16 %v2042, %v2040
    %v2079 = vpack.c.b16 %v2043, %v2041
    %v2080 = vpack.c.b16 %v2046, %v2044
    %v2081 = vpack.c.b16 %v2047, %v2045
    %v2082 = vpack.c.b16 %v2050, %v2048
    %v2083 = vpack.c.b16 %v2051, %v2049
    %2116 = vmatprep.subr.bf16.mxu0 %v2053
    %2117 = vmatpush1.bf16.msra.mxu0 %v2052
    %2118 = vmatprep.subr.bf16.mxu0 %v2055
    %2119 = vmatpush1.bf16.msra.mxu0 %v2054
    %2120 = vmatprep.subr.bf16.mxu0 %v2057
    %2121 = vmatpush1.bf16.msra.mxu0 %v2056
    %2122 = vmatprep.subr.bf16.mxu0 %v2059
    %2123 = vmatpush1.bf16.msra.mxu0 %v2058
    %2124 = vmatprep.subr.bf16.mxu0 %v2061
    %2125 = vmatpush1.bf16.msra.mxu0 %v2060
    %2126 = vmatprep.subr.bf16.mxu0 %v2063
    %2127 = vmatpush1.bf16.msra.mxu0 %v2062
    %2128 = vmatprep.subr.bf16.mxu0 %v2065
    %2129 = vmatpush1.bf16.msra.mxu0 %v2064
    %2130 = vmatprep.subr.bf16.mxu0 %v2067
    %2131 = vmatpush1.bf16.msra.mxu0 %v2066
    %2132 = vmatprep.subr.bf16.mxu0 %v2069
    %2133 = vmatpush1.bf16.msra.mxu0 %v2068
    %2134 = vmatprep.subr.bf16.mxu0 %v2071
    %2135 = vmatpush1.bf16.msra.mxu0 %v2070
    %2136 = vmatprep.subr.bf16.mxu0 %v2073
    %2137 = vmatpush1.bf16.msra.mxu0 %v2072
    %2138 = vmatprep.subr.bf16.mxu0 %v2075
    %2139 = vmatpush1.bf16.msra.mxu0 %v2074
    %2140 = vmatprep.subr.bf16.mxu0 %v2077
    %2141 = vmatpush1.bf16.msra.mxu0 %v2076
    %2142 = vmatprep.subr.bf16.mxu0 %v2079
    %2143 = vmatpush1.bf16.msra.mxu0 %v2078
    %2144 = vmatprep.subr.bf16.mxu0 %v2081
    %2145 = vmatpush1.bf16.msra.mxu0 %v2080
    %2146 = vmatprep.subr.bf16.mxu0 %v2083
    %2147 = vmatpush1.bf16.msra.mxu0 %v2082
    %2148 = vmatprep.mubr.bf16.mxu0 %v1941
    %2149 = vmatmul.mubr.bf16.gmra.mrb[0].mxu0 %v1940
    %v2150 = vpop.f32.mrb[0].mxu0
    %v2151 = vadd.f32 0.0, %v2150
    %v2152 = vpop.f32.mrb[0].mxu0
    %v2153 = vadd.f32 0.0, %v2152
    %v2154 = vpop.f32.mrb[0].mxu0
    %v2155 = vadd.f32 0.0, %v2154
    %v2156 = vpop.f32.mrb[0].mxu0
    %v2157 = vadd.f32 0.0, %v2156
    %2158 = vmatprep.mubr.bf16.mxu0 %v1943
    %2159 = vmatmul.mubr.bf16.gmra.mrb[0].mxu0 %v1942
    %v2160 = vpop.f32.mrb[0].mxu0
    %v2161 = vadd.f32 0.0, %v2160
    %v2162 = vpop.f32.mrb[0].mxu0
    %v2163 = vadd.f32 0.0, %v2162
    %v2164 = vpop.f32.mrb[0].mxu0
    %v2165 = vadd.f32 0.0, %v2164
    %v2166 = vpop.f32.mrb[0].mxu0
    %v2167 = vadd.f32 0.0, %v2166
    %2168 = vmatprep.mubr.bf16.mxu0 %v1945
    %2169 = vmatmul.mubr.bf16.gmra.mrb[0].mxu0 %v1944
    %v2170 = vpop.f32.mrb[0].mxu0
    %v2171 = vadd.f32 0.0, %v2170
    %v2172 = vpop.f32.mrb[0].mxu0
    %v2173 = vadd.f32 0.0, %v2172
    %v2174 = vpop.f32.mrb[0].mxu0
    %v2175 = vadd.f32 0.0, %v2174
    %v2176 = vpop.f32.mrb[0].mxu0
    %v2177 = vadd.f32 0.0, %v2176
    %2178 = vmatprep.mubr.bf16.mxu0 %v1947
    %2179 = vmatmul.mubr.bf16.gmra.mrb[0].mxu0 %v1946
    %v2180 = vpop.f32.mrb[0].mxu0
    %v2181 = vadd.f32 0.0, %v2180
    %v2182 = vpop.f32.mrb[0].mxu0
    %v2183 = vadd.f32 0.0, %v2182
    %v2184 = vpop.f32.mrb[0].mxu0
    %v2185 = vadd.f32 0.0, %v2184
    %v2186 = vpop.f32.mrb[0].mxu0
    %v2187 = vadd.f32 0.0, %v2186
    %2188 = vmatprep.mubr.bf16.mxu0 %v1949
    %2189 = vmatmul.mubr.bf16.gmra.mrb[0].mxu0 %v1948
    %v2190 = vpop.f32.mrb[0].mxu0
    %v2191 = vadd.f32 0.0, %v2190
    %v2192 = vpop.f32.mrb[0].mxu0
    %v2193 = vadd.f32 0.0, %v2192
    %v2194 = vpop.f32.mrb[0].mxu0
    %v2195 = vadd.f32 0.0, %v2194
    %v2196 = vpop.f32.mrb[0].mxu0
    %v2197 = vadd.f32 0.0, %v2196
    %2198 = vmatprep.mubr.bf16.mxu0 %v1951
    %2199 = vmatmul.mubr.bf16.gmra.mrb[0].mxu0 %v1950
    %v2200 = vpop.f32.mrb[0].mxu0
    %v2201 = vadd.f32 0.0, %v2200
    %v2202 = vpop.f32.mrb[0].mxu0
    %v2203 = vadd.f32 0.0, %v2202
    %v2204 = vpop.f32.mrb[0].mxu0
    %v2205 = vadd.f32 0.0, %v2204
    %v2206 = vpop.f32.mrb[0].mxu0
    %v2207 = vadd.f32 0.0, %v2206
    %2208 = vmatprep.mubr.bf16.mxu0 %v1953
    %2209 = vmatmul.mubr.bf16.gmra.mrb[0].mxu0 %v1952
    %v2210 = vpop.f32.mrb[0].mxu0
    %v2211 = vadd.f32 0.0, %v2210
    %v2212 = vpop.f32.mrb[0].mxu0
    %v2213 = vadd.f32 0.0, %v2212
    %v2214 = vpop.f32.mrb[0].mxu0
    %v2215 = vadd.f32 0.0, %v2214
    %v2216 = vpop.f32.mrb[0].mxu0
    %v2217 = vadd.f32 0.0, %v2216
    %2218 = vmatprep.mubr.bf16.mxu0 %v1955
    %2219 = vmatmul.mubr.bf16.gmra.mrb[0].mxu0 %v1954
    %v2220 = vpop.f32.mrb[0].mxu0
    %v2221 = vadd.f32 0.0, %v2220
    %v2222 = vpop.f32.mrb[0].mxu0
    %v2223 = vadd.f32 0.0, %v2222
    %v2224 = vpop.f32.mrb[0].mxu0
    %v2225 = vadd.f32 0.0, %v2224
    %v2226 = vpop.f32.mrb[0].mxu0
    %v2227 = vadd.f32 0.0, %v2226
    %2228 = vdwg.mxu0
    %v2229 = vpack.c.bf16 %v1833, %v1829
    %v2230 = vpack.c.bf16 %v1835, %v1831
    %v2231 = vpack.c.bf16 %v1843, %v1839
    %v2232 = vpack.c.bf16 %v1845, %v1841
    %v2233 = vpack.c.bf16 %v1853, %v1849
    %v2234 = vpack.c.bf16 %v1855, %v1851
    %v2235 = vpack.c.bf16 %v1863, %v1859
    %v2236 = vpack.c.bf16 %v1865, %v1861
    %v2237 = vpack.c.bf16 %v1873, %v1869
    %v2238 = vpack.c.bf16 %v1875, %v1871
    %v2239 = vpack.c.bf16 %v1883, %v1879
    %v2240 = vpack.c.bf16 %v1885, %v1881
    %v2241 = vpack.c.bf16 %v1893, %v1889
    %v2242 = vpack.c.bf16 %v1895, %v1891
    %v2243 = vpack.c.bf16 %v1903, %v1899
    %v2244 = vpack.c.bf16 %v1905, %v1901
    %2245 = vmatprep.subr.bf16.mxu0 %v2053
    %2246 = vmatpush1.bf16.msra.mxu0 %v2052
    %2247 = vmatprep.subr.bf16.mxu0 %v2055
    %2248 = vmatpush1.bf16.msra.mxu0 %v2054
    %2249 = vmatprep.subr.bf16.mxu0 %v2057
    %2250 = vmatpush1.bf16.msra.mxu0 %v2056
    %2251 = vmatprep.subr.bf16.mxu0 %v2059
    %2252 = vmatpush1.bf16.msra.mxu0 %v2058
    %2253 = vmatprep.subr.bf16.mxu0 %v2061
    %2254 = vmatpush1.bf16.msra.mxu0 %v2060
    %2255 = vmatprep.subr.bf16.mxu0 %v2063
    %2256 = vmatpush1.bf16.msra.mxu0 %v2062
    %2257 = vmatprep.subr.bf16.mxu0 %v2065
    %2258 = vmatpush1.bf16.msra.mxu0 %v2064
    %2259 = vmatprep.subr.bf16.mxu0 %v2067
    %2260 = vmatpush1.bf16.msra.mxu0 %v2066
    %2261 = vmatprep.subr.bf16.mxu0 %v2069
    %2262 = vmatpush1.bf16.msra.mxu0 %v2068
    %2263 = vmatprep.subr.bf16.mxu0 %v2071
    %2264 = vmatpush1.bf16.msra.mxu0 %v2070
    %2265 = vmatprep.subr.bf16.mxu0 %v2073
    %2266 = vmatpush1.bf16.msra.mxu0 %v2072
    %2267 = vmatprep.subr.bf16.mxu0 %v2075
    %2268 = vmatpush1.bf16.msra.mxu0 %v2074
    %2269 = vmatprep.subr.bf16.mxu0 %v2077
    %2270 = vmatpush1.bf16.msra.mxu0 %v2076
    %2271 = vmatprep.subr.bf16.mxu0 %v2079
    %2272 = vmatpush1.bf16.msra.mxu0 %v2078
    %2273 = vmatprep.subr.bf16.mxu0 %v2081
    %2274 = vmatpush1.bf16.msra.mxu0 %v2080
    %2275 = vmatprep.subr.bf16.mxu0 %v2083
    %2276 = vmatpush1.bf16.msra.mxu0 %v2082
    %2277 = vmatprep.mubr.bf16.mxu0 %v2230
    %2278 = vmatmul.mubr.bf16.gmra.mrb[0].mxu0 %v2229
    %v2279 = vpop.f32.mrb[0].mxu0
    %v2280 = vadd.f32 0.0, %v2279
    %v2281 = vpop.f32.mrb[0].mxu0
    %v2282 = vadd.f32 0.0, %v2281
    %v2283 = vpop.f32.mrb[0].mxu0
    %v2284 = vadd.f32 0.0, %v2283
    %v2285 = vpop.f32.mrb[0].mxu0
    %v2286 = vadd.f32 0.0, %v2285
    %2287 = vmatprep.mubr.bf16.mxu0 %v2232
    %2288 = vmatmul.mubr.bf16.gmra.mrb[0].mxu0 %v2231
    %v2289 = vpop.f32.mrb[0].mxu0
    %v2290 = vadd.f32 0.0, %v2289
    %v2291 = vpop.f32.mrb[0].mxu0
    %v2292 = vadd.f32 0.0, %v2291
    %v2293 = vpop.f32.mrb[0].mxu0
    %v2294 = vadd.f32 0.0, %v2293
    %v2295 = vpop.f32.mrb[0].mxu0
    %v2296 = vadd.f32 0.0, %v2295
    %2297 = vmatprep.mubr.bf16.mxu0 %v2234
    %2298 = vmatmul.mubr.bf16.gmra.mrb[0].mxu0 %v2233
    %v2299 = vpop.f32.mrb[0].mxu0
    %v2300 = vadd.f32 0.0, %v2299
    %v2301 = vpop.f32.mrb[0].mxu0
    %v2302 = vadd.f32 0.0, %v2301
    %v2303 = vpop.f32.mrb[0].mxu0
    %v2304 = vadd.f32 0.0, %v2303
    %v2305 = vpop.f32.mrb[0].mxu0
    %v2306 = vadd.f32 0.0, %v2305
    %2307 = vmatprep.mubr.bf16.mxu0 %v2236
    %2308 = vmatmul.mubr.bf16.gmra.mrb[0].mxu0 %v2235
    %v2309 = vpop.f32.mrb[0].mxu0
    %v2310 = vadd.f32 0.0, %v2309
    %v2311 = vpop.f32.mrb[0].mxu0
    %v2312 = vadd.f32 0.0, %v2311
    %v2313 = vpop.f32.mrb[0].mxu0
    %v2314 = vadd.f32 0.0, %v2313
    %v2315 = vpop.f32.mrb[0].mxu0
    %v2316 = vadd.f32 0.0, %v2315
    %2317 = vmatprep.mubr.bf16.mxu0 %v2238
    %2318 = vmatmul.mubr.bf16.gmra.mrb[0].mxu0 %v2237
    %v2319 = vpop.f32.mrb[0].mxu0
    %v2320 = vadd.f32 0.0, %v2319
    %v2321 = vpop.f32.mrb[0].mxu0
    %v2322 = vadd.f32 0.0, %v2321
    %v2323 = vpop.f32.mrb[0].mxu0
    %v2324 = vadd.f32 0.0, %v2323
    %v2325 = vpop.f32.mrb[0].mxu0
    %v2326 = vadd.f32 0.0, %v2325
    %2327 = vmatprep.mubr.bf16.mxu0 %v2240
    %2328 = vmatmul.mubr.bf16.gmra.mrb[0].mxu0 %v2239
    %v2329 = vpop.f32.mrb[0].mxu0
    %v2330 = vadd.f32 0.0, %v2329
    %v2331 = vpop.f32.mrb[0].mxu0
    %v2332 = vadd.f32 0.0, %v2331
    %v2333 = vpop.f32.mrb[0].mxu0
    %v2334 = vadd.f32 0.0, %v2333
    %v2335 = vpop.f32.mrb[0].mxu0
    %v2336 = vadd.f32 0.0, %v2335
    %2337 = vmatprep.mubr.bf16.mxu0 %v2242
    %2338 = vmatmul.mubr.bf16.gmra.mrb[0].mxu0 %v2241
    %v2339 = vpop.f32.mrb[0].mxu0
    %v2340 = vadd.f32 0.0, %v2339
    %v2341 = vpop.f32.mrb[0].mxu0
    %v2342 = vadd.f32 0.0, %v2341
    %v2343 = vpop.f32.mrb[0].mxu0
    %v2344 = vadd.f32 0.0, %v2343
    %v2345 = vpop.f32.mrb[0].mxu0
    %v2346 = vadd.f32 0.0, %v2345
    %2347 = vmatprep.mubr.bf16.mxu0 %v2244
    %2348 = vmatmul.mubr.bf16.gmra.mrb[0].mxu0 %v2243
    %v2349 = vpop.f32.mrb[0].mxu0
    %v2350 = vadd.f32 0.0, %v2349
    %v2351 = vpop.f32.mrb[0].mxu0
    %v2352 = vadd.f32 0.0, %v2351
    %v2353 = vpop.f32.mrb[0].mxu0
    %v2354 = vadd.f32 0.0, %v2353
    %v2355 = vpop.f32.mrb[0].mxu0
    %v2356 = vadd.f32 0.0, %v2355
    %2357 = vdwg.mxu0
    %s2358 = scalar_lea.vmem [#allocation5], 1280
    %v2359 = vld [vmem:[%s2358] sm:$0xff]
    %v2360 = vld [vmem:[%s2358 + $0x8] sm:$0xff]
    %v2361 = vld [vmem:[%s2358 + $0x10] sm:$0xff]
    %v2362 = vld [vmem:[%s2358 + $0x18] sm:$0xff]
    %v2363 = vld [vmem:[%s2358 + $0x20] sm:$0xff]
    %v2364 = vld [vmem:[%s2358 + $0x28] sm:$0xff]
    %v2365 = vld [vmem:[%s2358 + $0x30] sm:$0xff]
    %v2366 = vld [vmem:[%s2358 + $0x38] sm:$0xff]
    %v2367 = vld [vmem:[%s2358 + $0x40] sm:$0xff]
    %v2368 = vld [vmem:[%s2358 + $0x48] sm:$0xff]
    %v2369 = vld [vmem:[%s2358 + $0x50] sm:$0xff]
    %v2370 = vld [vmem:[%s2358 + $0x58] sm:$0xff]
    %v2371 = vld [vmem:[%s2358 + $0x60] sm:$0xff]
    %v2372 = vld [vmem:[%s2358 + $0x68] sm:$0xff]
    %v2373 = vld [vmem:[%s2358 + $0x70] sm:$0xff]
    %v2374 = vld [vmem:[%s2358 + $0x78] sm:$0xff]
    %v2375 = vld [vmem:[%s2358 + $0x80] sm:$0xff]
    %v2376 = vld [vmem:[%s2358 + $0x88] sm:$0xff]
    %v2377 = vld [vmem:[%s2358 + $0x90] sm:$0xff]
    %v2378 = vld [vmem:[%s2358 + $0x98] sm:$0xff]
    %v2379 = vld [vmem:[%s2358 + $0xa0] sm:$0xff]
    %v2380 = vld [vmem:[%s2358 + $0xa8] sm:$0xff]
    %v2381 = vld [vmem:[%s2358 + $0xb0] sm:$0xff]
    %v2382 = vld [vmem:[%s2358 + $0xb8] sm:$0xff]
    %v2383 = vld [vmem:[%s2358 + $0xc0] sm:$0xff]
    %v2384 = vld [vmem:[%s2358 + $0xc8] sm:$0xff]
    %v2385 = vld [vmem:[%s2358 + $0xd0] sm:$0xff]
    %v2386 = vld [vmem:[%s2358 + $0xd8] sm:$0xff]
    %v2387 = vld [vmem:[%s2358 + $0xe0] sm:$0xff]
    %v2388 = vld [vmem:[%s2358 + $0xe8] sm:$0xff]
    %v2389 = vld [vmem:[%s2358 + $0xf0] sm:$0xff]
    %v2390 = vld [vmem:[%s2358 + $0xf8] sm:$0xff]
    %v2391 = vpack.c.bf16 %v2155, %v2151
    %v2392 = vpack.c.bf16 %v2157, %v2153
    %v2393 = vpack.c.bf16 %v2165, %v2161
    %v2394 = vpack.c.bf16 %v2167, %v2163
    %v2395 = vpack.c.bf16 %v2175, %v2171
    %v2396 = vpack.c.bf16 %v2177, %v2173
    %v2397 = vpack.c.bf16 %v2185, %v2181
    %v2398 = vpack.c.bf16 %v2187, %v2183
    %v2399 = vpack.c.bf16 %v2195, %v2191
    %v2400 = vpack.c.bf16 %v2197, %v2193
    %v2401 = vpack.c.bf16 %v2205, %v2201
    %v2402 = vpack.c.bf16 %v2207, %v2203
    %v2403 = vpack.c.bf16 %v2215, %v2211
    %v2404 = vpack.c.bf16 %v2217, %v2213
    %v2405 = vpack.c.bf16 %v2225, %v2221
    %v2406 = vpack.c.bf16 %v2227, %v2223
    %v2439 = vunpack.c.l.b16 %v2359
    %v2440 = vunpack.c.h.b16 %v2359
    %v2441 = vunpack.c.l.b16 %v2360
    %v2442 = vunpack.c.h.b16 %v2360
    %v2443 = vunpack.c.l.b16 %v2361
    %v2444 = vunpack.c.h.b16 %v2361
    %v2445 = vunpack.c.l.b16 %v2362
    %v2446 = vunpack.c.h.b16 %v2362
    %v2447 = vunpack.c.l.b16 %v2363
    %v2448 = vunpack.c.h.b16 %v2363
    %v2449 = vunpack.c.l.b16 %v2364
    %v2450 = vunpack.c.h.b16 %v2364
    %v2451 = vunpack.c.l.b16 %v2365
    %v2452 = vunpack.c.h.b16 %v2365
    %v2453 = vunpack.c.l.b16 %v2366
    %v2454 = vunpack.c.h.b16 %v2366
    %v2455 = vunpack.c.l.b16 %v2367
    %v2456 = vunpack.c.h.b16 %v2367
    %v2457 = vunpack.c.l.b16 %v2368
    %v2458 = vunpack.c.h.b16 %v2368
    %v2459 = vunpack.c.l.b16 %v2369
    %v2460 = vunpack.c.h.b16 %v2369
    %v2461 = vunpack.c.l.b16 %v2370
    %v2462 = vunpack.c.h.b16 %v2370
    %v2463 = vunpack.c.l.b16 %v2371
    %v2464 = vunpack.c.h.b16 %v2371
    %v2465 = vunpack.c.l.b16 %v2372
    %v2466 = vunpack.c.h.b16 %v2372
    %v2467 = vunpack.c.l.b16 %v2373
    %v2468 = vunpack.c.h.b16 %v2373
    %v2469 = vunpack.c.l.b16 %v2374
    %v2470 = vunpack.c.h.b16 %v2374
    %v2471 = vunpack.c.l.b16 %v2375
    %v2472 = vunpack.c.h.b16 %v2375
    %v2473 = vunpack.c.l.b16 %v2376
    %v2474 = vunpack.c.h.b16 %v2376
    %v2475 = vunpack.c.l.b16 %v2377
    %v2476 = vunpack.c.h.b16 %v2377
    %v2477 = vunpack.c.l.b16 %v2378
    %v2478 = vunpack.c.h.b16 %v2378
    %v2479 = vunpack.c.l.b16 %v2379
    %v2480 = vunpack.c.h.b16 %v2379
    %v2481 = vunpack.c.l.b16 %v2380
    %v2482 = vunpack.c.h.b16 %v2380
    %v2483 = vunpack.c.l.b16 %v2381
    %v2484 = vunpack.c.h.b16 %v2381
    %v2485 = vunpack.c.l.b16 %v2382
    %v2486 = vunpack.c.h.b16 %v2382
    %v2487 = vunpack.c.l.b16 %v2383
    %v2488 = vunpack.c.h.b16 %v2383
    %v2489 = vunpack.c.l.b16 %v2384
    %v2490 = vunpack.c.h.b16 %v2384
    %v2491 = vunpack.c.l.b16 %v2385
    %v2492 = vunpack.c.h.b16 %v2385
    %v2493 = vunpack.c.l.b16 %v2386
    %v2494 = vunpack.c.h.b16 %v2386
    %v2495 = vunpack.c.l.b16 %v2387
    %v2496 = vunpack.c.h.b16 %v2387
    %v2497 = vunpack.c.l.b16 %v2388
    %v2498 = vunpack.c.h.b16 %v2388
    %v2499 = vunpack.c.l.b16 %v2389
    %v2500 = vunpack.c.h.b16 %v2389
    %v2501 = vunpack.c.l.b16 %v2390
    %v2502 = vunpack.c.h.b16 %v2390
    %v2503 = vpack.c.b16 %v2441, %v2439
    %v2504 = vpack.c.b16 %v2442, %v2440
    %v2505 = vpack.c.b16 %v2445, %v2443
    %v2506 = vpack.c.b16 %v2446, %v2444
    %v2507 = vpack.c.b16 %v2449, %v2447
    %v2508 = vpack.c.b16 %v2450, %v2448
    %v2509 = vpack.c.b16 %v2453, %v2451
    %v2510 = vpack.c.b16 %v2454, %v2452
    %v2511 = vpack.c.b16 %v2457, %v2455
    %v2512 = vpack.c.b16 %v2458, %v2456
    %v2513 = vpack.c.b16 %v2461, %v2459
    %v2514 = vpack.c.b16 %v2462, %v2460
    %v2515 = vpack.c.b16 %v2465, %v2463
    %v2516 = vpack.c.b16 %v2466, %v2464
    %v2517 = vpack.c.b16 %v2469, %v2467
    %v2518 = vpack.c.b16 %v2470, %v2468
    %v2519 = vpack.c.b16 %v2473, %v2471
    %v2520 = vpack.c.b16 %v2474, %v2472
    %v2521 = vpack.c.b16 %v2477, %v2475
    %v2522 = vpack.c.b16 %v2478, %v2476
    %v2523 = vpack.c.b16 %v2481, %v2479
    %v2524 = vpack.c.b16 %v2482, %v2480
    %v2525 = vpack.c.b16 %v2485, %v2483
    %v2526 = vpack.c.b16 %v2486, %v2484
    %v2527 = vpack.c.b16 %v2489, %v2487
    %v2528 = vpack.c.b16 %v2490, %v2488
    %v2529 = vpack.c.b16 %v2493, %v2491
    %v2530 = vpack.c.b16 %v2494, %v2492
    %v2531 = vpack.c.b16 %v2497, %v2495
    %v2532 = vpack.c.b16 %v2498, %v2496
    %v2533 = vpack.c.b16 %v2501, %v2499
    %v2534 = vpack.c.b16 %v2502, %v2500
    %2567 = vmatprep.subr.bf16.mxu0 %v2504
    %2568 = vmatpush1.bf16.msra.mxu0 %v2503
    %2569 = vmatprep.subr.bf16.mxu0 %v2506
    %2570 = vmatpush1.bf16.msra.mxu0 %v2505
    %2571 = vmatprep.subr.bf16.mxu0 %v2508
    %2572 = vmatpush1.bf16.msra.mxu0 %v2507
    %2573 = vmatprep.subr.bf16.mxu0 %v2510
    %2574 = vmatpush1.bf16.msra.mxu0 %v2509
    %2575 = vmatprep.subr.bf16.mxu0 %v2512
    %2576 = vmatpush1.bf16.msra.mxu0 %v2511
    %2577 = vmatprep.subr.bf16.mxu0 %v2514
    %2578 = vmatpush1.bf16.msra.mxu0 %v2513
    %2579 = vmatprep.subr.bf16.mxu0 %v2516
    %2580 = vmatpush1.bf16.msra.mxu0 %v2515
    %2581 = vmatprep.subr.bf16.mxu0 %v2518
    %2582 = vmatpush1.bf16.msra.mxu0 %v2517
    %2583 = vmatprep.subr.bf16.mxu0 %v2520
    %2584 = vmatpush1.bf16.msra.mxu0 %v2519
    %2585 = vmatprep.subr.bf16.mxu0 %v2522
    %2586 = vmatpush1.bf16.msra.mxu0 %v2521
    %2587 = vmatprep.subr.bf16.mxu0 %v2524
    %2588 = vmatpush1.bf16.msra.mxu0 %v2523
    %2589 = vmatprep.subr.bf16.mxu0 %v2526
    %2590 = vmatpush1.bf16.msra.mxu0 %v2525
    %2591 = vmatprep.subr.bf16.mxu0 %v2528
    %2592 = vmatpush1.bf16.msra.mxu0 %v2527
    %2593 = vmatprep.subr.bf16.mxu0 %v2530
    %2594 = vmatpush1.bf16.msra.mxu0 %v2529
    %2595 = vmatprep.subr.bf16.mxu0 %v2532
    %2596 = vmatpush1.bf16.msra.mxu0 %v2531
    %2597 = vmatprep.subr.bf16.mxu0 %v2534
    %2598 = vmatpush1.bf16.msra.mxu0 %v2533
    %2599 = vmatprep.mubr.bf16.mxu0 %v2392
    %2600 = vmatmul.mubr.bf16.gmra.mrb[0].mxu0 %v2391
    %v2601 = vpop.f32.mrb[0].mxu0
    %v2602 = vadd.f32 0.0, %v2601
    %v2603 = vpop.f32.mrb[0].mxu0
    %v2604 = vadd.f32 0.0, %v2603
    %v2605 = vpop.f32.mrb[0].mxu0
    %v2606 = vadd.f32 0.0, %v2605
    %v2607 = vpop.f32.mrb[0].mxu0
    %v2608 = vadd.f32 0.0, %v2607
    %2609 = vmatprep.mubr.bf16.mxu0 %v2394
    %2610 = vmatmul.mubr.bf16.gmra.mrb[0].mxu0 %v2393
    %v2611 = vpop.f32.mrb[0].mxu0
    %v2612 = vadd.f32 0.0, %v2611
    %v2613 = vpop.f32.mrb[0].mxu0
    %v2614 = vadd.f32 0.0, %v2613
    %v2615 = vpop.f32.mrb[0].mxu0
    %v2616 = vadd.f32 0.0, %v2615
    %v2617 = vpop.f32.mrb[0].mxu0
    %v2618 = vadd.f32 0.0, %v2617
    %2619 = vmatprep.mubr.bf16.mxu0 %v2396
    %2620 = vmatmul.mubr.bf16.gmra.mrb[0].mxu0 %v2395
    %v2621 = vpop.f32.mrb[0].mxu0
    %v2622 = vadd.f32 0.0, %v2621
    %v2623 = vpop.f32.mrb[0].mxu0
    %v2624 = vadd.f32 0.0, %v2623
    %v2625 = vpop.f32.mrb[0].mxu0
    %v2626 = vadd.f32 0.0, %v2625
    %v2627 = vpop.f32.mrb[0].mxu0
    %v2628 = vadd.f32 0.0, %v2627
    %2629 = vmatprep.mubr.bf16.mxu0 %v2398
    %2630 = vmatmul.mubr.bf16.gmra.mrb[0].mxu0 %v2397
    %v2631 = vpop.f32.mrb[0].mxu0
    %v2632 = vadd.f32 0.0, %v2631
    %v2633 = vpop.f32.mrb[0].mxu0
    %v2634 = vadd.f32 0.0, %v2633
    %v2635 = vpop.f32.mrb[0].mxu0
    %v2636 = vadd.f32 0.0, %v2635
    %v2637 = vpop.f32.mrb[0].mxu0
    %v2638 = vadd.f32 0.0, %v2637
    %2639 = vmatprep.mubr.bf16.mxu0 %v2400
    %2640 = vmatmul.mubr.bf16.gmra.mrb[0].mxu0 %v2399
    %v2641 = vpop.f32.mrb[0].mxu0
    %v2642 = vadd.f32 0.0, %v2641
    %v2643 = vpop.f32.mrb[0].mxu0
    %v2644 = vadd.f32 0.0, %v2643
    %v2645 = vpop.f32.mrb[0].mxu0
    %v2646 = vadd.f32 0.0, %v2645
    %v2647 = vpop.f32.mrb[0].mxu0
    %v2648 = vadd.f32 0.0, %v2647
    %2649 = vmatprep.mubr.bf16.mxu0 %v2402
    %2650 = vmatmul.mubr.bf16.gmra.mrb[0].mxu0 %v2401
    %v2651 = vpop.f32.mrb[0].mxu0
    %v2652 = vadd.f32 0.0, %v2651
    %v2653 = vpop.f32.mrb[0].mxu0
    %v2654 = vadd.f32 0.0, %v2653
    %v2655 = vpop.f32.mrb[0].mxu0
    %v2656 = vadd.f32 0.0, %v2655
    %v2657 = vpop.f32.mrb[0].mxu0
    %v2658 = vadd.f32 0.0, %v2657
    %2659 = vmatprep.mubr.bf16.mxu0 %v2404
    %2660 = vmatmul.mubr.bf16.gmra.mrb[0].mxu0 %v2403
    %v2661 = vpop.f32.mrb[0].mxu0
    %v2662 = vadd.f32 0.0, %v2661
    %v2663 = vpop.f32.mrb[0].mxu0
    %v2664 = vadd.f32 0.0, %v2663
    %v2665 = vpop.f32.mrb[0].mxu0
    %v2666 = vadd.f32 0.0, %v2665
    %v2667 = vpop.f32.mrb[0].mxu0
    %v2668 = vadd.f32 0.0, %v2667
    %2669 = vmatprep.mubr.bf16.mxu0 %v2406
    %2670 = vmatmul.mubr.bf16.gmra.mrb[0].mxu0 %v2405
    %v2671 = vpop.f32.mrb[0].mxu0
    %v2672 = vadd.f32 0.0, %v2671
    %v2673 = vpop.f32.mrb[0].mxu0
    %v2674 = vadd.f32 0.0, %v2673
    %v2675 = vpop.f32.mrb[0].mxu0
    %v2676 = vadd.f32 0.0, %v2675
    %v2677 = vpop.f32.mrb[0].mxu0
    %v2678 = vadd.f32 0.0, %v2677
    %2679 = vdwg.mxu0
    %v2680 = vpack.c.bf16 %v2284, %v2280
    %v2681 = vpack.c.bf16 %v2286, %v2282
    %v2682 = vpack.c.bf16 %v2294, %v2290
    %v2683 = vpack.c.bf16 %v2296, %v2292
    %v2684 = vpack.c.bf16 %v2304, %v2300
    %v2685 = vpack.c.bf16 %v2306, %v2302
    %v2686 = vpack.c.bf16 %v2314, %v2310
    %v2687 = vpack.c.bf16 %v2316, %v2312
    %v2688 = vpack.c.bf16 %v2324, %v2320
    %v2689 = vpack.c.bf16 %v2326, %v2322
    %v2690 = vpack.c.bf16 %v2334, %v2330
    %v2691 = vpack.c.bf16 %v2336, %v2332
    %v2692 = vpack.c.bf16 %v2344, %v2340
    %v2693 = vpack.c.bf16 %v2346, %v2342
    %v2694 = vpack.c.bf16 %v2354, %v2350
    %v2695 = vpack.c.bf16 %v2356, %v2352
    %2696 = vmatprep.subr.bf16.mxu0 %v2504
    %2697 = vmatpush1.bf16.msra.mxu0 %v2503
    %2698 = vmatprep.subr.bf16.mxu0 %v2506
    %2699 = vmatpush1.bf16.msra.mxu0 %v2505
    %2700 = vmatprep.subr.bf16.mxu0 %v2508
    %2701 = vmatpush1.bf16.msra.mxu0 %v2507
    %2702 = vmatprep.subr.bf16.mxu0 %v2510
    %2703 = vmatpush1.bf16.msra.mxu0 %v2509
    %2704 = vmatprep.subr.bf16.mxu0 %v2512
    %2705 = vmatpush1.bf16.msra.mxu0 %v2511
    %2706 = vmatprep.subr.bf16.mxu0 %v2514
    %2707 = vmatpush1.bf16.msra.mxu0 %v2513
    %2708 = vmatprep.subr.bf16.mxu0 %v2516
    %2709 = vmatpush1.bf16.msra.mxu0 %v2515
    %2710 = vmatprep.subr.bf16.mxu0 %v2518
    %2711 = vmatpush1.bf16.msra.mxu0 %v2517
    %2712 = vmatprep.subr.bf16.mxu0 %v2520
    %2713 = vmatpush1.bf16.msra.mxu0 %v2519
    %2714 = vmatprep.subr.bf16.mxu0 %v2522
    %2715 = vmatpush1.bf16.msra.mxu0 %v2521
    %2716 = vmatprep.subr.bf16.mxu0 %v2524
    %2717 = vmatpush1.bf16.msra.mxu0 %v2523
    %2718 = vmatprep.subr.bf16.mxu0 %v2526
    %2719 = vmatpush1.bf16.msra.mxu0 %v2525
    %2720 = vmatprep.subr.bf16.mxu0 %v2528
    %2721 = vmatpush1.bf16.msra.mxu0 %v2527
    %2722 = vmatprep.subr.bf16.mxu0 %v2530
    %2723 = vmatpush1.bf16.msra.mxu0 %v2529
    %2724 = vmatprep.subr.bf16.mxu0 %v2532
    %2725 = vmatpush1.bf16.msra.mxu0 %v2531
    %2726 = vmatprep.subr.bf16.mxu0 %v2534
    %2727 = vmatpush1.bf16.msra.mxu0 %v2533
    %2728 = vmatprep.mubr.bf16.mxu0 %v2681
    %2729 = vmatmul.mubr.bf16.gmra.mrb[0].mxu0 %v2680
    %v2730 = vpop.f32.mrb[0].mxu0
    %v2731 = vadd.f32 0.0, %v2730
    %v2732 = vpop.f32.mrb[0].mxu0
    %v2733 = vadd.f32 0.0, %v2732
    %v2734 = vpop.f32.mrb[0].mxu0
    %v2735 = vadd.f32 0.0, %v2734
    %v2736 = vpop.f32.mrb[0].mxu0
    %v2737 = vadd.f32 0.0, %v2736
    %2738 = vmatprep.mubr.bf16.mxu0 %v2683
    %2739 = vmatmul.mubr.bf16.gmra.mrb[0].mxu0 %v2682
    %v2740 = vpop.f32.mrb[0].mxu0
    %v2741 = vadd.f32 0.0, %v2740
    %v2742 = vpop.f32.mrb[0].mxu0
    %v2743 = vadd.f32 0.0, %v2742
    %v2744 = vpop.f32.mrb[0].mxu0
    %v2745 = vadd.f32 0.0, %v2744
    %v2746 = vpop.f32.mrb[0].mxu0
    %v2747 = vadd.f32 0.0, %v2746
    %2748 = vmatprep.mubr.bf16.mxu0 %v2685
    %2749 = vmatmul.mubr.bf16.gmra.mrb[0].mxu0 %v2684
    %v2750 = vpop.f32.mrb[0].mxu0
    %v2751 = vadd.f32 0.0, %v2750
    %v2752 = vpop.f32.mrb[0].mxu0
    %v2753 = vadd.f32 0.0, %v2752
    %v2754 = vpop.f32.mrb[0].mxu0
    %v2755 = vadd.f32 0.0, %v2754
    %v2756 = vpop.f32.mrb[0].mxu0
    %v2757 = vadd.f32 0.0, %v2756
    %2758 = vmatprep.mubr.bf16.mxu0 %v2687
    %2759 = vmatmul.mubr.bf16.gmra.mrb[0].mxu0 %v2686
    %v2760 = vpop.f32.mrb[0].mxu0
    %v2761 = vadd.f32 0.0, %v2760
    %v2762 = vpop.f32.mrb[0].mxu0
    %v2763 = vadd.f32 0.0, %v2762
    %v2764 = vpop.f32.mrb[0].mxu0
    %v2765 = vadd.f32 0.0, %v2764
    %v2766 = vpop.f32.mrb[0].mxu0
    %v2767 = vadd.f32 0.0, %v2766
    %2768 = vmatprep.mubr.bf16.mxu0 %v2689
    %2769 = vmatmul.mubr.bf16.gmra.mrb[0].mxu0 %v2688
    %v2770 = vpop.f32.mrb[0].mxu0
    %v2771 = vadd.f32 0.0, %v2770
    %v2772 = vpop.f32.mrb[0].mxu0
    %v2773 = vadd.f32 0.0, %v2772
    %v2774 = vpop.f32.mrb[0].mxu0
    %v2775 = vadd.f32 0.0, %v2774
    %v2776 = vpop.f32.mrb[0].mxu0
    %v2777 = vadd.f32 0.0, %v2776
    %2778 = vmatprep.mubr.bf16.mxu0 %v2691
    %2779 = vmatmul.mubr.bf16.gmra.mrb[0].mxu0 %v2690
    %v2780 = vpop.f32.mrb[0].mxu0
    %v2781 = vadd.f32 0.0, %v2780
    %v2782 = vpop.f32.mrb[0].mxu0
    %v2783 = vadd.f32 0.0, %v2782
    %v2784 = vpop.f32.mrb[0].mxu0
    %v2785 = vadd.f32 0.0, %v2784
    %v2786 = vpop.f32.mrb[0].mxu0
    %v2787 = vadd.f32 0.0, %v2786
    %2788 = vmatprep.mubr.bf16.mxu0 %v2693
    %2789 = vmatmul.mubr.bf16.gmra.mrb[0].mxu0 %v2692
    %v2790 = vpop.f32.mrb[0].mxu0
    %v2791 = vadd.f32 0.0, %v2790
    %v2792 = vpop.f32.mrb[0].mxu0
    %v2793 = vadd.f32 0.0, %v2792
    %v2794 = vpop.f32.mrb[0].mxu0
    %v2795 = vadd.f32 0.0, %v2794
    %v2796 = vpop.f32.mrb[0].mxu0
    %v2797 = vadd.f32 0.0, %v2796
    %2798 = vmatprep.mubr.bf16.mxu0 %v2695
    %2799 = vmatmul.mubr.bf16.gmra.mrb[0].mxu0 %v2694
    %v2800 = vpop.f32.mrb[0].mxu0
    %v2801 = vadd.f32 0.0, %v2800
    %v2802 = vpop.f32.mrb[0].mxu0
    %v2803 = vadd.f32 0.0, %v2802
    %v2804 = vpop.f32.mrb[0].mxu0
    %v2805 = vadd.f32 0.0, %v2804
    %v2806 = vpop.f32.mrb[0].mxu0
    %v2807 = vadd.f32 0.0, %v2806
    %2808 = vdwg.mxu0
    %s2809 = scalar_lea.vmem [#allocation5], 1536
    %v2810 = vld [vmem:[%s2809] sm:$0xff]
    %v2811 = vld [vmem:[%s2809 + $0x8] sm:$0xff]
    %v2812 = vld [vmem:[%s2809 + $0x10] sm:$0xff]
    %v2813 = vld [vmem:[%s2809 + $0x18] sm:$0xff]
    %v2814 = vld [vmem:[%s2809 + $0x20] sm:$0xff]
    %v2815 = vld [vmem:[%s2809 + $0x28] sm:$0xff]
    %v2816 = vld [vmem:[%s2809 + $0x30] sm:$0xff]
    %v2817 = vld [vmem:[%s2809 + $0x38] sm:$0xff]
    %v2818 = vld [vmem:[%s2809 + $0x40] sm:$0xff]
    %v2819 = vld [vmem:[%s2809 + $0x48] sm:$0xff]
    %v2820 = vld [vmem:[%s2809 + $0x50] sm:$0xff]
    %v2821 = vld [vmem:[%s2809 + $0x58] sm:$0xff]
    %v2822 = vld [vmem:[%s2809 + $0x60] sm:$0xff]
    %v2823 = vld [vmem:[%s2809 + $0x68] sm:$0xff]
    %v2824 = vld [vmem:[%s2809 + $0x70] sm:$0xff]
    %v2825 = vld [vmem:[%s2809 + $0x78] sm:$0xff]
    %v2826 = vld [vmem:[%s2809 + $0x80] sm:$0xff]
    %v2827 = vld [vmem:[%s2809 + $0x88] sm:$0xff]
    %v2828 = vld [vmem:[%s2809 + $0x90] sm:$0xff]
    %v2829 = vld [vmem:[%s2809 + $0x98] sm:$0xff]
    %v2830 = vld [vmem:[%s2809 + $0xa0] sm:$0xff]
    %v2831 = vld [vmem:[%s2809 + $0xa8] sm:$0xff]
    %v2832 = vld [vmem:[%s2809 + $0xb0] sm:$0xff]
    %v2833 = vld [vmem:[%s2809 + $0xb8] sm:$0xff]
    %v2834 = vld [vmem:[%s2809 + $0xc0] sm:$0xff]
    %v2835 = vld [vmem:[%s2809 + $0xc8] sm:$0xff]
    %v2836 = vld [vmem:[%s2809 + $0xd0] sm:$0xff]
    %v2837 = vld [vmem:[%s2809 + $0xd8] sm:$0xff]
    %v2838 = vld [vmem:[%s2809 + $0xe0] sm:$0xff]
    %v2839 = vld [vmem:[%s2809 + $0xe8] sm:$0xff]
    %v2840 = vld [vmem:[%s2809 + $0xf0] sm:$0xff]
    %v2841 = vld [vmem:[%s2809 + $0xf8] sm:$0xff]
    %v2842 = vpack.c.bf16 %v2606, %v2602
    %v2843 = vpack.c.bf16 %v2608, %v2604
    %v2844 = vpack.c.bf16 %v2616, %v2612
    %v2845 = vpack.c.bf16 %v2618, %v2614
    %v2846 = vpack.c.bf16 %v2626, %v2622
    %v2847 = vpack.c.bf16 %v2628, %v2624
    %v2848 = vpack.c.bf16 %v2636, %v2632
    %v2849 = vpack.c.bf16 %v2638, %v2634
    %v2850 = vpack.c.bf16 %v2646, %v2642
    %v2851 = vpack.c.bf16 %v2648, %v2644
    %v2852 = vpack.c.bf16 %v2656, %v2652
    %v2853 = vpack.c.bf16 %v2658, %v2654
    %v2854 = vpack.c.bf16 %v2666, %v2662
    %v2855 = vpack.c.bf16 %v2668, %v2664
    %v2856 = vpack.c.bf16 %v2676, %v2672
    %v2857 = vpack.c.bf16 %v2678, %v2674
    %v2890 = vunpack.c.l.b16 %v2810
    %v2891 = vunpack.c.h.b16 %v2810
    %v2892 = vunpack.c.l.b16 %v2811
    %v2893 = vunpack.c.h.b16 %v2811
    %v2894 = vunpack.c.l.b16 %v2812
    %v2895 = vunpack.c.h.b16 %v2812
    %v2896 = vunpack.c.l.b16 %v2813
    %v2897 = vunpack.c.h.b16 %v2813
    %v2898 = vunpack.c.l.b16 %v2814
    %v2899 = vunpack.c.h.b16 %v2814
    %v2900 = vunpack.c.l.b16 %v2815
    %v2901 = vunpack.c.h.b16 %v2815
    %v2902 = vunpack.c.l.b16 %v2816
    %v2903 = vunpack.c.h.b16 %v2816
    %v2904 = vunpack.c.l.b16 %v2817
    %v2905 = vunpack.c.h.b16 %v2817
    %v2906 = vunpack.c.l.b16 %v2818
    %v2907 = vunpack.c.h.b16 %v2818
    %v2908 = vunpack.c.l.b16 %v2819
    %v2909 = vunpack.c.h.b16 %v2819
    %v2910 = vunpack.c.l.b16 %v2820
    %v2911 = vunpack.c.h.b16 %v2820
    %v2912 = vunpack.c.l.b16 %v2821
    %v2913 = vunpack.c.h.b16 %v2821
    %v2914 = vunpack.c.l.b16 %v2822
    %v2915 = vunpack.c.h.b16 %v2822
    %v2916 = vunpack.c.l.b16 %v2823
    %v2917 = vunpack.c.h.b16 %v2823
    %v2918 = vunpack.c.l.b16 %v2824
    %v2919 = vunpack.c.h.b16 %v2824
    %v2920 = vunpack.c.l.b16 %v2825
    %v2921 = vunpack.c.h.b16 %v2825
    %v2922 = vunpack.c.l.b16 %v2826
    %v2923 = vunpack.c.h.b16 %v2826
    %v2924 = vunpack.c.l.b16 %v2827
    %v2925 = vunpack.c.h.b16 %v2827
    %v2926 = vunpack.c.l.b16 %v2828
    %v2927 = vunpack.c.h.b16 %v2828
    %v2928 = vunpack.c.l.b16 %v2829
    %v2929 = vunpack.c.h.b16 %v2829
    %v2930 = vunpack.c.l.b16 %v2830
    %v2931 = vunpack.c.h.b16 %v2830
    %v2932 = vunpack.c.l.b16 %v2831
    %v2933 = vunpack.c.h.b16 %v2831
    %v2934 = vunpack.c.l.b16 %v2832
    %v2935 = vunpack.c.h.b16 %v2832
    %v2936 = vunpack.c.l.b16 %v2833
    %v2937 = vunpack.c.h.b16 %v2833
    %v2938 = vunpack.c.l.b16 %v2834
    %v2939 = vunpack.c.h.b16 %v2834
    %v2940 = vunpack.c.l.b16 %v2835
    %v2941 = vunpack.c.h.b16 %v2835
    %v2942 = vunpack.c.l.b16 %v2836
    %v2943 = vunpack.c.h.b16 %v2836
    %v2944 = vunpack.c.l.b16 %v2837
    %v2945 = vunpack.c.h.b16 %v2837
    %v2946 = vunpack.c.l.b16 %v2838
    %v2947 = vunpack.c.h.b16 %v2838
    %v2948 = vunpack.c.l.b16 %v2839
    %v2949 = vunpack.c.h.b16 %v2839
    %v2950 = vunpack.c.l.b16 %v2840
    %v2951 = vunpack.c.h.b16 %v2840
    %v2952 = vunpack.c.l.b16 %v2841
    %v2953 = vunpack.c.h.b16 %v2841
    %v2954 = vpack.c.b16 %v2892, %v2890
    %v2955 = vpack.c.b16 %v2893, %v2891
    %v2956 = vpack.c.b16 %v2896, %v2894
    %v2957 = vpack.c.b16 %v2897, %v2895
    %v2958 = vpack.c.b16 %v2900, %v2898
    %v2959 = vpack.c.b16 %v2901, %v2899
    %v2960 = vpack.c.b16 %v2904, %v2902
    %v2961 = vpack.c.b16 %v2905, %v2903
    %v2962 = vpack.c.b16 %v2908, %v2906
    %v2963 = vpack.c.b16 %v2909, %v2907
    %v2964 = vpack.c.b16 %v2912, %v2910
    %v2965 = vpack.c.b16 %v2913, %v2911
    %v2966 = vpack.c.b16 %v2916, %v2914
    %v2967 = vpack.c.b16 %v2917, %v2915
    %v2968 = vpack.c.b16 %v2920, %v2918
    %v2969 = vpack.c.b16 %v2921, %v2919
    %v2970 = vpack.c.b16 %v2924, %v2922
    %v2971 = vpack.c.b16 %v2925, %v2923
    %v2972 = vpack.c.b16 %v2928, %v2926
    %v2973 = vpack.c.b16 %v2929, %v2927
    %v2974 = vpack.c.b16 %v2932, %v2930
    %v2975 = vpack.c.b16 %v2933, %v2931
    %v2976 = vpack.c.b16 %v2936, %v2934
    %v2977 = vpack.c.b16 %v2937, %v2935
    %v2978 = vpack.c.b16 %v2940, %v2938
    %v2979 = vpack.c.b16 %v2941, %v2939
    %v2980 = vpack.c.b16 %v2944, %v2942
    %v2981 = vpack.c.b16 %v2945, %v2943
    %v2982 = vpack.c.b16 %v2948, %v2946
    %v2983 = vpack.c.b16 %v2949, %v2947
    %v2984 = vpack.c.b16 %v2952, %v2950
    %v2985 = vpack.c.b16 %v2953, %v2951
    %3018 = vmatprep.subr.bf16.mxu0 %v2955
    %3019 = vmatpush1.bf16.msra.mxu0 %v2954
    %3020 = vmatprep.subr.bf16.mxu0 %v2957
    %3021 = vmatpush1.bf16.msra.mxu0 %v2956
    %3022 = vmatprep.subr.bf16.mxu0 %v2959
    %3023 = vmatpush1.bf16.msra.mxu0 %v2958
    %3024 = vmatprep.subr.bf16.mxu0 %v2961
    %3025 = vmatpush1.bf16.msra.mxu0 %v2960
    %3026 = vmatprep.subr.bf16.mxu0 %v2963
    %3027 = vmatpush1.bf16.msra.mxu0 %v2962
    %3028 = vmatprep.subr.bf16.mxu0 %v2965
    %3029 = vmatpush1.bf16.msra.mxu0 %v2964
    %3030 = vmatprep.subr.bf16.mxu0 %v2967
    %3031 = vmatpush1.bf16.msra.mxu0 %v2966
    %3032 = vmatprep.subr.bf16.mxu0 %v2969
    %3033 = vmatpush1.bf16.msra.mxu0 %v2968
    %3034 = vmatprep.subr.bf16.mxu0 %v2971
    %3035 = vmatpush1.bf16.msra.mxu0 %v2970
    %3036 = vmatprep.subr.bf16.mxu0 %v2973
    %3037 = vmatpush1.bf16.msra.mxu0 %v2972
    %3038 = vmatprep.subr.bf16.mxu0 %v2975
    %3039 = vmatpush1.bf16.msra.mxu0 %v2974
    %3040 = vmatprep.subr.bf16.mxu0 %v2977
    %3041 = vmatpush1.bf16.msra.mxu0 %v2976
    %3042 = vmatprep.subr.bf16.mxu0 %v2979
    %3043 = vmatpush1.bf16.msra.mxu0 %v2978
    %3044 = vmatprep.subr.bf16.mxu0 %v2981
    %3045 = vmatpush1.bf16.msra.mxu0 %v2980
    %3046 = vmatprep.subr.bf16.mxu0 %v2983
    %3047 = vmatpush1.bf16.msra.mxu0 %v2982
    %3048 = vmatprep.subr.bf16.mxu0 %v2985
    %3049 = vmatpush1.bf16.msra.mxu0 %v2984
    %3050 = vmatprep.mubr.bf16.mxu0 %v2843
    %3051 = vmatmul.mubr.bf16.gmra.mrb[0].mxu0 %v2842
    %v3052 = vpop.f32.mrb[0].mxu0
    %v3053 = vadd.f32 0.0, %v3052
    %v3054 = vpop.f32.mrb[0].mxu0
    %v3055 = vadd.f32 0.0, %v3054
    %v3056 = vpop.f32.mrb[0].mxu0
    %v3057 = vadd.f32 0.0, %v3056
    %v3058 = vpop.f32.mrb[0].mxu0
    %v3059 = vadd.f32 0.0, %v3058
    %3060 = vmatprep.mubr.bf16.mxu0 %v2845
    %3061 = vmatmul.mubr.bf16.gmra.mrb[0].mxu0 %v2844
    %v3062 = vpop.f32.mrb[0].mxu0
    %v3063 = vadd.f32 0.0, %v3062
    %v3064 = vpop.f32.mrb[0].mxu0
    %v3065 = vadd.f32 0.0, %v3064
    %v3066 = vpop.f32.mrb[0].mxu0
    %v3067 = vadd.f32 0.0, %v3066
    %v3068 = vpop.f32.mrb[0].mxu0
    %v3069 = vadd.f32 0.0, %v3068
    %3070 = vmatprep.mubr.bf16.mxu0 %v2847
    %3071 = vmatmul.mubr.bf16.gmra.mrb[0].mxu0 %v2846
    %v3072 = vpop.f32.mrb[0].mxu0
    %v3073 = vadd.f32 0.0, %v3072
    %v3074 = vpop.f32.mrb[0].mxu0
    %v3075 = vadd.f32 0.0, %v3074
    %v3076 = vpop.f32.mrb[0].mxu0
    %v3077 = vadd.f32 0.0, %v3076
    %v3078 = vpop.f32.mrb[0].mxu0
    %v3079 = vadd.f32 0.0, %v3078
    %3080 = vmatprep.mubr.bf16.mxu0 %v2849
    %3081 = vmatmul.mubr.bf16.gmra.mrb[0].mxu0 %v2848
    %v3082 = vpop.f32.mrb[0].mxu0
    %v3083 = vadd.f32 0.0, %v3082
    %v3084 = vpop.f32.mrb[0].mxu0
    %v3085 = vadd.f32 0.0, %v3084
    %v3086 = vpop.f32.mrb[0].mxu0
    %v3087 = vadd.f32 0.0, %v3086
    %v3088 = vpop.f32.mrb[0].mxu0
    %v3089 = vadd.f32 0.0, %v3088
    %3090 = vmatprep.mubr.bf16.mxu0 %v2851
    %3091 = vmatmul.mubr.bf16.gmra.mrb[0].mxu0 %v2850
    %v3092 = vpop.f32.mrb[0].mxu0
    %v3093 = vadd.f32 0.0, %v3092
    %v3094 = vpop.f32.mrb[0].mxu0
    %v3095 = vadd.f32 0.0, %v3094
    %v3096 = vpop.f32.mrb[0].mxu0
    %v3097 = vadd.f32 0.0, %v3096
    %v3098 = vpop.f32.mrb[0].mxu0
    %v3099 = vadd.f32 0.0, %v3098
    %3100 = vmatprep.mubr.bf16.mxu0 %v2853
    %3101 = vmatmul.mubr.bf16.gmra.mrb[0].mxu0 %v2852
    %v3102 = vpop.f32.mrb[0].mxu0
    %v3103 = vadd.f32 0.0, %v3102
    %v3104 = vpop.f32.mrb[0].mxu0
    %v3105 = vadd.f32 0.0, %v3104
    %v3106 = vpop.f32.mrb[0].mxu0
    %v3107 = vadd.f32 0.0, %v3106
    %v3108 = vpop.f32.mrb[0].mxu0
    %v3109 = vadd.f32 0.0, %v3108
    %3110 = vmatprep.mubr.bf16.mxu0 %v2855
    %3111 = vmatmul.mubr.bf16.gmra.mrb[0].mxu0 %v2854
    %v3112 = vpop.f32.mrb[0].mxu0
    %v3113 = vadd.f32 0.0, %v3112
    %v3114 = vpop.f32.mrb[0].mxu0
    %v3115 = vadd.f32 0.0, %v3114
    %v3116 = vpop.f32.mrb[0].mxu0
    %v3117 = vadd.f32 0.0, %v3116
    %v3118 = vpop.f32.mrb[0].mxu0
    %v3119 = vadd.f32 0.0, %v3118
    %3120 = vmatprep.mubr.bf16.mxu0 %v2857
    %3121 = vmatmul.mubr.bf16.gmra.mrb[0].mxu0 %v2856
    %v3122 = vpop.f32.mrb[0].mxu0
    %v3123 = vadd.f32 0.0, %v3122
    %v3124 = vpop.f32.mrb[0].mxu0
    %v3125 = vadd.f32 0.0, %v3124
    %v3126 = vpop.f32.mrb[0].mxu0
    %v3127 = vadd.f32 0.0, %v3126
    %v3128 = vpop.f32.mrb[0].mxu0
    %v3129 = vadd.f32 0.0, %v3128
    %3130 = vdwg.mxu0
    %v3131 = vpack.c.bf16 %v2735, %v2731
    %v3132 = vpack.c.bf16 %v2737, %v2733
    %v3133 = vpack.c.bf16 %v2745, %v2741
    %v3134 = vpack.c.bf16 %v2747, %v2743
    %v3135 = vpack.c.bf16 %v2755, %v2751
    %v3136 = vpack.c.bf16 %v2757, %v2753
    %v3137 = vpack.c.bf16 %v2765, %v2761
    %v3138 = vpack.c.bf16 %v2767, %v2763
    %v3139 = vpack.c.bf16 %v2775, %v2771
    %v3140 = vpack.c.bf16 %v2777, %v2773
    %v3141 = vpack.c.bf16 %v2785, %v2781
    %v3142 = vpack.c.bf16 %v2787, %v2783
    %v3143 = vpack.c.bf16 %v2795, %v2791
    %v3144 = vpack.c.bf16 %v2797, %v2793
    %v3145 = vpack.c.bf16 %v2805, %v2801
    %v3146 = vpack.c.bf16 %v2807, %v2803
    %3147 = vmatprep.subr.bf16.mxu0 %v2955
    %3148 = vmatpush1.bf16.msra.mxu0 %v2954
    %3149 = vmatprep.subr.bf16.mxu0 %v2957
    %3150 = vmatpush1.bf16.msra.mxu0 %v2956
    %3151 = vmatprep.subr.bf16.mxu0 %v2959
    %3152 = vmatpush1.bf16.msra.mxu0 %v2958
    %3153 = vmatprep.subr.bf16.mxu0 %v2961
    %3154 = vmatpush1.bf16.msra.mxu0 %v2960
    %3155 = vmatprep.subr.bf16.mxu0 %v2963
    %3156 = vmatpush1.bf16.msra.mxu0 %v2962
    %3157 = vmatprep.subr.bf16.mxu0 %v2965
    %3158 = vmatpush1.bf16.msra.mxu0 %v2964
    %3159 = vmatprep.subr.bf16.mxu0 %v2967
    %3160 = vmatpush1.bf16.msra.mxu0 %v2966
    %3161 = vmatprep.subr.bf16.mxu0 %v2969
    %3162 = vmatpush1.bf16.msra.mxu0 %v2968
    %3163 = vmatprep.subr.bf16.mxu0 %v2971
    %3164 = vmatpush1.bf16.msra.mxu0 %v2970
    %3165 = vmatprep.subr.bf16.mxu0 %v2973
    %3166 = vmatpush1.bf16.msra.mxu0 %v2972
    %3167 = vmatprep.subr.bf16.mxu0 %v2975
    %3168 = vmatpush1.bf16.msra.mxu0 %v2974
    %3169 = vmatprep.subr.bf16.mxu0 %v2977
    %3170 = vmatpush1.bf16.msra.mxu0 %v2976
    %3171 = vmatprep.subr.bf16.mxu0 %v2979
    %3172 = vmatpush1.bf16.msra.mxu0 %v2978
    %3173 = vmatprep.subr.bf16.mxu0 %v2981
    %3174 = vmatpush1.bf16.msra.mxu0 %v2980
    %3175 = vmatprep.subr.bf16.mxu0 %v2983
    %3176 = vmatpush1.bf16.msra.mxu0 %v2982
    %3177 = vmatprep.subr.bf16.mxu0 %v2985
    %3178 = vmatpush1.bf16.msra.mxu0 %v2984
    %3179 = vmatprep.mubr.bf16.mxu0 %v3132
    %3180 = vmatmul.mubr.bf16.gmra.mrb[0].mxu0 %v3131
    %v3181 = vpop.f32.mrb[0].mxu0
    %v3182 = vadd.f32 0.0, %v3181
    %v3183 = vpop.f32.mrb[0].mxu0
    %v3184 = vadd.f32 0.0, %v3183
    %v3185 = vpop.f32.mrb[0].mxu0
    %v3186 = vadd.f32 0.0, %v3185
    %v3187 = vpop.f32.mrb[0].mxu0
    %v3188 = vadd.f32 0.0, %v3187
    %3189 = vmatprep.mubr.bf16.mxu0 %v3134
    %3190 = vmatmul.mubr.bf16.gmra.mrb[0].mxu0 %v3133
    %v3191 = vpop.f32.mrb[0].mxu0
    %v3192 = vadd.f32 0.0, %v3191
    %v3193 = vpop.f32.mrb[0].mxu0
    %v3194 = vadd.f32 0.0, %v3193
    %v3195 = vpop.f32.mrb[0].mxu0
    %v3196 = vadd.f32 0.0, %v3195
    %v3197 = vpop.f32.mrb[0].mxu0
    %v3198 = vadd.f32 0.0, %v3197
    %3199 = vmatprep.mubr.bf16.mxu0 %v3136
    %3200 = vmatmul.mubr.bf16.gmra.mrb[0].mxu0 %v3135
    %v3201 = vpop.f32.mrb[0].mxu0
    %v3202 = vadd.f32 0.0, %v3201
    %v3203 = vpop.f32.mrb[0].mxu0
    %v3204 = vadd.f32 0.0, %v3203
    %v3205 = vpop.f32.mrb[0].mxu0
    %v3206 = vadd.f32 0.0, %v3205
    %v3207 = vpop.f32.mrb[0].mxu0
    %v3208 = vadd.f32 0.0, %v3207
    %3209 = vmatprep.mubr.bf16.mxu0 %v3138
    %3210 = vmatmul.mubr.bf16.gmra.mrb[0].mxu0 %v3137
    %v3211 = vpop.f32.mrb[0].mxu0
    %v3212 = vadd.f32 0.0, %v3211
    %v3213 = vpop.f32.mrb[0].mxu0
    %v3214 = vadd.f32 0.0, %v3213
    %v3215 = vpop.f32.mrb[0].mxu0
    %v3216 = vadd.f32 0.0, %v3215
    %v3217 = vpop.f32.mrb[0].mxu0
    %v3218 = vadd.f32 0.0, %v3217
    %3219 = vmatprep.mubr.bf16.mxu0 %v3140
    %3220 = vmatmul.mubr.bf16.gmra.mrb[0].mxu0 %v3139
    %v3221 = vpop.f32.mrb[0].mxu0
    %v3222 = vadd.f32 0.0, %v3221
    %v3223 = vpop.f32.mrb[0].mxu0
    %v3224 = vadd.f32 0.0, %v3223
    %v3225 = vpop.f32.mrb[0].mxu0
    %v3226 = vadd.f32 0.0, %v3225
    %v3227 = vpop.f32.mrb[0].mxu0
    %v3228 = vadd.f32 0.0, %v3227
    %3229 = vmatprep.mubr.bf16.mxu0 %v3142
    %3230 = vmatmul.mubr.bf16.gmra.mrb[0].mxu0 %v3141
    %v3231 = vpop.f32.mrb[0].mxu0
    %v3232 = vadd.f32 0.0, %v3231
    %v3233 = vpop.f32.mrb[0].mxu0
    %v3234 = vadd.f32 0.0, %v3233
    %v3235 = vpop.f32.mrb[0].mxu0
    %v3236 = vadd.f32 0.0, %v3235
    %v3237 = vpop.f32.mrb[0].mxu0
    %v3238 = vadd.f32 0.0, %v3237
    %3239 = vmatprep.mubr.bf16.mxu0 %v3144
    %3240 = vmatmul.mubr.bf16.gmra.mrb[0].mxu0 %v3143
    %v3241 = vpop.f32.mrb[0].mxu0
    %v3242 = vadd.f32 0.0, %v3241
    %v3243 = vpop.f32.mrb[0].mxu0
    %v3244 = vadd.f32 0.0, %v3243
    %v3245 = vpop.f32.mrb[0].mxu0
    %v3246 = vadd.f32 0.0, %v3245
    %v3247 = vpop.f32.mrb[0].mxu0
    %v3248 = vadd.f32 0.0, %v3247
    %3249 = vmatprep.mubr.bf16.mxu0 %v3146
    %3250 = vmatmul.mubr.bf16.gmra.mrb[0].mxu0 %v3145
    %v3251 = vpop.f32.mrb[0].mxu0
    %v3252 = vadd.f32 0.0, %v3251
    %v3253 = vpop.f32.mrb[0].mxu0
    %v3254 = vadd.f32 0.0, %v3253
    %v3255 = vpop.f32.mrb[0].mxu0
    %v3256 = vadd.f32 0.0, %v3255
    %v3257 = vpop.f32.mrb[0].mxu0
    %v3258 = vadd.f32 0.0, %v3257
    %3259 = vdwg.mxu0
    %v3260 = vmul.f32 %v3053, %v3053
    %v3261 = vmul.f32 %v3057, %v3057
    %v3262 = vmul.f32 %v3063, %v3063
    %v3263 = vmul.f32 %v3067, %v3067
    %v3264 = vmul.f32 %v3073, %v3073
    %v3265 = vmul.f32 %v3077, %v3077
    %v3266 = vmul.f32 %v3083, %v3083
    %v3267 = vmul.f32 %v3087, %v3087
    %v3268 = vmul.f32 %v3093, %v3093
    %v3269 = vmul.f32 %v3097, %v3097
    %v3270 = vmul.f32 %v3103, %v3103
    %v3271 = vmul.f32 %v3107, %v3107
    %v3272 = vmul.f32 %v3113, %v3113
    %v3273 = vmul.f32 %v3117, %v3117
    %v3274 = vmul.f32 %v3123, %v3123
    %v3275 = vmul.f32 %v3127, %v3127
    %v3276 = vmul.f32 %v3055, %v3055
    %v3277 = vmul.f32 %v3059, %v3059
    %v3278 = vmul.f32 %v3065, %v3065
    %v3279 = vmul.f32 %v3069, %v3069
    %v3280 = vmul.f32 %v3075, %v3075
    %v3281 = vmul.f32 %v3079, %v3079
    %v3282 = vmul.f32 %v3085, %v3085
    %v3283 = vmul.f32 %v3089, %v3089
    %v3284 = vmul.f32 %v3095, %v3095
    %v3285 = vmul.f32 %v3099, %v3099
    %v3286 = vmul.f32 %v3105, %v3105
    %v3287 = vmul.f32 %v3109, %v3109
    %v3288 = vmul.f32 %v3115, %v3115
    %v3289 = vmul.f32 %v3119, %v3119
    %v3290 = vmul.f32 %v3125, %v3125
    %v3291 = vmul.f32 %v3129, %v3129
    %v3292 = vadd.f32 %v3260, %v3276
    %v3293 = vadd.f32 %v3261, %v3277
    %v3294 = vadd.f32 %v3262, %v3278
    %v3295 = vadd.f32 %v3263, %v3279
    %v3296 = vadd.f32 %v3264, %v3280
    %v3297 = vadd.f32 %v3265, %v3281
    %v3298 = vadd.f32 %v3266, %v3282
    %v3299 = vadd.f32 %v3267, %v3283
    %v3300 = vadd.f32 %v3268, %v3284
    %v3301 = vadd.f32 %v3269, %v3285
    %v3302 = vadd.f32 %v3270, %v3286
    %v3303 = vadd.f32 %v3271, %v3287
    %v3304 = vadd.f32 %v3272, %v3288
    %v3305 = vadd.f32 %v3273, %v3289
    %v3306 = vadd.f32 %v3274, %v3290
    %v3307 = vadd.f32 %v3275, %v3291
    %3308 = vst [vmem:[#allocation7] sm:$0xff] %v3292
    %3309 = vst [vmem:[#allocation7 + $0x8] sm:$0xff] %v3293
    %3310 = vst [vmem:[#allocation7 + $0x10] sm:$0xff] %v3294
    %3311 = vst [vmem:[#allocation7 + $0x18] sm:$0xff] %v3295
    %3312 = vst [vmem:[#allocation7 + $0x20] sm:$0xff] %v3296
    %3313 = vst [vmem:[#allocation7 + $0x28] sm:$0xff] %v3297
    %3314 = vst [vmem:[#allocation7 + $0x30] sm:$0xff] %v3298
    %3315 = vst [vmem:[#allocation7 + $0x38] sm:$0xff] %v3299
    %3316 = vst [vmem:[#allocation7 + $0x40] sm:$0xff] %v3300
    %3317 = vst [vmem:[#allocation7 + $0x48] sm:$0xff] %v3301
    %3318 = vst [vmem:[#allocation7 + $0x50] sm:$0xff] %v3302
    %3319 = vst [vmem:[#allocation7 + $0x58] sm:$0xff] %v3303
    %3320 = vst [vmem:[#allocation7 + $0x60] sm:$0xff] %v3304
    %3321 = vst [vmem:[#allocation7 + $0x68] sm:$0xff] %v3305
    %3322 = vst [vmem:[#allocation7 + $0x70] sm:$0xff] %v3306
    %3323 = vst [vmem:[#allocation7 + $0x78] sm:$0xff] %v3307
    %v3324 = vmul.f32 %v3182, %v3182
    %v3325 = vmul.f32 %v3186, %v3186
    %v3326 = vmul.f32 %v3192, %v3192
    %v3327 = vmul.f32 %v3196, %v3196
    %v3328 = vmul.f32 %v3202, %v3202
    %v3329 = vmul.f32 %v3206, %v3206
    %v3330 = vmul.f32 %v3212, %v3212
    %v3331 = vmul.f32 %v3216, %v3216
    %v3332 = vmul.f32 %v3222, %v3222
    %v3333 = vmul.f32 %v3226, %v3226
    %v3334 = vmul.f32 %v3232, %v3232
    %v3335 = vmul.f32 %v3236, %v3236
    %v3336 = vmul.f32 %v3242, %v3242
    %v3337 = vmul.f32 %v3246, %v3246
    %v3338 = vmul.f32 %v3252, %v3252
    %v3339 = vmul.f32 %v3256, %v3256
    %v3340 = vmul.f32 %v3184, %v3184
    %v3341 = vmul.f32 %v3188, %v3188
    %v3342 = vmul.f32 %v3194, %v3194
    %v3343 = vmul.f32 %v3198, %v3198
    %v3344 = vmul.f32 %v3204, %v3204
    %v3345 = vmul.f32 %v3208, %v3208
    %v3346 = vmul.f32 %v3214, %v3214
    %v3347 = vmul.f32 %v3218, %v3218
    %v3348 = vmul.f32 %v3224, %v3224
    %v3349 = vmul.f32 %v3228, %v3228
    %v3350 = vmul.f32 %v3234, %v3234
    %v3351 = vmul.f32 %v3238, %v3238
    %v3352 = vmul.f32 %v3244, %v3244
    %v3353 = vmul.f32 %v3248, %v3248
    %v3354 = vmul.f32 %v3254, %v3254
    %v3355 = vmul.f32 %v3258, %v3258
    %v3356 = vadd.f32 %v3324, %v3340
    %v3357 = vadd.f32 %v3325, %v3341
    %v3358 = vadd.f32 %v3326, %v3342
    %v3359 = vadd.f32 %v3327, %v3343
    %v3360 = vadd.f32 %v3328, %v3344
    %v3361 = vadd.f32 %v3329, %v3345
    %v3362 = vadd.f32 %v3330, %v3346
    %v3363 = vadd.f32 %v3331, %v3347
    %v3364 = vadd.f32 %v3332, %v3348
    %v3365 = vadd.f32 %v3333, %v3349
    %v3366 = vadd.f32 %v3334, %v3350
    %v3367 = vadd.f32 %v3335, %v3351
    %v3368 = vadd.f32 %v3336, %v3352
    %v3369 = vadd.f32 %v3337, %v3353
    %v3370 = vadd.f32 %v3338, %v3354
    %v3371 = vadd.f32 %v3339, %v3355
    %3372 = vst [vmem:[#allocation7 + $0x80] sm:$0xff] %v3356
    %3373 = vst [vmem:[#allocation7 + $0x88] sm:$0xff] %v3357
    %3374 = vst [vmem:[#allocation7 + $0x90] sm:$0xff] %v3358
    %3375 = vst [vmem:[#allocation7 + $0x98] sm:$0xff] %v3359
    %3376 = vst [vmem:[#allocation7 + $0xa0] sm:$0xff] %v3360
    %3377 = vst [vmem:[#allocation7 + $0xa8] sm:$0xff] %v3361
    %3378 = vst [vmem:[#allocation7 + $0xb0] sm:$0xff] %v3362
    %3379 = vst [vmem:[#allocation7 + $0xb8] sm:$0xff] %v3363
    %3380 = vst [vmem:[#allocation7 + $0xc0] sm:$0xff] %v3364
    %3381 = vst [vmem:[#allocation7 + $0xc8] sm:$0xff] %v3365
    %3382 = vst [vmem:[#allocation7 + $0xd0] sm:$0xff] %v3366
    %3383 = vst [vmem:[#allocation7 + $0xd8] sm:$0xff] %v3367
    %3384 = vst [vmem:[#allocation7 + $0xe0] sm:$0xff] %v3368
    %3385 = vst [vmem:[#allocation7 + $0xe8] sm:$0xff] %v3369
    %3386 = vst [vmem:[#allocation7 + $0xf0] sm:$0xff] %v3370
    %3387 = vst [vmem:[#allocation7 + $0xf8] sm:$0xff] %v3371
    // Predicated region
    $region18: #{tpu_custom_call.1} parent=1 // pred_check
      _
    $region19: #{tpu_custom_call.1} parent=1 // pred_check_branch
      %3389 = sbr.rel (0) target = $region21
    $region20: #{tpu_custom_call.1} parent=1 // pred_region
      %s3391 = ssub.s32 4096, 4096
      %3392 = vsyncadd [#allocation4], %s3391
      %s3393 = sshll.u32 [#allocation7], 4
      %s3394 = int_to_ptr.vmem [resolvable:$true] %s3393
      %3399 = dma.vmem_to_hbm [thread:$0]  %s3394, 4096, %s2, [#allocation4], 128, 128, 8
    $region21: #{tpu_custom_call.1} parent=1 // pred_fallthru
      _
    // Predicated region
    $region22: #{tpu_custom_call.1} parent=1 // pred_check
      _
    $region23: #{tpu_custom_call.1} parent=1 // pred_check_branch
      %3401 = sbr.rel (0) target = $region25
    $region24: #{tpu_custom_call.1} parent=1 // pred_region
      %3402 = dma.done [#allocation4], 4096
    $region25: #{tpu_custom_call.1} parent=1 // pred_fallthru
      _
    %3403 = vsyncpa [#allocation3], 1
    %3404 = vsyncpa [#allocation6], 1
    %3405 = vsyncpa [#allocation4], 1

</llo_original>
